<compile_context>
chip_gen: v5e
topology: v5e:2x2
jax: 0.10.0
libtpu: 0.0.40
codegen_flags: <defaults>
</compile_context>

<pallas_src>
import jax
import jax.numpy as jnp
from jax import lax
from jax.experimental import pallas as pl
from jax.experimental.pallas import tpu as pltpu

LANE = 128


def _round_up(x, m):
    return (x + m - 1) // m * m


def _vmem_limit_bytes():
    """Scoped-VMEM budget parametrized by the chip (v5e/v6e: 128 MiB, v7x: 64 MiB)."""
    cap = 64 << 20
    try:
        info = pltpu.get_tpu_info()
        cap = int(getattr(info, "vmem_capacity_bytes", cap) or cap)
    except Exception:
        pass
    # leave headroom: 3/4 of physical, never above 96 MiB
    return int(min(cap * 3 // 4, 96 << 20))


def _pick_batch_tile(n, hw):
    """Images per grid step: aim for matmul M = nb*OH*OW >= 256 but keep >= 2
    grid steps (megacore sharding / DMA-compute overlap) whenever N allows."""
    nb = max(1, min(n, -(-256 // hw)))
    while nb > 1 and n // nb < 2:
        nb -= 1
    while n % nb:
        nb -= 1
    return nb


# --------------------------------------------------------------------------- #
# Fused WideBasic kernel
# --------------------------------------------------------------------------- #
def _make_wide_basic_kernel(*, stride, nb, H, W, OH, OW, cin_p, cout_p, proj):
    """Build the fused kernel for a static (stride, nb, H, W, channels) config."""
    if stride == 1:
        qh = qw = None
        Sp = W + 2                                   # padded tile width
    else:
        qh, qw = (H + 2) // 2, (W + 2) // 2          # parity-fold quadrant dims
        Sp = qw
    HW = OH * OW

    def body(x_ref, w1_ref, w2_ref, wsc_ref, s1_ref, b1_ref, s2_ref, b2_ref,
             o_ref, ap_ref, hp_ref, c1_ref, c2_ref):
        f32, bf16 = jnp.float32, jnp.bfloat16
        s1 = s1_ref[...].reshape(1, 1, cin_p)
        b1 = b1_ref[...].reshape(1, 1, cin_p)
        zrow_a = jnp.zeros((1, Sp, cin_p), f32)

        # ---- prologue: ap = relu(bn1(x)); the 1-px zero ring is folded into
        #      full-width row stores (no full-buffer zeroing, interior written
        #      exactly once). x_ref is raw (un-normalized) input.
        for b in range(nb):
            if stride == 1:
                a = jnp.maximum(x_ref[b] * s1 + b1, 0.0)            # (H, W, C)
                zc = jnp.zeros((H, 1, cin_p), f32)
                ap_ref[b, 0:1, :, :] = zrow_a                        # top ring
                ap_ref[b, H + 1:H + 2, :, :] = zrow_a                # bottom ring
                ap_ref[b, 1:H + 1, :, :] = jnp.concatenate([zc, a, zc], axis=1)
            else:
                nj, nk = qh - 1, qw - 1
                zc = jnp.zeros((nj, 1, cin_p), f32)
                for py in range(2):                   # padded-parity quadrants
                    for px in range(2):
                        base = (2 * py + px) * qh
                        j0, k0 = 1 - py, 1 - px
                        pad_r = base + (0 if py == 0 else qh - 1)
                        xi = x_ref[b, base + j0:base + j0 + nj, k0:k0 + nk, :]
                        a = jnp.maximum(xi * s1 + b1, 0.0)           # (nj, nk, C)
                        row = (jnp.concatenate([zc, a], axis=1) if k0 == 1
                               else jnp.concatenate([a, zc], axis=1))
                        ap_ref[b, pad_r:pad_r + 1, :, :] = zrow_a    # pad row
                        ap_ref[b, base + j0:base + j0 + nj, :, :] = row

        # ---- conv1: bf16 im2col (M, 9*cin_p) -> ONE MXU matmul, K = 9*cin_p --
        for b in range(nb):
            r = b * HW
            for dy in range(3):
                for dx in range(3):
                    t = 3 * dy + dx
                    if stride == 1:
                        a = ap_ref[b, dy:dy + OH, dx:dx + OW, :]
                    else:
                        r0 = (2 * (dy % 2) + (dx % 2)) * qh + dy // 2
                        c0 = dx // 2
                        a = ap_ref[b, r0:r0 + OH, c0:c0 + OW, :]
                    c1_ref[r:r + HW, t * cin_p:(t + 1) * cin_p] = (
                        a.reshape(HW, cin_p).astype(bf16))           # lane-dense
        acc = jnp.dot(c1_ref[...], w1_ref[...], preferred_element_type=f32)

        # ---- bn2 + relu (Dropout is identity in this eval-mode forward) ------
        h = jnp.maximum(acc * s2_ref[...] + b2_ref[...], 0.0)        # (M, cout_p)

        # ---- conv2 input: padded buffer, ring folded into full-width stores --
        zrow_h = jnp.zeros((1, OW + 2, cout_p), f32)
        zc_h = jnp.zeros((OH, 1, cout_p), f32)
        for b in range(nb):
            hb = h[b * HW:(b + 1) * HW].reshape(OH, OW, cout_p)
            hp_ref[b, 0:1, :, :] = zrow_h
            hp_ref[b, OH + 1:OH + 2, :, :] = zrow_h
            hp_ref[b, 1:OH + 1, :, :] = jnp.concatenate([zc_h, hb, zc_h], axis=1)

        # ---- conv2: bf16 im2col -> ONE MXU matmul, K = 9*cout_p --------------
        for b in range(nb):
            r = b * HW
            for dy in range(3):
                for dx in range(3):
                    t = 3 * dy + dx
                    v = hp_ref[b, dy:dy + OH, dx:dx + OW, :]
                    c2_ref[r:r + HW, t * cout_p:(t + 1) * cout_p] = (
                        v.reshape(HW, cout_p).astype(bf16))
        out = jnp.dot(c2_ref[...], w2_ref[...], preferred_element_type=f32)

        # ---- shortcut + residual add (epilogue) ------------------------------
        if proj:
            # 1x1/stride projection on raw x: stage bf16 operand in the (now
            # consumed) conv1 im2col buffer and issue one MXU matmul for all nb.
            for b in range(nb):
                if stride == 1:
                    xc = x_ref[b]                                    # (OH,OW,cin_p)
                else:
                    r0 = 3 * qh                                      # parity (1,1)
                    xc = x_ref[b, r0:r0 + OH, 0:OW, :]
                c1_ref[b * HW:(b + 1) * HW, 0:cin_p] = (
                    xc.reshape(HW, cin_p).astype(jnp.bfloat16))
            out = out + jnp.dot(c1_ref[:, 0:cin_p], wsc_ref[...],
                                preferred_element_type=f32)
            for b in range(nb):
                o_ref[b, :, :, :] = (out[b * HW:(b + 1) * HW]
                                     .reshape(OH, OW, cout_p).astype(o_ref.dtype))
        else:
            # identity shortcut (stride == 1, cin_p == cout_p): add raw f32 x
            for b in range(nb):
                ob = out[b * HW:(b + 1) * HW] + x_ref[b].reshape(HW, cin_p)
                o_ref[b, :, :, :] = ob.reshape(OH, OW, cout_p).astype(o_ref.dtype)

    if proj:
        def kernel(x_ref, w1_ref, w2_ref, wsc_ref, s1_ref, b1_ref, s2_ref,
                   b2_ref, o_ref, ap_ref, hp_ref, c1_ref, c2_ref):
            body(x_ref, w1_ref, w2_ref, wsc_ref, s1_ref, b1_ref, s2_ref, b2_ref,
                 o_ref, ap_ref, hp_ref, c1_ref, c2_ref)
    else:
        def kernel(x_ref, w1_ref, w2_ref, s1_ref, b1_ref, s2_ref, b2_ref,
                   o_ref, ap_ref, hp_ref, c1_ref, c2_ref):
            body(x_ref, w1_ref, w2_ref, None, s1_ref, b1_ref, s2_ref, b2_ref,
                 o_ref, ap_ref, hp_ref, c1_ref, c2_ref)
    return kernel


def wide_basic_forward(x_nchw, p):
    """Eval-mode forward of WideBasic. x: (N, in_c, H, W) f32 -> (N, out_c, OH, OW)."""
    N, in_c, H, W = x_nchw.shape
    out_c, stride = p["out_c"], p["stride"]
    assert in_c == p["in_c"] and stride in (1, 2)
    if stride == 2:
        assert H % 2 == 0 and W % 2 == 0
    OH = (H + 2 - 3) // stride + 1
    OW = (W + 2 - 3) // stride + 1
    cin_p = _round_up(in_c, LANE)
    cout_p = _round_up(out_c, LANE)
    proj = p["shortcut_w"] is not None
    HW = OH * OW
    nb = _pick_batch_tile(N, HW)

    # ---- minimal boundary layout prep: NCHW->NHWC + lane-pad channels.
    #      Spatial zero-pad only for the stride-2 parity fold (stride-1 padding
    #      now happens inside the kernel, saving an HBM round trip of x).
    x = jnp.transpose(x_nchw, (0, 2, 3, 1)).astype(jnp.float32)
    x = jnp.pad(x, ((0, 0), (0, 0), (0, 0), (0, cin_p - in_c)))
    if stride == 2:
        x = jnp.pad(x, ((0, 0), (1, 1), (1, 1), (0, 0)))
        qh, qw = (H + 2) // 2, (W + 2) // 2
        x = x.reshape(N, qh, 2, qw, 2, cin_p)
        x = jnp.transpose(x, (0, 2, 4, 1, 3, 5)).reshape(N, 4 * qh, qw, cin_p)
        Rin, Sin = 4 * qh, qw                 # parity-folded, zero-padded
        Rp, Sp = 4 * qh, qw
    else:
        Rin, Sin = H, W                       # unpadded; kernel builds the ring
        Rp, Sp = H + 2, W + 2

    # ---- weights: lane-pad channels, flatten the 3x3 taps into K, bf16 ------
    def pad_w(w):                             # (kh,kw,ci,co) -> (kh*kw*ci_p, co_p)
        kh, kw, ci, co = w.shape
        cip, cop = _round_up(ci, LANE), _round_up(co, LANE)
        w = jnp.pad(w, ((0, 0), (0, 0), (0, cip - ci), (0, cop - co)))
        return w.reshape(kh * kw * cip, cop).astype(jnp.bfloat16)

    def pad_vec(v, cp):
        return jnp.pad(v, (0, cp - v.shape[0])).reshape(1, cp).astype(jnp.float32)

    w1 = pad_w(p["conv1_w"])                  # (9*cin_p, cout_p)
    w2 = pad_w(p["conv2_w"])                  # (9*cout_p, cout_p)
    s1, b1 = pad_vec(p["bn1_s"], cin_p), pad_vec(p["bn1_b"], cin_p)
    s2, b2 = pad_vec(p["bn2_s"], cout_p), pad_vec(p["bn2_b"], cout_p)

    kernel = _make_wide_basic_kernel(
        stride=stride, nb=nb, H=H, W=W, OH=OH, OW=OW,
        cin_p=cin_p, cout_p=cout_p, proj=proj)

    in_specs = [
        pl.BlockSpec((nb, Rin, Sin, cin_p), lambda n: (n, 0, 0, 0)),
        pl.BlockSpec((9 * cin_p, cout_p), lambda n: (0, 0)),
        pl.BlockSpec((9 * cout_p, cout_p), lambda n: (0, 0)),
    ]
    inputs = [x, w1, w2]
    if proj:
        wsc = pad_w(p["shortcut_w"])          # (cin_p, cout_p)
        in_specs.append(pl.BlockSpec((cin_p, cout_p), lambda n: (0, 0)))
        inputs.append(wsc)
    in_specs += [pl.BlockSpec((1, cin_p), lambda n: (0, 0)),
                 pl.BlockSpec((1, cin_p), lambda n: (0, 0)),
                 pl.BlockSpec((1, cout_p), lambda n: (0, 0)),
                 pl.BlockSpec((1, cout_p), lambda n: (0, 0))]
    inputs += [s1, b1, s2, b2]

    out = pl.pallas_call(
        kernel,
        out_shape=jax.ShapeDtypeStruct((N, OH, OW, cout_p), jnp.float32),
        grid=(N // nb,),
        in_specs=in_specs,
        out_specs=pl.BlockSpec((nb, OH, OW, cout_p), lambda n: (n, 0, 0, 0)),
        scratch_shapes=[
            pltpu.VMEM((nb, Rp, Sp, cin_p), jnp.float32),             # padded bn1(x)
            pltpu.VMEM((nb, OH + 2, OW + 2, cout_p), jnp.float32),    # padded conv2 in
            pltpu.VMEM((nb * HW, 9 * cin_p), jnp.bfloat16),           # conv1 im2col
            pltpu.VMEM((nb * HW, 9 * cout_p), jnp.bfloat16),          # conv2 im2col
        ],
        compiler_params=pltpu.CompilerParams(
            dimension_semantics=("parallel",),
            vmem_limit_bytes=_vmem_limit_bytes()),
    )(*inputs)

    # back to the PyTorch interface: NCHW, true channel count
    return jnp.transpose(out[:, :, :, :out_c], (0, 3, 1, 2))


# --------------------------------------------------------------------------- #
# Synthetic eval-mode parameters and a pure-JAX reference
# --------------------------------------------------------------------------- #
def init_wide_basic(key, in_c, out_c, stride, eps=1e-5):
    ks = jax.random.split(key, 8)

    def conv_w(k, kh, kw, ci, co):
        return (jax.random.normal(k, (kh, kw, ci, co), jnp.float32)
                * jnp.sqrt(2.0 / (kh * kw * ci)))

    def bn(k, c):
        k1, k2, k3, k4 = jax.random.split(k, 4)
        gamma = jax.random.uniform(k1, (c,), minval=0.8, maxval=1.2)
        beta = 0.05 * jax.random.normal(k2, (c,))
        mean = 0.05 * jax.random.normal(k3, (c,))
        var = jax.random.uniform(k4, (c,), minval=0.8, maxval=1.2)
        scale = gamma / jnp.sqrt(var + eps)
        return scale.astype(jnp.float32), (beta - mean * scale).astype(jnp.float32)

    p = {"stride": stride, "in_c": in_c, "out_c": out_c}
    p["bn1_s"], p["bn1_b"] = bn(ks[0], in_c)
    p["conv1_w"] = conv_w(ks[1], 3, 3, in_c, out_c)
    p["bn2_s"], p["bn2_b"] = bn(ks[2], out_c)
    p["conv2_w"] = conv_w(ks[3], 3, 3, out_c, out_c)
    p["shortcut_w"] = (conv_w(ks[4], 1, 1, in_c, out_c)
                       if (stride != 1 or in_c != out_c) else None)
    return p


def wide_basic_reference(x_nchw, p):
    """Pure-JAX (lax.conv) reference with the same bf16 operand / f32-accum math."""
    x = jnp.transpose(x_nchw, (0, 2, 3, 1)).astype(jnp.float32)

    def conv(v, w, s):
        pad = [(1, 1), (1, 1)] if w.shape[0] == 3 else [(0, 0), (0, 0)]
        return lax.conv_general_dilated(
            v.astype(jnp.bfloat16), w.astype(jnp.bfloat16),
            window_strides=(s, s), padding=pad,
            dimension_numbers=("NHWC", "HWIO", "NHWC"),
            preferred_element_type=jnp.float32)

    a = jnp.maximum(x * p["bn1_s"] + p["bn1_b"], 0.0)
    y = conv(a, p["conv1_w"], p["stride"])
    h = jnp.maximum(y * p["bn2_s"] + p["bn2_b"], 0.0)
    y2 = conv(h, p["conv2_w"], 1)
    sc = conv(x, p["shortcut_w"], p["stride"]) if p["shortcut_w"] is not None else x
    return jnp.transpose(y2 + sc, (0, 3, 1, 2))


# --------------------------------------------------------------------------- #
if __name__ == "__main__":
    root = jax.random.PRNGKey(0)
    kp1, kp2, kx1, kx2 = jax.random.split(root, 4)

    def check(out, ref):
        assert bool(jnp.all(jnp.isfinite(out)))
        err = float(jnp.max(jnp.abs(out - ref)))
        tol = 1e-2 + 1e-2 * float(jnp.max(jnp.abs(ref)))
        assert err < tol, (err, tol)

    # Config A: downsampling block with 1x1 projection shortcut (16->32, stride 2).
    pA = init_wide_basic(kp1, in_c=16, out_c=32, stride=2)
    xA = jax.random.normal(kx1, (2, 16, 16, 16), jnp.float32)
    outA = jax.block_until_ready(jax.jit(lambda v: wide_basic_forward(v, pA))(xA))
    assert outA.shape == (2, 32, 8, 8), outA.shape
    check(outA, wide_basic_reference(xA, pA))

    # Config B: identity-shortcut block (16->16, stride 1).
    pB = init_wide_basic(kp2, in_c=16, out_c=16, stride=1)
    xB = jax.random.normal(kx2, (2, 16, 16, 16), jnp.float32)
    outB = jax.block_until_ready(jax.jit(lambda v: wide_basic_forward(v, pB))(xB))
    assert outB.shape == (2, 16, 16, 16), outB.shape
    check(outB, wide_basic_reference(xB, pB))

    print("KERNEL_OK")
</pallas_src>

<mosaic_0001>
module attributes {stable_mosaic.version = 11 : i64} {
  func.func @kernel(%arg0: i32, %arg1: memref<1x36x9x128xf32, #tpu.memory_space<vmem>>, %arg2: memref<1152x128xbf16, #tpu.memory_space<vmem>>, %arg3: memref<1152x128xbf16, #tpu.memory_space<vmem>>, %arg4: memref<128x128xbf16, #tpu.memory_space<vmem>>, %arg5: memref<1x128xf32, #tpu.memory_space<vmem>>, %arg6: memref<1x128xf32, #tpu.memory_space<vmem>>, %arg7: memref<1x128xf32, #tpu.memory_space<vmem>>, %arg8: memref<1x128xf32, #tpu.memory_space<vmem>>, %arg9: memref<1x8x8x128xf32, #tpu.memory_space<vmem>>, %arg10: memref<1x36x9x128xf32, #tpu.memory_space<vmem>>, %arg11: memref<1x10x10x128xf32, #tpu.memory_space<vmem>>, %arg12: memref<64x1152xbf16, #tpu.memory_space<vmem>>, %arg13: memref<64x1152xbf16, #tpu.memory_space<vmem>>) attributes {dimension_semantics = [#tpu.dimension_semantics<parallel>], iteration_bounds = array<i64: 2>, scalar_prefetch = 0 : i64, scratch_operands = 4 : i64, tpu.core_type = #tpu.core_type<tc>, window_params = [{transform_indices = @transform_0, window_bounds = array<i64: 1, 36, 9, 128>}, {pipeline_mode = #tpu.pipeline_mode<synchronous>, transform_indices = @transform_1, window_bounds = array<i64: 1152, 128>}, {pipeline_mode = #tpu.pipeline_mode<synchronous>, transform_indices = @transform_2, window_bounds = array<i64: 1152, 128>}, {pipeline_mode = #tpu.pipeline_mode<synchronous>, transform_indices = @transform_3, window_bounds = array<i64: 128, 128>}, {pipeline_mode = #tpu.pipeline_mode<synchronous>, transform_indices = @transform_4, window_bounds = array<i64: 1, 128>}, {pipeline_mode = #tpu.pipeline_mode<synchronous>, transform_indices = @transform_5, window_bounds = array<i64: 1, 128>}, {pipeline_mode = #tpu.pipeline_mode<synchronous>, transform_indices = @transform_6, window_bounds = array<i64: 1, 128>}, {pipeline_mode = #tpu.pipeline_mode<synchronous>, transform_indices = @transform_7, window_bounds = array<i64: 1, 128>}, {transform_indices = @transform_8, window_bounds = array<i64: 1, 8, 8, 128>}]} {
    %c0 = arith.constant 0 : index
    %c0_0 = arith.constant 0 : index
    %0 = vector.load %arg5[%c0, %c0_0] : memref<1x128xf32, #tpu.memory_space<vmem>>, vector<1x128xf32>
    %1 = vector.shape_cast %0 : vector<1x128xf32> to vector<1x1x128xf32>
    %c0_1 = arith.constant 0 : index
    %c0_2 = arith.constant 0 : index
    %2 = vector.load %arg6[%c0_1, %c0_2] : memref<1x128xf32, #tpu.memory_space<vmem>>, vector<1x128xf32>
    %3 = vector.shape_cast %2 : vector<1x128xf32> to vector<1x1x128xf32>
    %cst = arith.constant 0.000000e+00 : f32
    %4 = vector.broadcast %cst : f32 to vector<1x9x128xf32>
    %cst_3 = arith.constant 0.000000e+00 : f32
    %5 = vector.broadcast %cst_3 : f32 to vector<8x1x128xf32>
    %c0_4 = arith.constant 0 : index
    %c1 = arith.constant 1 : index
    %c1_5 = arith.constant 1 : index
    %c0_6 = arith.constant 0 : index
    %6 = vector.load %arg1[%c0_4, %c1, %c1_5, %c0_6] : memref<1x36x9x128xf32, #tpu.memory_space<vmem>>, vector<1x8x8x128xf32>
    %7 = vector.shape_cast %6 : vector<1x8x8x128xf32> to vector<8x8x128xf32>
    %8 = vector.broadcast %1 : vector<1x1x128xf32> to vector<8x8x128xf32>
    %9 = arith.mulf %7, %8 : vector<8x8x128xf32>
    %10 = vector.broadcast %3 : vector<1x1x128xf32> to vector<8x8x128xf32>
    %11 = arith.addf %9, %10 : vector<8x8x128xf32>
    %cst_7 = arith.constant 0.000000e+00 : f32
    %12 = vector.broadcast %cst_7 : f32 to vector<8x8x128xf32>
    %13 = arith.maximumf %11, %12 : vector<8x8x128xf32>
    %14 = tpu.concatenate %5, %13 in 1 : vector<8x1x128xf32>, vector<8x8x128xf32> -> vector<8x9x128xf32>
    %c0_8 = arith.constant 0 : index
    %c0_9 = arith.constant 0 : index
    %c0_10 = arith.constant 0 : index
    %c0_11 = arith.constant 0 : index
    %15 = vector.load %arg10[%c0_8, %c0_9, %c0_10, %c0_11] : memref<1x36x9x128xf32, #tpu.memory_space<vmem>>, vector<1x1x9x128xf32>
    %16 = vector.shape_cast %15 : vector<1x1x9x128xf32> to vector<1x9x128xf32>
    %17 = vector.shape_cast %4 : vector<1x9x128xf32> to vector<1x1x9x128xf32>
    tpu.vector_store %arg10[%c0_8, %c0_9, %c0_10, %c0_11], %17 {strides = array<i32>} : memref<1x36x9x128xf32, #tpu.memory_space<vmem>>, vector<1x1x9x128xf32>,
    %c0_12 = arith.constant 0 : index
    %c1_13 = arith.constant 1 : index
    %c0_14 = arith.constant 0 : index
    %c0_15 = arith.constant 0 : index
    %18 = vector.load %arg10[%c0_12, %c1_13, %c0_14, %c0_15] : memref<1x36x9x128xf32, #tpu.memory_space<vmem>>, vector<1x8x9x128xf32>
    %19 = vector.shape_cast %18 : vector<1x8x9x128xf32> to vector<8x9x128xf32>
    %20 = vector.shape_cast %14 : vector<8x9x128xf32> to vector<1x8x9x128xf32>
    tpu.vector_store %arg10[%c0_12, %c1_13, %c0_14, %c0_15], %20 {strides = array<i32>} : memref<1x36x9x128xf32, #tpu.memory_space<vmem>>, vector<1x8x9x128xf32>,
    %c0_16 = arith.constant 0 : index
    %c10 = arith.constant 10 : index
    %c0_17 = arith.constant 0 : index
    %c0_18 = arith.constant 0 : index
    %21 = vector.load %arg1[%c0_16, %c10, %c0_17, %c0_18] : memref<1x36x9x128xf32, #tpu.memory_space<vmem>>, vector<1x8x8x128xf32>
    %22 = vector.shape_cast %21 : vector<1x8x8x128xf32> to vector<8x8x128xf32>
    %23 = vector.broadcast %1 : vector<1x1x128xf32> to vector<8x8x128xf32>
    %24 = arith.mulf %22, %23 : vector<8x8x128xf32>
    %25 = vector.broadcast %3 : vector<1x1x128xf32> to vector<8x8x128xf32>
    %26 = arith.addf %24, %25 : vector<8x8x128xf32>
    %cst_19 = arith.constant 0.000000e+00 : f32
    %27 = vector.broadcast %cst_19 : f32 to vector<8x8x128xf32>
    %28 = arith.maximumf %26, %27 : vector<8x8x128xf32>
    %29 = tpu.concatenate %28, %5 in 1 : vector<8x8x128xf32>, vector<8x1x128xf32> -> vector<8x9x128xf32>
    %c0_20 = arith.constant 0 : index
    %c9 = arith.constant 9 : index
    %c0_21 = arith.constant 0 : index
    %c0_22 = arith.constant 0 : index
    %30 = vector.load %arg10[%c0_20, %c9, %c0_21, %c0_22] : memref<1x36x9x128xf32, #tpu.memory_space<vmem>>, vector<1x1x9x128xf32>
    %31 = vector.shape_cast %30 : vector<1x1x9x128xf32> to vector<1x9x128xf32>
    %32 = vector.shape_cast %4 : vector<1x9x128xf32> to vector<1x1x9x128xf32>
    tpu.vector_store %arg10[%c0_20, %c9, %c0_21, %c0_22], %32 {strides = array<i32>} : memref<1x36x9x128xf32, #tpu.memory_space<vmem>>, vector<1x1x9x128xf32>,
    %c0_23 = arith.constant 0 : index
    %c10_24 = arith.constant 10 : index
    %c0_25 = arith.constant 0 : index
    %c0_26 = arith.constant 0 : index
    %33 = vector.load %arg10[%c0_23, %c10_24, %c0_25, %c0_26] : memref<1x36x9x128xf32, #tpu.memory_space<vmem>>, vector<1x8x9x128xf32>
    %34 = vector.shape_cast %33 : vector<1x8x9x128xf32> to vector<8x9x128xf32>
    %35 = vector.shape_cast %29 : vector<8x9x128xf32> to vector<1x8x9x128xf32>
    tpu.vector_store %arg10[%c0_23, %c10_24, %c0_25, %c0_26], %35 {strides = array<i32>} : memref<1x36x9x128xf32, #tpu.memory_space<vmem>>, vector<1x8x9x128xf32>,
    %c0_27 = arith.constant 0 : index
    %c18 = arith.constant 18 : index
    %c1_28 = arith.constant 1 : index
    %c0_29 = arith.constant 0 : index
    %36 = vector.load %arg1[%c0_27, %c18, %c1_28, %c0_29] : memref<1x36x9x128xf32, #tpu.memory_space<vmem>>, vector<1x8x8x128xf32>
    %37 = vector.shape_cast %36 : vector<1x8x8x128xf32> to vector<8x8x128xf32>
    %38 = vector.broadcast %1 : vector<1x1x128xf32> to vector<8x8x128xf32>
    %39 = arith.mulf %37, %38 : vector<8x8x128xf32>
    %40 = vector.broadcast %3 : vector<1x1x128xf32> to vector<8x8x128xf32>
    %41 = arith.addf %39, %40 : vector<8x8x128xf32>
    %cst_30 = arith.constant 0.000000e+00 : f32
    %42 = vector.broadcast %cst_30 : f32 to vector<8x8x128xf32>
    %43 = arith.maximumf %41, %42 : vector<8x8x128xf32>
    %44 = tpu.concatenate %5, %43 in 1 : vector<8x1x128xf32>, vector<8x8x128xf32> -> vector<8x9x128xf32>
    %c0_31 = arith.constant 0 : index
    %c26 = arith.constant 26 : index
    %c0_32 = arith.constant 0 : index
    %c0_33 = arith.constant 0 : index
    %45 = vector.load %arg10[%c0_31, %c26, %c0_32, %c0_33] : memref<1x36x9x128xf32, #tpu.memory_space<vmem>>, vector<1x1x9x128xf32>
    %46 = vector.shape_cast %45 : vector<1x1x9x128xf32> to vector<1x9x128xf32>
    %47 = vector.shape_cast %4 : vector<1x9x128xf32> to vector<1x1x9x128xf32>
    tpu.vector_store %arg10[%c0_31, %c26, %c0_32, %c0_33], %47 {strides = array<i32>} : memref<1x36x9x128xf32, #tpu.memory_space<vmem>>, vector<1x1x9x128xf32>,
    %c0_34 = arith.constant 0 : index
    %c18_35 = arith.constant 18 : index
    %c0_36 = arith.constant 0 : index
    %c0_37 = arith.constant 0 : index
    %48 = vector.load %arg10[%c0_34, %c18_35, %c0_36, %c0_37] : memref<1x36x9x128xf32, #tpu.memory_space<vmem>>, vector<1x8x9x128xf32>
    %49 = vector.shape_cast %48 : vector<1x8x9x128xf32> to vector<8x9x128xf32>
    %50 = vector.shape_cast %44 : vector<8x9x128xf32> to vector<1x8x9x128xf32>
    tpu.vector_store %arg10[%c0_34, %c18_35, %c0_36, %c0_37], %50 {strides = array<i32>} : memref<1x36x9x128xf32, #tpu.memory_space<vmem>>, vector<1x8x9x128xf32>,
    %c0_38 = arith.constant 0 : index
    %c27 = arith.constant 27 : index
    %c0_39 = arith.constant 0 : index
    %c0_40 = arith.constant 0 : index
    %51 = vector.load %arg1[%c0_38, %c27, %c0_39, %c0_40] : memref<1x36x9x128xf32, #tpu.memory_space<vmem>>, vector<1x8x8x128xf32>
    %52 = vector.shape_cast %51 : vector<1x8x8x128xf32> to vector<8x8x128xf32>
    %53 = vector.broadcast %1 : vector<1x1x128xf32> to vector<8x8x128xf32>
    %54 = arith.mulf %52, %53 : vector<8x8x128xf32>
    %55 = vector.broadcast %3 : vector<1x1x128xf32> to vector<8x8x128xf32>
    %56 = arith.addf %54, %55 : vector<8x8x128xf32>
    %cst_41 = arith.constant 0.000000e+00 : f32
    %57 = vector.broadcast %cst_41 : f32 to vector<8x8x128xf32>
    %58 = arith.maximumf %56, %57 : vector<8x8x128xf32>
    %59 = tpu.concatenate %58, %5 in 1 : vector<8x8x128xf32>, vector<8x1x128xf32> -> vector<8x9x128xf32>
    %c0_42 = arith.constant 0 : index
    %c35 = arith.constant 35 : index
    %c0_43 = arith.constant 0 : index
    %c0_44 = arith.constant 0 : index
    %60 = vector.load %arg10[%c0_42, %c35, %c0_43, %c0_44] : memref<1x36x9x128xf32, #tpu.memory_space<vmem>>, vector<1x1x9x128xf32>
    %61 = vector.shape_cast %60 : vector<1x1x9x128xf32> to vector<1x9x128xf32>
    %62 = vector.shape_cast %4 : vector<1x9x128xf32> to vector<1x1x9x128xf32>
    tpu.vector_store %arg10[%c0_42, %c35, %c0_43, %c0_44], %62 {strides = array<i32>} : memref<1x36x9x128xf32, #tpu.memory_space<vmem>>, vector<1x1x9x128xf32>,
    %c0_45 = arith.constant 0 : index
    %c27_46 = arith.constant 27 : index
    %c0_47 = arith.constant 0 : index
    %c0_48 = arith.constant 0 : index
    %63 = vector.load %arg10[%c0_45, %c27_46, %c0_47, %c0_48] : memref<1x36x9x128xf32, #tpu.memory_space<vmem>>, vector<1x8x9x128xf32>
    %64 = vector.shape_cast %63 : vector<1x8x9x128xf32> to vector<8x9x128xf32>
    %65 = vector.shape_cast %59 : vector<8x9x128xf32> to vector<1x8x9x128xf32>
    tpu.vector_store %arg10[%c0_45, %c27_46, %c0_47, %c0_48], %65 {strides = array<i32>} : memref<1x36x9x128xf32, #tpu.memory_space<vmem>>, vector<1x8x9x128xf32>,
    %c0_49 = arith.constant 0 : index
    %c0_50 = arith.constant 0 : index
    %c0_51 = arith.constant 0 : index
    %c0_52 = arith.constant 0 : index
    %66 = vector.load %arg10[%c0_49, %c0_50, %c0_51, %c0_52] : memref<1x36x9x128xf32, #tpu.memory_space<vmem>>, vector<1x8x8x128xf32>
    %67 = vector.shape_cast %66 : vector<1x8x8x128xf32> to vector<8x8x128xf32>
    %68 = vector.shape_cast %67 : vector<8x8x128xf32> to vector<64x128xf32>
    %69 = arith.truncf %68 : vector<64x128xf32> to vector<64x128xbf16>
    %c0_53 = arith.constant 0 : index
    %c0_54 = arith.constant 0 : index
    %70 = vector.load %arg12[%c0_53, %c0_54] : memref<64x1152xbf16, #tpu.memory_space<vmem>>, vector<64x128xbf16>
    tpu.vector_store %arg12[%c0_53, %c0_54], %69 {strides = array<i32>} : memref<64x1152xbf16, #tpu.memory_space<vmem>>, vector<64x128xbf16>,
    %c0_55 = arith.constant 0 : index
    %c9_56 = arith.constant 9 : index
    %c0_57 = arith.constant 0 : index
    %c0_58 = arith.constant 0 : index
    %71 = vector.load %arg10[%c0_55, %c9_56, %c0_57, %c0_58] : memref<1x36x9x128xf32, #tpu.memory_space<vmem>>, vector<1x8x8x128xf32>
    %72 = vector.shape_cast %71 : vector<1x8x8x128xf32> to vector<8x8x128xf32>
    %73 = vector.shape_cast %72 : vector<8x8x128xf32> to vector<64x128xf32>
    %74 = arith.truncf %73 : vector<64x128xf32> to vector<64x128xbf16>
    %c0_59 = arith.constant 0 : index
    %c128 = arith.constant 128 : index
    %75 = vector.load %arg12[%c0_59, %c128] : memref<64x1152xbf16, #tpu.memory_space<vmem>>, vector<64x128xbf16>
    tpu.vector_store %arg12[%c0_59, %c128], %74 {strides = array<i32>} : memref<64x1152xbf16, #tpu.memory_space<vmem>>, vector<64x128xbf16>,
    %c0_60 = arith.constant 0 : index
    %c0_61 = arith.constant 0 : index
    %c1_62 = arith.constant 1 : index
    %c0_63 = arith.constant 0 : index
    %76 = vector.load %arg10[%c0_60, %c0_61, %c1_62, %c0_63] : memref<1x36x9x128xf32, #tpu.memory_space<vmem>>, vector<1x8x8x128xf32>
    %77 = vector.shape_cast %76 : vector<1x8x8x128xf32> to vector<8x8x128xf32>
    %78 = vector.shape_cast %77 : vector<8x8x128xf32> to vector<64x128xf32>
    %79 = arith.truncf %78 : vector<64x128xf32> to vector<64x128xbf16>
    %c0_64 = arith.constant 0 : index
    %c256 = arith.constant 256 : index
    %80 = vector.load %arg12[%c0_64, %c256] : memref<64x1152xbf16, #tpu.memory_space<vmem>>, vector<64x128xbf16>
    tpu.vector_store %arg12[%c0_64, %c256], %79 {strides = array<i32>} : memref<64x1152xbf16, #tpu.memory_space<vmem>>, vector<64x128xbf16>,
    %c0_65 = arith.constant 0 : index
    %c18_66 = arith.constant 18 : index
    %c0_67 = arith.constant 0 : index
    %c0_68 = arith.constant 0 : index
    %81 = vector.load %arg10[%c0_65, %c18_66, %c0_67, %c0_68] : memref<1x36x9x128xf32, #tpu.memory_space<vmem>>, vector<1x8x8x128xf32>
    %82 = vector.shape_cast %81 : vector<1x8x8x128xf32> to vector<8x8x128xf32>
    %83 = vector.shape_cast %82 : vector<8x8x128xf32> to vector<64x128xf32>
    %84 = arith.truncf %83 : vector<64x128xf32> to vector<64x128xbf16>
    %c0_69 = arith.constant 0 : index
    %c384 = arith.constant 384 : index
    %85 = vector.load %arg12[%c0_69, %c384] : memref<64x1152xbf16, #tpu.memory_space<vmem>>, vector<64x128xbf16>
    tpu.vector_store %arg12[%c0_69, %c384], %84 {strides = array<i32>} : memref<64x1152xbf16, #tpu.memory_space<vmem>>, vector<64x128xbf16>,
    %c0_70 = arith.constant 0 : index
    %c27_71 = arith.constant 27 : index
    %c0_72 = arith.constant 0 : index
    %c0_73 = arith.constant 0 : index
    %86 = vector.load %arg10[%c0_70, %c27_71, %c0_72, %c0_73] : memref<1x36x9x128xf32, #tpu.memory_space<vmem>>, vector<1x8x8x128xf32>
    %87 = vector.shape_cast %86 : vector<1x8x8x128xf32> to vector<8x8x128xf32>
    %88 = vector.shape_cast %87 : vector<8x8x128xf32> to vector<64x128xf32>
    %89 = arith.truncf %88 : vector<64x128xf32> to vector<64x128xbf16>
    %c0_74 = arith.constant 0 : index
    %c512 = arith.constant 512 : index
    %90 = vector.load %arg12[%c0_74, %c512] : memref<64x1152xbf16, #tpu.memory_space<vmem>>, vector<64x128xbf16>
    tpu.vector_store %arg12[%c0_74, %c512], %89 {strides = array<i32>} : memref<64x1152xbf16, #tpu.memory_space<vmem>>, vector<64x128xbf16>,
    %c0_75 = arith.constant 0 : index
    %c18_76 = arith.constant 18 : index
    %c1_77 = arith.constant 1 : index
    %c0_78 = arith.constant 0 : index
    %91 = vector.load %arg10[%c0_75, %c18_76, %c1_77, %c0_78] : memref<1x36x9x128xf32, #tpu.memory_space<vmem>>, vector<1x8x8x128xf32>
    %92 = vector.shape_cast %91 : vector<1x8x8x128xf32> to vector<8x8x128xf32>
    %93 = vector.shape_cast %92 : vector<8x8x128xf32> to vector<64x128xf32>
    %94 = arith.truncf %93 : vector<64x128xf32> to vector<64x128xbf16>
    %c0_79 = arith.constant 0 : index
    %c640 = arith.constant 640 : index
    %95 = vector.load %arg12[%c0_79, %c640] : memref<64x1152xbf16, #tpu.memory_space<vmem>>, vector<64x128xbf16>
    tpu.vector_store %arg12[%c0_79, %c640], %94 {strides = array<i32>} : memref<64x1152xbf16, #tpu.memory_space<vmem>>, vector<64x128xbf16>,
    %c0_80 = arith.constant 0 : index
    %c1_81 = arith.constant 1 : index
    %c0_82 = arith.constant 0 : index
    %c0_83 = arith.constant 0 : index
    %96 = vector.load %arg10[%c0_80, %c1_81, %c0_82, %c0_83] : memref<1x36x9x128xf32, #tpu.memory_space<vmem>>, vector<1x8x8x128xf32>
    %97 = vector.shape_cast %96 : vector<1x8x8x128xf32> to vector<8x8x128xf32>
    %98 = vector.shape_cast %97 : vector<8x8x128xf32> to vector<64x128xf32>
    %99 = arith.truncf %98 : vector<64x128xf32> to vector<64x128xbf16>
    %c0_84 = arith.constant 0 : index
    %c768 = arith.constant 768 : index
    %100 = vector.load %arg12[%c0_84, %c768] : memref<64x1152xbf16, #tpu.memory_space<vmem>>, vector<64x128xbf16>
    tpu.vector_store %arg12[%c0_84, %c768], %99 {strides = array<i32>} : memref<64x1152xbf16, #tpu.memory_space<vmem>>, vector<64x128xbf16>,
    %c0_85 = arith.constant 0 : index
    %c10_86 = arith.constant 10 : index
    %c0_87 = arith.constant 0 : index
    %c0_88 = arith.constant 0 : index
    %101 = vector.load %arg10[%c0_85, %c10_86, %c0_87, %c0_88] : memref<1x36x9x128xf32, #tpu.memory_space<vmem>>, vector<1x8x8x128xf32>
    %102 = vector.shape_cast %101 : vector<1x8x8x128xf32> to vector<8x8x128xf32>
    %103 = vector.shape_cast %102 : vector<8x8x128xf32> to vector<64x128xf32>
    %104 = arith.truncf %103 : vector<64x128xf32> to vector<64x128xbf16>
    %c0_89 = arith.constant 0 : index
    %c896 = arith.constant 896 : index
    %105 = vector.load %arg12[%c0_89, %c896] : memref<64x1152xbf16, #tpu.memory_space<vmem>>, vector<64x128xbf16>
    tpu.vector_store %arg12[%c0_89, %c896], %104 {strides = array<i32>} : memref<64x1152xbf16, #tpu.memory_space<vmem>>, vector<64x128xbf16>,
    %c0_90 = arith.constant 0 : index
    %c1_91 = arith.constant 1 : index
    %c1_92 = arith.constant 1 : index
    %c0_93 = arith.constant 0 : index
    %106 = vector.load %arg10[%c0_90, %c1_91, %c1_92, %c0_93] : memref<1x36x9x128xf32, #tpu.memory_space<vmem>>, vector<1x8x8x128xf32>
    %107 = vector.shape_cast %106 : vector<1x8x8x128xf32> to vector<8x8x128xf32>
    %108 = vector.shape_cast %107 : vector<8x8x128xf32> to vector<64x128xf32>
    %109 = arith.truncf %108 : vector<64x128xf32> to vector<64x128xbf16>
    %c0_94 = arith.constant 0 : index
    %c1024 = arith.constant 1024 : index
    %110 = vector.load %arg12[%c0_94, %c1024] : memref<64x1152xbf16, #tpu.memory_space<vmem>>, vector<64x128xbf16>
    tpu.vector_store %arg12[%c0_94, %c1024], %109 {strides = array<i32>} : memref<64x1152xbf16, #tpu.memory_space<vmem>>, vector<64x128xbf16>,
    %c0_95 = arith.constant 0 : index
    %c0_96 = arith.constant 0 : index
    %111 = vector.load %arg12[%c0_95, %c0_96] : memref<64x1152xbf16, #tpu.memory_space<vmem>>, vector<64x1152xbf16>
    %c0_97 = arith.constant 0 : index
    %c0_98 = arith.constant 0 : index
    %112 = vector.load %arg2[%c0_97, %c0_98] : memref<1152x128xbf16, #tpu.memory_space<vmem>>, vector<1152x128xbf16>
    %cst_99 = arith.constant dense<0.000000e+00> : vector<64x128xf32>
    %113 = tpu.matmul %111, %112, %cst_99 {dimension_numbers = #tpu.dot_dimension_numbers<[1], [0], [0], [1], [0, 0, 1, 1], [], []>} : vector<64x1152xbf16>, vector<1152x128xbf16>, vector<64x128xf32> -> vector<64x128xf32>
    %c0_100 = arith.constant 0 : index
    %c0_101 = arith.constant 0 : index
    %114 = vector.load %arg7[%c0_100, %c0_101] : memref<1x128xf32, #tpu.memory_space<vmem>>, vector<1x128xf32>
    %115 = vector.broadcast %114 : vector<1x128xf32> to vector<64x128xf32>
    %116 = arith.mulf %113, %115 : vector<64x128xf32>
    %c0_102 = arith.constant 0 : index
    %c0_103 = arith.constant 0 : index
    %117 = vector.load %arg8[%c0_102, %c0_103] : memref<1x128xf32, #tpu.memory_space<vmem>>, vector<1x128xf32>
    %118 = vector.broadcast %117 : vector<1x128xf32> to vector<64x128xf32>
    %119 = arith.addf %116, %118 : vector<64x128xf32>
    %cst_104 = arith.constant 0.000000e+00 : f32
    %120 = vector.broadcast %cst_104 : f32 to vector<64x128xf32>
    %121 = arith.maximumf %119, %120 : vector<64x128xf32>
    %cst_105 = arith.constant 0.000000e+00 : f32
    %122 = vector.broadcast %cst_105 : f32 to vector<1x10x128xf32>
    %cst_106 = arith.constant 0.000000e+00 : f32
    %123 = vector.broadcast %cst_106 : f32 to vector<8x1x128xf32>
    %124 = vector.shape_cast %121 : vector<64x128xf32> to vector<8x8x128xf32>
    %c0_107 = arith.constant 0 : index
    %c0_108 = arith.constant 0 : index
    %c0_109 = arith.constant 0 : index
    %c0_110 = arith.constant 0 : index
    %125 = vector.load %arg11[%c0_107, %c0_108, %c0_109, %c0_110] : memref<1x10x10x128xf32, #tpu.memory_space<vmem>>, vector<1x1x10x128xf32>
    %126 = vector.shape_cast %125 : vector<1x1x10x128xf32> to vector<1x10x128xf32>
    %127 = vector.shape_cast %122 : vector<1x10x128xf32> to vector<1x1x10x128xf32>
    tpu.vector_store %arg11[%c0_107, %c0_108, %c0_109, %c0_110], %127 {strides = array<i32>} : memref<1x10x10x128xf32, #tpu.memory_space<vmem>>, vector<1x1x10x128xf32>,
    %c0_111 = arith.constant 0 : index
    %c9_112 = arith.constant 9 : index
    %c0_113 = arith.constant 0 : index
    %c0_114 = arith.constant 0 : index
    %128 = vector.load %arg11[%c0_111, %c9_112, %c0_113, %c0_114] : memref<1x10x10x128xf32, #tpu.memory_space<vmem>>, vector<1x1x10x128xf32>
    %129 = vector.shape_cast %128 : vector<1x1x10x128xf32> to vector<1x10x128xf32>
    %130 = vector.shape_cast %122 : vector<1x10x128xf32> to vector<1x1x10x128xf32>
    tpu.vector_store %arg11[%c0_111, %c9_112, %c0_113, %c0_114], %130 {strides = array<i32>} : memref<1x10x10x128xf32, #tpu.memory_space<vmem>>, vector<1x1x10x128xf32>,
    %131 = tpu.concatenate %123, %124, %123 in 1 : vector<8x1x128xf32>, vector<8x8x128xf32>, vector<8x1x128xf32> -> vector<8x10x128xf32>
    %c0_115 = arith.constant 0 : index
    %c1_116 = arith.constant 1 : index
    %c0_117 = arith.constant 0 : index
    %c0_118 = arith.constant 0 : index
    %132 = vector.load %arg11[%c0_115, %c1_116, %c0_117, %c0_118] : memref<1x10x10x128xf32, #tpu.memory_space<vmem>>, vector<1x8x10x128xf32>
    %133 = vector.shape_cast %132 : vector<1x8x10x128xf32> to vector<8x10x128xf32>
    %134 = vector.shape_cast %131 : vector<8x10x128xf32> to vector<1x8x10x128xf32>
    tpu.vector_store %arg11[%c0_115, %c1_116, %c0_117, %c0_118], %134 {strides = array<i32>} : memref<1x10x10x128xf32, #tpu.memory_space<vmem>>, vector<1x8x10x128xf32>,
    %c0_119 = arith.constant 0 : index
    %c0_120 = arith.constant 0 : index
    %c0_121 = arith.constant 0 : index
    %c0_122 = arith.constant 0 : index
    %135 = vector.load %arg11[%c0_119, %c0_120, %c0_121, %c0_122] : memref<1x10x10x128xf32, #tpu.memory_space<vmem>>, vector<1x8x8x128xf32>
    %136 = vector.shape_cast %135 : vector<1x8x8x128xf32> to vector<8x8x128xf32>
    %137 = vector.shape_cast %136 : vector<8x8x128xf32> to vector<64x128xf32>
    %138 = arith.truncf %137 : vector<64x128xf32> to vector<64x128xbf16>
    %c0_123 = arith.constant 0 : index
    %c0_124 = arith.constant 0 : index
    %139 = vector.load %arg13[%c0_123, %c0_124] : memref<64x1152xbf16, #tpu.memory_space<vmem>>, vector<64x128xbf16>
    tpu.vector_store %arg13[%c0_123, %c0_124], %138 {strides = array<i32>} : memref<64x1152xbf16, #tpu.memory_space<vmem>>, vector<64x128xbf16>,
    %c0_125 = arith.constant 0 : index
    %c0_126 = arith.constant 0 : index
    %c1_127 = arith.constant 1 : index
    %c0_128 = arith.constant 0 : index
    %140 = vector.load %arg11[%c0_125, %c0_126, %c1_127, %c0_128] : memref<1x10x10x128xf32, #tpu.memory_space<vmem>>, vector<1x8x8x128xf32>
    %141 = vector.shape_cast %140 : vector<1x8x8x128xf32> to vector<8x8x128xf32>
    %142 = vector.shape_cast %141 : vector<8x8x128xf32> to vector<64x128xf32>
    %143 = arith.truncf %142 : vector<64x128xf32> to vector<64x128xbf16>
    %c0_129 = arith.constant 0 : index
    %c128_130 = arith.constant 128 : index
    %144 = vector.load %arg13[%c0_129, %c128_130] : memref<64x1152xbf16, #tpu.memory_space<vmem>>, vector<64x128xbf16>
    tpu.vector_store %arg13[%c0_129, %c128_130], %143 {strides = array<i32>} : memref<64x1152xbf16, #tpu.memory_space<vmem>>, vector<64x128xbf16>,
    %c0_131 = arith.constant 0 : index
    %c0_132 = arith.constant 0 : index
    %c2 = arith.constant 2 : index
    %c0_133 = arith.constant 0 : index
    %145 = vector.load %arg11[%c0_131, %c0_132, %c2, %c0_133] : memref<1x10x10x128xf32, #tpu.memory_space<vmem>>, vector<1x8x8x128xf32>
    %146 = vector.shape_cast %145 : vector<1x8x8x128xf32> to vector<8x8x128xf32>
    %147 = vector.shape_cast %146 : vector<8x8x128xf32> to vector<64x128xf32>
    %148 = arith.truncf %147 : vector<64x128xf32> to vector<64x128xbf16>
    %c0_134 = arith.constant 0 : index
    %c256_135 = arith.constant 256 : index
    %149 = vector.load %arg13[%c0_134, %c256_135] : memref<64x1152xbf16, #tpu.memory_space<vmem>>, vector<64x128xbf16>
    tpu.vector_store %arg13[%c0_134, %c256_135], %148 {strides = array<i32>} : memref<64x1152xbf16, #tpu.memory_space<vmem>>, vector<64x128xbf16>,
    %c0_136 = arith.constant 0 : index
    %c1_137 = arith.constant 1 : index
    %c0_138 = arith.constant 0 : index
    %c0_139 = arith.constant 0 : index
    %150 = vector.load %arg11[%c0_136, %c1_137, %c0_138, %c0_139] : memref<1x10x10x128xf32, #tpu.memory_space<vmem>>, vector<1x8x8x128xf32>
    %151 = vector.shape_cast %150 : vector<1x8x8x128xf32> to vector<8x8x128xf32>
    %152 = vector.shape_cast %151 : vector<8x8x128xf32> to vector<64x128xf32>
    %153 = arith.truncf %152 : vector<64x128xf32> to vector<64x128xbf16>
    %c0_140 = arith.constant 0 : index
    %c384_141 = arith.constant 384 : index
    %154 = vector.load %arg13[%c0_140, %c384_141] : memref<64x1152xbf16, #tpu.memory_space<vmem>>, vector<64x128xbf16>
    tpu.vector_store %arg13[%c0_140, %c384_141], %153 {strides = array<i32>} : memref<64x1152xbf16, #tpu.memory_space<vmem>>, vector<64x128xbf16>,
    %c0_142 = arith.constant 0 : index
    %c1_143 = arith.constant 1 : index
    %c1_144 = arith.constant 1 : index
    %c0_145 = arith.constant 0 : index
    %155 = vector.load %arg11[%c0_142, %c1_143, %c1_144, %c0_145] : memref<1x10x10x128xf32, #tpu.memory_space<vmem>>, vector<1x8x8x128xf32>
    %156 = vector.shape_cast %155 : vector<1x8x8x128xf32> to vector<8x8x128xf32>
    %157 = vector.shape_cast %156 : vector<8x8x128xf32> to vector<64x128xf32>
    %158 = arith.truncf %157 : vector<64x128xf32> to vector<64x128xbf16>
    %c0_146 = arith.constant 0 : index
    %c512_147 = arith.constant 512 : index
    %159 = vector.load %arg13[%c0_146, %c512_147] : memref<64x1152xbf16, #tpu.memory_space<vmem>>, vector<64x128xbf16>
    tpu.vector_store %arg13[%c0_146, %c512_147], %158 {strides = array<i32>} : memref<64x1152xbf16, #tpu.memory_space<vmem>>, vector<64x128xbf16>,
    %c0_148 = arith.constant 0 : index
    %c1_149 = arith.constant 1 : index
    %c2_150 = arith.constant 2 : index
    %c0_151 = arith.constant 0 : index
    %160 = vector.load %arg11[%c0_148, %c1_149, %c2_150, %c0_151] : memref<1x10x10x128xf32, #tpu.memory_space<vmem>>, vector<1x8x8x128xf32>
    %161 = vector.shape_cast %160 : vector<1x8x8x128xf32> to vector<8x8x128xf32>
    %162 = vector.shape_cast %161 : vector<8x8x128xf32> to vector<64x128xf32>
    %163 = arith.truncf %162 : vector<64x128xf32> to vector<64x128xbf16>
    %c0_152 = arith.constant 0 : index
    %c640_153 = arith.constant 640 : index
    %164 = vector.load %arg13[%c0_152, %c640_153] : memref<64x1152xbf16, #tpu.memory_space<vmem>>, vector<64x128xbf16>
    tpu.vector_store %arg13[%c0_152, %c640_153], %163 {strides = array<i32>} : memref<64x1152xbf16, #tpu.memory_space<vmem>>, vector<64x128xbf16>,
    %c0_154 = arith.constant 0 : index
    %c2_155 = arith.constant 2 : index
    %c0_156 = arith.constant 0 : index
    %c0_157 = arith.constant 0 : index
    %165 = vector.load %arg11[%c0_154, %c2_155, %c0_156, %c0_157] : memref<1x10x10x128xf32, #tpu.memory_space<vmem>>, vector<1x8x8x128xf32>
    %166 = vector.shape_cast %165 : vector<1x8x8x128xf32> to vector<8x8x128xf32>
    %167 = vector.shape_cast %166 : vector<8x8x128xf32> to vector<64x128xf32>
    %168 = arith.truncf %167 : vector<64x128xf32> to vector<64x128xbf16>
    %c0_158 = arith.constant 0 : index
    %c768_159 = arith.constant 768 : index
    %169 = vector.load %arg13[%c0_158, %c768_159] : memref<64x1152xbf16, #tpu.memory_space<vmem>>, vector<64x128xbf16>
    tpu.vector_store %arg13[%c0_158, %c768_159], %168 {strides = array<i32>} : memref<64x1152xbf16, #tpu.memory_space<vmem>>, vector<64x128xbf16>,
    %c0_160 = arith.constant 0 : index
    %c2_161 = arith.constant 2 : index
    %c1_162 = arith.constant 1 : index
    %c0_163 = arith.constant 0 : index
    %170 = vector.load %arg11[%c0_160, %c2_161, %c1_162, %c0_163] : memref<1x10x10x128xf32, #tpu.memory_space<vmem>>, vector<1x8x8x128xf32>
    %171 = vector.shape_cast %170 : vector<1x8x8x128xf32> to vector<8x8x128xf32>
    %172 = vector.shape_cast %171 : vector<8x8x128xf32> to vector<64x128xf32>
    %173 = arith.truncf %172 : vector<64x128xf32> to vector<64x128xbf16>
    %c0_164 = arith.constant 0 : index
    %c896_165 = arith.constant 896 : index
    %174 = vector.load %arg13[%c0_164, %c896_165] : memref<64x1152xbf16, #tpu.memory_space<vmem>>, vector<64x128xbf16>
    tpu.vector_store %arg13[%c0_164, %c896_165], %173 {strides = array<i32>} : memref<64x1152xbf16, #tpu.memory_space<vmem>>, vector<64x128xbf16>,
    %c0_166 = arith.constant 0 : index
    %c2_167 = arith.constant 2 : index
    %c2_168 = arith.constant 2 : index
    %c0_169 = arith.constant 0 : index
    %175 = vector.load %arg11[%c0_166, %c2_167, %c2_168, %c0_169] : memref<1x10x10x128xf32, #tpu.memory_space<vmem>>, vector<1x8x8x128xf32>
    %176 = vector.shape_cast %175 : vector<1x8x8x128xf32> to vector<8x8x128xf32>
    %177 = vector.shape_cast %176 : vector<8x8x128xf32> to vector<64x128xf32>
    %178 = arith.truncf %177 : vector<64x128xf32> to vector<64x128xbf16>
    %c0_170 = arith.constant 0 : index
    %c1024_171 = arith.constant 1024 : index
    %179 = vector.load %arg13[%c0_170, %c1024_171] : memref<64x1152xbf16, #tpu.memory_space<vmem>>, vector<64x128xbf16>
    tpu.vector_store %arg13[%c0_170, %c1024_171], %178 {strides = array<i32>} : memref<64x1152xbf16, #tpu.memory_space<vmem>>, vector<64x128xbf16>,
    %c0_172 = arith.constant 0 : index
    %c0_173 = arith.constant 0 : index
    %180 = vector.load %arg13[%c0_172, %c0_173] : memref<64x1152xbf16, #tpu.memory_space<vmem>>, vector<64x1152xbf16>
    %c0_174 = arith.constant 0 : index
    %c0_175 = arith.constant 0 : index
    %181 = vector.load %arg3[%c0_174, %c0_175] : memref<1152x128xbf16, #tpu.memory_space<vmem>>, vector<1152x128xbf16>
    %cst_176 = arith.constant dense<0.000000e+00> : vector<64x128xf32>
    %182 = tpu.matmul %180, %181, %cst_176 {dimension_numbers = #tpu.dot_dimension_numbers<[1], [0], [0], [1], [0, 0, 1, 1], [], []>} : vector<64x1152xbf16>, vector<1152x128xbf16>, vector<64x128xf32> -> vector<64x128xf32>
    %c0_177 = arith.constant 0 : index
    %c27_178 = arith.constant 27 : index
    %c0_179 = arith.constant 0 : index
    %c0_180 = arith.constant 0 : index
    %183 = vector.load %arg1[%c0_177, %c27_178, %c0_179, %c0_180] : memref<1x36x9x128xf32, #tpu.memory_space<vmem>>, vector<1x8x8x128xf32>
    %184 = vector.shape_cast %183 : vector<1x8x8x128xf32> to vector<8x8x128xf32>
    %185 = vector.shape_cast %184 : vector<8x8x128xf32> to vector<64x128xf32>
    %186 = arith.truncf %185 : vector<64x128xf32> to vector<64x128xbf16>
    %c0_181 = arith.constant 0 : index
    %c0_182 = arith.constant 0 : index
    %187 = vector.load %arg12[%c0_181, %c0_182] : memref<64x1152xbf16, #tpu.memory_space<vmem>>, vector<64x128xbf16>
    tpu.vector_store %arg12[%c0_181, %c0_182], %186 {strides = array<i32>} : memref<64x1152xbf16, #tpu.memory_space<vmem>>, vector<64x128xbf16>,
    %c0_183 = arith.constant 0 : index
    %c0_184 = arith.constant 0 : index
    %188 = vector.load %arg12[%c0_183, %c0_184] : memref<64x1152xbf16, #tpu.memory_space<vmem>>, vector<64x128xbf16>
    %c0_185 = arith.constant 0 : index
    %c0_186 = arith.constant 0 : index
    %189 = vector.load %arg4[%c0_185, %c0_186] : memref<128x128xbf16, #tpu.memory_space<vmem>>, vector<128x128xbf16>
    %cst_187 = arith.constant dense<0.000000e+00> : vector<64x128xf32>
    %190 = tpu.matmul %188, %189, %cst_187 {dimension_numbers = #tpu.dot_dimension_numbers<[1], [0], [0], [1], [0, 0, 1, 1], [], []>} : vector<64x128xbf16>, vector<128x128xbf16>, vector<64x128xf32> -> vector<64x128xf32>
    %191 = arith.addf %182, %190 : vector<64x128xf32>
    %192 = vector.shape_cast %191 : vector<64x128xf32> to vector<8x8x128xf32>
    %c0_188 = arith.constant 0 : index
    %c0_189 = arith.constant 0 : index
    %c0_190 = arith.constant 0 : index
    %c0_191 = arith.constant 0 : index
    %193 = vector.load %arg9[%c0_188, %c0_189, %c0_190, %c0_191] : memref<1x8x8x128xf32, #tpu.memory_space<vmem>>, vector<1x8x8x128xf32>
    %194 = vector.shape_cast %193 : vector<1x8x8x128xf32> to vector<8x8x128xf32>
    %195 = vector.shape_cast %192 : vector<8x8x128xf32> to vector<1x8x8x128xf32>
    tpu.vector_store %arg9[%c0_188, %c0_189, %c0_190, %c0_191], %195 {strides = array<i32>} : memref<1x8x8x128xf32, #tpu.memory_space<vmem>>, vector<1x8x8x128xf32>,
    return
  }
  func.func @transform_0(%arg0: i32) -> (i32, i32, i32, i32) {
    %c0_i32 = arith.constant 0 : i32
    %c0_i32_0 = arith.constant 0 : i32
    %c0_i32_1 = arith.constant 0 : i32
    %c0_i32_2 = arith.constant 0 : i32
    return %arg0, %c0_i32, %c0_i32_0, %c0_i32_1 : i32, i32, i32, i32
  }
  func.func @transform_1(%arg0: i32) -> (i32, i32) {
    %c0_i32 = arith.constant 0 : i32
    %c0_i32_0 = arith.constant 0 : i32
    %c0_i32_1 = arith.constant 0 : i32
    return %c0_i32, %c0_i32_0 : i32, i32
  }
  func.func @transform_2(%arg0: i32) -> (i32, i32) {
    %c0_i32 = arith.constant 0 : i32
    %c0_i32_0 = arith.constant 0 : i32
    %c0_i32_1 = arith.constant 0 : i32
    return %c0_i32, %c0_i32_0 : i32, i32
  }
  func.func @transform_3(%arg0: i32) -> (i32, i32) {
    %c0_i32 = arith.constant 0 : i32
    %c0_i32_0 = arith.constant 0 : i32
    %c0_i32_1 = arith.constant 0 : i32
    return %c0_i32, %c0_i32_0 : i32, i32
  }
  func.func @transform_4(%arg0: i32) -> (i32, i32) {
    %c0_i32 = arith.constant 0 : i32
    %c0_i32_0 = arith.constant 0 : i32
    %c0_i32_1 = arith.constant 0 : i32
    return %c0_i32, %c0_i32_0 : i32, i32
  }
  func.func @transform_5(%arg0: i32) -> (i32, i32) {
    %c0_i32 = arith.constant 0 : i32
    %c0_i32_0 = arith.constant 0 : i32
    %c0_i32_1 = arith.constant 0 : i32
    return %c0_i32, %c0_i32_0 : i32, i32
  }
  func.func @transform_6(%arg0: i32) -> (i32, i32) {
    %c0_i32 = arith.constant 0 : i32
    %c0_i32_0 = arith.constant 0 : i32
    %c0_i32_1 = arith.constant 0 : i32
    return %c0_i32, %c0_i32_0 : i32, i32
  }
  func.func @transform_7(%arg0: i32) -> (i32, i32) {
    %c0_i32 = arith.constant 0 : i32
    %c0_i32_0 = arith.constant 0 : i32
    %c0_i32_1 = arith.constant 0 : i32
    return %c0_i32, %c0_i32_0 : i32, i32
  }
  func.func @transform_8(%arg0: i32) -> (i32, i32, i32, i32) {
    %c0_i32 = arith.constant 0 : i32
    %c0_i32_0 = arith.constant 0 : i32
    %c0_i32_1 = arith.constant 0 : i32
    %c0_i32_2 = arith.constant 0 : i32
    return %arg0, %c0_i32, %c0_i32_0, %c0_i32_1 : i32, i32, i32, i32
  }
}

</mosaic_0001>

<llo_original>
// kernel: _lambda_.1
$region0: #{_lambda_.1}
  #allocation0 [shape = 'u32[]', space=smem, size = 0x4, offset = 0x4, fixed_abs, tag = 'smem constant byte address 0x4 - core index']
  #allocation1 [shape = 'u32[72,128]{1,0:T(1,128)}', space=vmem, size = 0x9000, scoped, tag = 'internal scratch']
  #allocation2 [shape = 'f32[1,36,9,128]{3,2,1,0:T(8,128)}', space=vmem, size = 0x48000, scoped, tag = 'scratch operand']
  #allocation3 [shape = 'f32[1,10,10,128]{3,2,1,0:T(8,128)}', space=vmem, size = 0x14000, scoped, tag = 'scratch operand']
  #allocation4 [shape = 'bf16[64,1152]{1,0:T(8,128)(2,1)}', space=vmem, size = 0x24000, scoped, tag = 'scratch operand']
  #allocation5 [shape = 'bf16[64,1152]{1,0:T(8,128)(2,1)}', space=vmem, size = 0x24000, scoped, tag = 'scratch operand']
  %s0 = inlined_call_operand.vmem [shape: f32[2,36,9,128], index: 0, kind: input, shape index: {}]
  %s1 = inlined_call_operand.vmem [shape: bf16[1152,128], index: 1, kind: input, shape index: {}]
  %s2 = inlined_call_operand.vmem [shape: bf16[1152,128], index: 2, kind: input, shape index: {}]
  %s3 = inlined_call_operand.vmem [shape: bf16[128,128], index: 3, kind: input, shape index: {}]
  %s4 = inlined_call_operand.vmem [shape: f32[1,128], index: 4, kind: input, shape index: {}]
  %s5 = inlined_call_operand.vmem [shape: f32[1,128], index: 5, kind: input, shape index: {}]
  %s6 = inlined_call_operand.vmem [shape: f32[1,128], index: 6, kind: input, shape index: {}]
  %s7 = inlined_call_operand.vmem [shape: f32[1,128], index: 7, kind: input, shape index: {}]
  %s8 = inlined_call_operand.vmem [shape: f32[2,8,8,128], index: 8, kind: output, shape index: {}]
  %s9 = sld [smem:[#allocation0]]
  $region65: #{_lambda_.1} parent=0
    _
  %s11 = ssub.s32 1, %s9
  %s12 = scalar_select 0, %s11, %s9
  loop: start=0, step=1, limit=4
  $region2: #{_lambda_.1} parent=0 // loop_pre_header
    _
  $region3: #{_lambda_.1} parent=0 // loop_header
    %s14 = sphi 0, %s18
    %p15 = scmp.ge.s32.totalorder %s14, 4
    %s24 = sphi 0, %s26
    %s27 = sphi 0, %s24
    %s28 = sphi 0, %s27
    %s44 = sphi 0, %s28
    %s48 = sphi 0, %s48
    %s50 = sphi 0, %s48
    %s51 = sphi 0, %s50
    %s65 = sphi 0, %s51
    %s69 = sphi 0, %s69
    %s71 = sphi 0, %s69
    %s72 = sphi 0, %s71
    %s86 = sphi 0, %s72
    %s90 = sphi 0, %s90
    %s92 = sphi 0, %s90
    %s93 = sphi 0, %s92
    %s107 = sphi 0, %s93
    %s111 = sphi 0, %s111
    %s113 = sphi 0, %s111
    %s114 = sphi 0, %s113
    %s128 = sphi 0, %s114
    %s132 = sphi 0, %s132
    %s134 = sphi 0, %s132
    %s135 = sphi 0, %s134
    %s149 = sphi 0, %s135
    %s153 = sphi 0, %s153
    %s155 = sphi 0, %s153
    %s156 = sphi 0, %s155
    %s170 = sphi 0, %s156
    %s174 = sphi 0, %s174
    %s176 = sphi 0, %s174
    %s177 = sphi 0, %s176
    %s191 = sphi 0, %s177
    %s197 = sphi 0, %s199
    %s200 = sphi 0, %s197
    %s201 = sphi 0, %s200
    %s217 = sphi 0, %s201
  $region4: #{_lambda_.1} parent=0 // loop_header_branch
    %17 = sbr.rel (%p15) target = $region8
  $region5: #{_lambda_.1} parent=0 // loop_body
    %s19 = ssub.s32 %s14, 1
    %s20 = ssub.s32 %s14, 2
    %s21 = sadd.s32 %s14, 1
    %s22 = ssub.s32 %s14, %s21
    %p23 = scmp.eq.s32.totalorder %s22, 0
    %s25 = sadd.s32 %s24, 1
    %s26 = scalar_select %p23, %s24, %s25
    %p29 = pneg %p23
    %p30 = scmp.eq.s32.totalorder %s14, 1
    %p31 = por %p29, %p30
    %p32 = scmp.ne.s32.totalorder %s24, %s27
    %p33 = scmp.eq.s32.totalorder %s14, 0
    %p34 = por %p32, %p33
    %p35 = scmp.ne.s32.totalorder %s24, %s27
    %p36 = scmp.eq.s32.totalorder %s19, 1
    %p37 = por %p35, %p36
    %p38 = scmp.ne.s32.totalorder %s27, %s28
    %p39 = scmp.eq.s32.totalorder %s19, 0
    %p40 = por %p38, %p39
    %p41 = scmp.ne.s32.totalorder %s27, %s28
    %p42 = scmp.eq.s32.totalorder %s20, 1
    %p43 = por %p41, %p42
    %p45 = scmp.ne.s32.totalorder %s28, %s44
    %p46 = scmp.eq.s32.totalorder %s20, 0
    %p47 = por %p45, %p46
    %s49 = sadd.s32 %s48, 1
    %p52 = scmp.eq.s32.totalorder %s14, 1
    %p53 = scmp.ne.s32.totalorder %s48, %s50
    %p54 = scmp.eq.s32.totalorder %s14, 0
    %p55 = por %p53, %p54
    %p56 = scmp.ne.s32.totalorder %s48, %s50
    %p57 = scmp.eq.s32.totalorder %s19, 1
    %p58 = por %p56, %p57
    %p59 = scmp.ne.s32.totalorder %s50, %s51
    %p60 = scmp.eq.s32.totalorder %s19, 0
    %p61 = por %p59, %p60
    %p62 = scmp.ne.s32.totalorder %s50, %s51
    %p63 = scmp.eq.s32.totalorder %s20, 1
    %p64 = por %p62, %p63
    %p66 = scmp.ne.s32.totalorder %s51, %s65
    %p67 = scmp.eq.s32.totalorder %s20, 0
    %p68 = por %p66, %p67
    %s70 = sadd.s32 %s69, 1
    %p73 = scmp.eq.s32.totalorder %s14, 1
    %p74 = scmp.ne.s32.totalorder %s69, %s71
    %p75 = scmp.eq.s32.totalorder %s14, 0
    %p76 = por %p74, %p75
    %p77 = scmp.ne.s32.totalorder %s69, %s71
    %p78 = scmp.eq.s32.totalorder %s19, 1
    %p79 = por %p77, %p78
    %p80 = scmp.ne.s32.totalorder %s71, %s72
    %p81 = scmp.eq.s32.totalorder %s19, 0
    %p82 = por %p80, %p81
    %p83 = scmp.ne.s32.totalorder %s71, %s72
    %p84 = scmp.eq.s32.totalorder %s20, 1
    %p85 = por %p83, %p84
    %p87 = scmp.ne.s32.totalorder %s72, %s86
    %p88 = scmp.eq.s32.totalorder %s20, 0
    %p89 = por %p87, %p88
    %s91 = sadd.s32 %s90, 1
    %p94 = scmp.eq.s32.totalorder %s14, 1
    %p95 = scmp.ne.s32.totalorder %s90, %s92
    %p96 = scmp.eq.s32.totalorder %s14, 0
    %p97 = por %p95, %p96
    %p98 = scmp.ne.s32.totalorder %s90, %s92
    %p99 = scmp.eq.s32.totalorder %s19, 1
    %p100 = por %p98, %p99
    %p101 = scmp.ne.s32.totalorder %s92, %s93
    %p102 = scmp.eq.s32.totalorder %s19, 0
    %p103 = por %p101, %p102
    %p104 = scmp.ne.s32.totalorder %s92, %s93
    %p105 = scmp.eq.s32.totalorder %s20, 1
    %p106 = por %p104, %p105
    %p108 = scmp.ne.s32.totalorder %s93, %s107
    %p109 = scmp.eq.s32.totalorder %s20, 0
    %p110 = por %p108, %p109
    %s112 = sadd.s32 %s111, 1
    %p115 = scmp.eq.s32.totalorder %s14, 1
    %p116 = scmp.ne.s32.totalorder %s111, %s113
    %p117 = scmp.eq.s32.totalorder %s14, 0
    %p118 = por %p116, %p117
    %p119 = scmp.ne.s32.totalorder %s111, %s113
    %p120 = scmp.eq.s32.totalorder %s19, 1
    %p121 = por %p119, %p120
    %p122 = scmp.ne.s32.totalorder %s113, %s114
    %p123 = scmp.eq.s32.totalorder %s19, 0
    %p124 = por %p122, %p123
    %p125 = scmp.ne.s32.totalorder %s113, %s114
    %p126 = scmp.eq.s32.totalorder %s20, 1
    %p127 = por %p125, %p126
    %p129 = scmp.ne.s32.totalorder %s114, %s128
    %p130 = scmp.eq.s32.totalorder %s20, 0
    %p131 = por %p129, %p130
    %s133 = sadd.s32 %s132, 1
    %p136 = scmp.eq.s32.totalorder %s14, 1
    %p137 = scmp.ne.s32.totalorder %s132, %s134
    %p138 = scmp.eq.s32.totalorder %s14, 0
    %p139 = por %p137, %p138
    %p140 = scmp.ne.s32.totalorder %s132, %s134
    %p141 = scmp.eq.s32.totalorder %s19, 1
    %p142 = por %p140, %p141
    %p143 = scmp.ne.s32.totalorder %s134, %s135
    %p144 = scmp.eq.s32.totalorder %s19, 0
    %p145 = por %p143, %p144
    %p146 = scmp.ne.s32.totalorder %s134, %s135
    %p147 = scmp.eq.s32.totalorder %s20, 1
    %p148 = por %p146, %p147
    %p150 = scmp.ne.s32.totalorder %s135, %s149
    %p151 = scmp.eq.s32.totalorder %s20, 0
    %p152 = por %p150, %p151
    %s154 = sadd.s32 %s153, 1
    %p157 = scmp.eq.s32.totalorder %s14, 1
    %p158 = scmp.ne.s32.totalorder %s153, %s155
    %p159 = scmp.eq.s32.totalorder %s14, 0
    %p160 = por %p158, %p159
    %p161 = scmp.ne.s32.totalorder %s153, %s155
    %p162 = scmp.eq.s32.totalorder %s19, 1
    %p163 = por %p161, %p162
    %p164 = scmp.ne.s32.totalorder %s155, %s156
    %p165 = scmp.eq.s32.totalorder %s19, 0
    %p166 = por %p164, %p165
    %p167 = scmp.ne.s32.totalorder %s155, %s156
    %p168 = scmp.eq.s32.totalorder %s20, 1
    %p169 = por %p167, %p168
    %p171 = scmp.ne.s32.totalorder %s156, %s170
    %p172 = scmp.eq.s32.totalorder %s20, 0
    %p173 = por %p171, %p172
    %s175 = sadd.s32 %s174, 1
    %p178 = scmp.eq.s32.totalorder %s14, 1
    %p179 = scmp.ne.s32.totalorder %s174, %s176
    %p180 = scmp.eq.s32.totalorder %s14, 0
    %p181 = por %p179, %p180
    %p182 = scmp.ne.s32.totalorder %s174, %s176
    %p183 = scmp.eq.s32.totalorder %s19, 1
    %p184 = por %p182, %p183
    %p185 = scmp.ne.s32.totalorder %s176, %s177
    %p186 = scmp.eq.s32.totalorder %s19, 0
    %p187 = por %p185, %p186
    %p188 = scmp.ne.s32.totalorder %s176, %s177
    %p189 = scmp.eq.s32.totalorder %s20, 1
    %p190 = por %p188, %p189
    %p192 = scmp.ne.s32.totalorder %s177, %s191
    %p193 = scmp.eq.s32.totalorder %s20, 0
    %p194 = por %p192, %p193
    %s195 = ssub.s32 %s14, %s21
    %p196 = scmp.eq.s32.totalorder %s195, 0
    %s198 = sadd.s32 %s197, 1
    %s199 = scalar_select %p196, %s197, %s198
    %p202 = pneg %p196
    %p203 = scmp.eq.s32.totalorder %s14, 1
    %p204 = por %p202, %p203
    %p205 = scmp.ne.s32.totalorder %s197, %s200
    %p206 = scmp.eq.s32.totalorder %s14, 0
    %p207 = por %p205, %p206
    %p208 = scmp.ne.s32.totalorder %s197, %s200
    %p209 = scmp.eq.s32.totalorder %s19, 1
    %p210 = por %p208, %p209
    %p211 = scmp.ne.s32.totalorder %s200, %s201
    %p212 = scmp.eq.s32.totalorder %s19, 0
    %p213 = por %p211, %p212
    %p214 = scmp.ne.s32.totalorder %s200, %s201
    %p215 = scmp.eq.s32.totalorder %s20, 1
    %p216 = por %p214, %p215
    %p218 = scmp.ne.s32.totalorder %s201, %s217
    %p219 = scmp.eq.s32.totalorder %s20, 0
    %p220 = por %p218, %p219
    %p221 = scmp.le.s32.totalorder 1, %s14
    %p222 = scmp.lt.s32.totalorder %s14, 3
    %p223 = pnand %p221, %p222
    %p224 = pneg %p223
    // Predicated region
    $region9: #{_lambda_.1} parent=5 // pred_check
      _
    $region10: #{_lambda_.1} parent=5 // pred_check_branch
      %226 = sbr.rel (%p223) target = $region12
    $region11: #{_lambda_.1} parent=5 // pred_region
      %s227 = ssub.s32 %s14, 1
      // Predicated region
      $region13: #{_lambda_.1} parent=11 // pred_check
        %p228 = pneg %p61
      $region14: #{_lambda_.1} parent=11 // pred_check_branch
        %230 = sbr.rel (%p228) target = $region16
      $region15: #{_lambda_.1} parent=11 // pred_region
        _
      $region16: #{_lambda_.1} parent=11 // pred_fallthru
        _
      // Predicated region
      $region17: #{_lambda_.1} parent=11 // pred_check
        %p231 = pneg %p82
      $region18: #{_lambda_.1} parent=11 // pred_check_branch
        %233 = sbr.rel (%p231) target = $region20
      $region19: #{_lambda_.1} parent=11 // pred_region
        _
      $region20: #{_lambda_.1} parent=11 // pred_fallthru
        _
      // Predicated region
      $region21: #{_lambda_.1} parent=11 // pred_check
        %p234 = pneg %p103
      $region22: #{_lambda_.1} parent=11 // pred_check_branch
        %236 = sbr.rel (%p234) target = $region24
      $region23: #{_lambda_.1} parent=11 // pred_region
        _
      $region24: #{_lambda_.1} parent=11 // pred_fallthru
        _
      // Predicated region
      $region25: #{_lambda_.1} parent=11 // pred_check
        %p237 = pneg %p124
      $region26: #{_lambda_.1} parent=11 // pred_check_branch
        %239 = sbr.rel (%p237) target = $region28
      $region27: #{_lambda_.1} parent=11 // pred_region
        _
      $region28: #{_lambda_.1} parent=11 // pred_fallthru
        _
      // Predicated region
      $region29: #{_lambda_.1} parent=11 // pred_check
        %p240 = pneg %p145
      $region30: #{_lambda_.1} parent=11 // pred_check_branch
        %242 = sbr.rel (%p240) target = $region32
      $region31: #{_lambda_.1} parent=11 // pred_region
        _
      $region32: #{_lambda_.1} parent=11 // pred_fallthru
        _
      // Predicated region
      $region33: #{_lambda_.1} parent=11 // pred_check
        %p243 = pneg %p166
      $region34: #{_lambda_.1} parent=11 // pred_check_branch
        %245 = sbr.rel (%p243) target = $region36
      $region35: #{_lambda_.1} parent=11 // pred_region
        _
      $region36: #{_lambda_.1} parent=11 // pred_fallthru
        _
      // Predicated region
      $region37: #{_lambda_.1} parent=11 // pred_check
        %p246 = pneg %p187
      $region38: #{_lambda_.1} parent=11 // pred_check_branch
        %248 = sbr.rel (%p246) target = $region40
      $region39: #{_lambda_.1} parent=11 // pred_region
        _
      $region40: #{_lambda_.1} parent=11 // pred_fallthru
        _
    $region12: #{_lambda_.1} parent=5 // pred_fallthru
      _
    %p249 = scmp.lt.s32.totalorder %s14, 2
    // Predicated region
    $region41: #{_lambda_.1} parent=5 // pred_check
      %p250 = pneg %p249
    $region42: #{_lambda_.1} parent=5 // pred_check_branch
      %252 = sbr.rel (%p250) target = $region44
    $region43: #{_lambda_.1} parent=5 // pred_region
      // Predicated region
      $region45: #{_lambda_.1} parent=43 // pred_check
        %p253 = pneg %p34
      $region46: #{_lambda_.1} parent=43 // pred_check_branch
        %255 = sbr.rel (%p253) target = $region48
      $region47: #{_lambda_.1} parent=43 // pred_region
        %p256 = scmp.lt.s32.totalorder %s14, 1
        %s257 = scalar_select %p256, %s14, 1
        %s258 = smul.addr %s257, 72
        %s259 = smul.addr %s258, 8
        %s260 = scalar_lea.vmem %s0, %s259
      $region48: #{_lambda_.1} parent=43 // pred_fallthru
        _
    $region44: #{_lambda_.1} parent=5 // pred_fallthru
      _
    %p261 = scmp.le.s32.totalorder 1, %s14
    %p262 = scmp.lt.s32.totalorder %s14, 3
    %p263 = pnand %p261, %p262
    %p264 = pneg %p263
    // Predicated region
    $region49: #{_lambda_.1} parent=5 // pred_check
      _
    $region50: #{_lambda_.1} parent=5 // pred_check_branch
      %266 = sbr.rel (%p263) target = $region52
    $region51: #{_lambda_.1} parent=5 // pred_region
      %s267 = ssub.s32 %s14, 1
      %p268 = scmp.lt.s32.totalorder %s19, 1
      %s269 = scalar_select %p268, %s19, 1
      %s270 = smul.addr %s269, 72
      %s271 = smul.addr %s270, 8
      %s272 = scalar_lea.vmem %s0, %s271
      %p273 = pneg %p40
      %p274 = pneg %p37
      %p275 = pneg %p61
      %p276 = pneg %p58
      %p277 = pneg %p82
      %p278 = pneg %p79
      %p279 = pneg %p103
      %p280 = pneg %p100
      %p281 = pneg %p124
      %p282 = pneg %p121
      %p283 = pneg %p145
      %p284 = pneg %p142
      %p285 = pneg %p166
      %p286 = pneg %p163
      %p287 = pneg %p187
      %p288 = pneg %p184
      %p289 = pneg %p213
      %p290 = pneg %p210
      %p291 = scmp.lt.s32.totalorder %s19, 1
      %s292 = scalar_select %p291, %s19, 1
      %s293 = smul.addr %s292, 8
      %s294 = smul.addr %s293, 8
      %s295 = scalar_lea.vmem %s8, %s294
      %p296 = scmp.lt.s32.totalorder %s19, 1
      %s297 = scalar_select %p296, %s19, 1
      %s298 = smul.addr %s297, 72
      %s299 = smul.addr %s298, 8
      %s300 = scalar_lea.vmem %s0, %s299
      %p301 = scmp.lt.s32.totalorder %s19, 1
      %s302 = scalar_select %p301, %s19, 1
      %s303 = smul.addr %s302, 8
      %s304 = smul.addr %s303, 8
      %s305 = scalar_lea.vmem %s8, %s304
      %v306 = vld [vmem:[%s4] sm:$0x1]
      %v307 = vld [vmem:[%s5] sm:$0x1]
      %s308 = scalar_lea.vmem %s300, 16
      %v309 = vld [vmem:[%s308 + $0x1] sm:$0xff]
      %v310 = vld [vmem:[%s308 + $0x11] sm:$0xff]
      %v311 = vld [vmem:[%s308 + $0x21] sm:$0xff]
      %v312 = vld [vmem:[%s308 + $0x31] sm:$0xff]
      %v313 = vld [vmem:[%s308 + $0x41] sm:$0xff]
      %v314 = vld [vmem:[%s308 + $0x51] sm:$0xff]
      %v315 = vld [vmem:[%s308 + $0x61] sm:$0xff]
      %v316 = vld [vmem:[%s308 + $0x71] sm:$0xff]
      %v318 = vperm.slane %v306, 0
      %v320 = vmul.f32 %v309, %v318
      %v321 = vmul.f32 %v310, %v318
      %v322 = vmul.f32 %v311, %v318
      %v323 = vmul.f32 %v312, %v318
      %v324 = vmul.f32 %v313, %v318
      %v325 = vmul.f32 %v314, %v318
      %v326 = vmul.f32 %v315, %v318
      %v327 = vmul.f32 %v316, %v318
      %v329 = vperm.slane %v307, 0
      %v331 = vadd.f32 %v320, %v329
      %v332 = vadd.f32 %v321, %v329
      %v333 = vadd.f32 %v322, %v329
      %v334 = vadd.f32 %v323, %v329
      %v335 = vadd.f32 %v324, %v329
      %v336 = vadd.f32 %v325, %v329
      %v337 = vadd.f32 %v326, %v329
      %v338 = vadd.f32 %v327, %v329
      %v339 = vmax.f32 %v331, 0.0
      %v340 = vmax.f32 %v332, 0.0
      %v341 = vmax.f32 %v333, 0.0
      %v342 = vmax.f32 %v334, 0.0
      %v343 = vmax.f32 %v335, 0.0
      %v344 = vmax.f32 %v336, 0.0
      %v345 = vmax.f32 %v337, 0.0
      %v346 = vmax.f32 %v338, 0.0
      %v355 = vrot.slane %v339, 7
      %v356 = vrot.slane %v340, 7
      %v357 = vrot.slane %v341, 7
      %v358 = vrot.slane %v342, 7
      %v359 = vrot.slane %v343, 7
      %v360 = vrot.slane %v344, 7
      %v361 = vrot.slane %v345, 7
      %v362 = vrot.slane %v346, 7
      %vm371 = vcmask 1040384
      %v372 = vsel %vm371, 0.0, %v355
      %v373 = vsel %vm371, 0.0, %v356
      %v374 = vsel %vm371, 0.0, %v357
      %v375 = vsel %vm371, 0.0, %v358
      %v376 = vsel %vm371, 0.0, %v359
      %v377 = vsel %vm371, 0.0, %v360
      %v378 = vsel %vm371, 0.0, %v361
      %v379 = vsel %vm371, 0.0, %v362
      %380 = vst [vmem:[#allocation2] sm:$0xff] 0.0
      %381 = vst [vmem:[#allocation2 + $0x8] sm:$0x1] 0.0
      %s382 = scalar_lea.vmem [#allocation2], 16
      %383 = vst [vmem:[%s382] sm:$0xff] %v372
      %384 = vst [vmem:[%s382 + $0x8] sm:$0x1] %v355
      %385 = vst [vmem:[%s382 + $0x10] sm:$0xff] %v373
      %386 = vst [vmem:[%s382 + $0x18] sm:$0x1] %v356
      %387 = vst [vmem:[%s382 + $0x20] sm:$0xff] %v374
      %388 = vst [vmem:[%s382 + $0x28] sm:$0x1] %v357
      %389 = vst [vmem:[%s382 + $0x30] sm:$0xff] %v375
      %390 = vst [vmem:[%s382 + $0x38] sm:$0x1] %v358
      %391 = vst [vmem:[%s382 + $0x40] sm:$0xff] %v376
      %392 = vst [vmem:[%s382 + $0x48] sm:$0x1] %v359
      %393 = vst [vmem:[%s382 + $0x50] sm:$0xff] %v377
      %394 = vst [vmem:[%s382 + $0x58] sm:$0x1] %v360
      %395 = vst [vmem:[%s382 + $0x60] sm:$0xff] %v378
      %396 = vst [vmem:[%s382 + $0x68] sm:$0x1] %v361
      %397 = vst [vmem:[%s382 + $0x70] sm:$0xff] %v379
      %398 = vst [vmem:[%s382 + $0x78] sm:$0x1] %v362
      %s399 = scalar_lea.vmem %s300, 160
      %v400 = vld [vmem:[%s399] sm:$0xff]
      %v401 = vld [vmem:[%s399 + $0x10] sm:$0xff]
      %v402 = vld [vmem:[%s399 + $0x20] sm:$0xff]
      %v403 = vld [vmem:[%s399 + $0x30] sm:$0xff]
      %v404 = vld [vmem:[%s399 + $0x40] sm:$0xff]
      %v405 = vld [vmem:[%s399 + $0x50] sm:$0xff]
      %v406 = vld [vmem:[%s399 + $0x60] sm:$0xff]
      %v407 = vld [vmem:[%s399 + $0x70] sm:$0xff]
      %v408 = vmul.f32 %v400, %v318
      %v409 = vmul.f32 %v401, %v318
      %v410 = vmul.f32 %v402, %v318
      %v411 = vmul.f32 %v403, %v318
      %v412 = vmul.f32 %v404, %v318
      %v413 = vmul.f32 %v405, %v318
      %v414 = vmul.f32 %v406, %v318
      %v415 = vmul.f32 %v407, %v318
      %v416 = vadd.f32 %v408, %v329
      %v417 = vadd.f32 %v409, %v329
      %v418 = vadd.f32 %v410, %v329
      %v419 = vadd.f32 %v411, %v329
      %v420 = vadd.f32 %v412, %v329
      %v421 = vadd.f32 %v413, %v329
      %v422 = vadd.f32 %v414, %v329
      %v423 = vadd.f32 %v415, %v329
      %v424 = vmax.f32 %v416, 0.0
      %v425 = vmax.f32 %v417, 0.0
      %v426 = vmax.f32 %v418, 0.0
      %v427 = vmax.f32 %v419, 0.0
      %v428 = vmax.f32 %v420, 0.0
      %v429 = vmax.f32 %v421, 0.0
      %v430 = vmax.f32 %v422, 0.0
      %v431 = vmax.f32 %v423, 0.0
      %s432 = scalar_lea.vmem [#allocation2], 144
      %433 = vst [vmem:[%s432] sm:$0xff] 0.0
      %434 = vst [vmem:[%s432 + $0x8] sm:$0x1] 0.0
      %s435 = scalar_lea.vmem [#allocation2], 160
      %436 = vst [vmem:[%s435] sm:$0xff] %v424
      %437 = vst [vmem:[%s435 + $0x8] sm:$0x1] 0.0
      %438 = vst [vmem:[%s435 + $0x10] sm:$0xff] %v425
      %439 = vst [vmem:[%s435 + $0x18] sm:$0x1] 0.0
      %440 = vst [vmem:[%s435 + $0x20] sm:$0xff] %v426
      %441 = vst [vmem:[%s435 + $0x28] sm:$0x1] 0.0
      %442 = vst [vmem:[%s435 + $0x30] sm:$0xff] %v427
      %443 = vst [vmem:[%s435 + $0x38] sm:$0x1] 0.0
      %444 = vst [vmem:[%s435 + $0x40] sm:$0xff] %v428
      %445 = vst [vmem:[%s435 + $0x48] sm:$0x1] 0.0
      %446 = vst [vmem:[%s435 + $0x50] sm:$0xff] %v429
      %447 = vst [vmem:[%s435 + $0x58] sm:$0x1] 0.0
      %448 = vst [vmem:[%s435 + $0x60] sm:$0xff] %v430
      %449 = vst [vmem:[%s435 + $0x68] sm:$0x1] 0.0
      %450 = vst [vmem:[%s435 + $0x70] sm:$0xff] %v431
      %451 = vst [vmem:[%s435 + $0x78] sm:$0x1] 0.0
      %s452 = scalar_lea.vmem %s300, 288
      %v453 = vld [vmem:[%s452 + $0x1] sm:$0xff]
      %v454 = vld [vmem:[%s452 + $0x11] sm:$0xff]
      %v455 = vld [vmem:[%s452 + $0x21] sm:$0xff]
      %v456 = vld [vmem:[%s452 + $0x31] sm:$0xff]
      %v457 = vld [vmem:[%s452 + $0x41] sm:$0xff]
      %v458 = vld [vmem:[%s452 + $0x51] sm:$0xff]
      %v459 = vld [vmem:[%s452 + $0x61] sm:$0xff]
      %v460 = vld [vmem:[%s452 + $0x71] sm:$0xff]
      %v461 = vmul.f32 %v453, %v318
      %v462 = vmul.f32 %v454, %v318
      %v463 = vmul.f32 %v455, %v318
      %v464 = vmul.f32 %v456, %v318
      %v465 = vmul.f32 %v457, %v318
      %v466 = vmul.f32 %v458, %v318
      %v467 = vmul.f32 %v459, %v318
      %v468 = vmul.f32 %v460, %v318
      %v469 = vadd.f32 %v461, %v329
      %v470 = vadd.f32 %v462, %v329
      %v471 = vadd.f32 %v463, %v329
      %v472 = vadd.f32 %v464, %v329
      %v473 = vadd.f32 %v465, %v329
      %v474 = vadd.f32 %v466, %v329
      %v475 = vadd.f32 %v467, %v329
      %v476 = vadd.f32 %v468, %v329
      %v477 = vmax.f32 %v469, 0.0
      %v478 = vmax.f32 %v470, 0.0
      %v479 = vmax.f32 %v471, 0.0
      %v480 = vmax.f32 %v472, 0.0
      %v481 = vmax.f32 %v473, 0.0
      %v482 = vmax.f32 %v474, 0.0
      %v483 = vmax.f32 %v475, 0.0
      %v484 = vmax.f32 %v476, 0.0
      %v493 = vrot.slane %v477, 7
      %v494 = vrot.slane %v478, 7
      %v495 = vrot.slane %v479, 7
      %v496 = vrot.slane %v480, 7
      %v497 = vrot.slane %v481, 7
      %v498 = vrot.slane %v482, 7
      %v499 = vrot.slane %v483, 7
      %v500 = vrot.slane %v484, 7
      %v509 = vsel %vm371, 0.0, %v493
      %v510 = vsel %vm371, 0.0, %v494
      %v511 = vsel %vm371, 0.0, %v495
      %v512 = vsel %vm371, 0.0, %v496
      %v513 = vsel %vm371, 0.0, %v497
      %v514 = vsel %vm371, 0.0, %v498
      %v515 = vsel %vm371, 0.0, %v499
      %v516 = vsel %vm371, 0.0, %v500
      %s517 = scalar_lea.vmem [#allocation2], 416
      %518 = vst [vmem:[%s517] sm:$0xff] 0.0
      %519 = vst [vmem:[%s517 + $0x8] sm:$0x1] 0.0
      %s520 = scalar_lea.vmem [#allocation2], 288
      %521 = vst [vmem:[%s520] sm:$0xff] %v509
      %522 = vst [vmem:[%s520 + $0x8] sm:$0x1] %v493
      %523 = vst [vmem:[%s520 + $0x10] sm:$0xff] %v510
      %524 = vst [vmem:[%s520 + $0x18] sm:$0x1] %v494
      %525 = vst [vmem:[%s520 + $0x20] sm:$0xff] %v511
      %526 = vst [vmem:[%s520 + $0x28] sm:$0x1] %v495
      %527 = vst [vmem:[%s520 + $0x30] sm:$0xff] %v512
      %528 = vst [vmem:[%s520 + $0x38] sm:$0x1] %v496
      %529 = vst [vmem:[%s520 + $0x40] sm:$0xff] %v513
      %530 = vst [vmem:[%s520 + $0x48] sm:$0x1] %v497
      %531 = vst [vmem:[%s520 + $0x50] sm:$0xff] %v514
      %532 = vst [vmem:[%s520 + $0x58] sm:$0x1] %v498
      %533 = vst [vmem:[%s520 + $0x60] sm:$0xff] %v515
      %534 = vst [vmem:[%s520 + $0x68] sm:$0x1] %v499
      %535 = vst [vmem:[%s520 + $0x70] sm:$0xff] %v516
      %536 = vst [vmem:[%s520 + $0x78] sm:$0x1] %v500
      %s537 = scalar_lea.vmem %s300, 432
      %v538 = vld [vmem:[%s537] sm:$0xff]
      %v539 = vld [vmem:[%s537 + $0x10] sm:$0xff]
      %v540 = vld [vmem:[%s537 + $0x20] sm:$0xff]
      %v541 = vld [vmem:[%s537 + $0x30] sm:$0xff]
      %v542 = vld [vmem:[%s537 + $0x40] sm:$0xff]
      %v543 = vld [vmem:[%s537 + $0x50] sm:$0xff]
      %v544 = vld [vmem:[%s537 + $0x60] sm:$0xff]
      %v545 = vld [vmem:[%s537 + $0x70] sm:$0xff]
      %v546 = vmul.f32 %v538, %v318
      %v547 = vmul.f32 %v539, %v318
      %v548 = vmul.f32 %v540, %v318
      %v549 = vmul.f32 %v541, %v318
      %v550 = vmul.f32 %v542, %v318
      %v551 = vmul.f32 %v543, %v318
      %v552 = vmul.f32 %v544, %v318
      %v553 = vmul.f32 %v545, %v318
      %v554 = vadd.f32 %v546, %v329
      %v555 = vadd.f32 %v547, %v329
      %v556 = vadd.f32 %v548, %v329
      %v557 = vadd.f32 %v549, %v329
      %v558 = vadd.f32 %v550, %v329
      %v559 = vadd.f32 %v551, %v329
      %v560 = vadd.f32 %v552, %v329
      %v561 = vadd.f32 %v553, %v329
      %v562 = vmax.f32 %v554, 0.0
      %v563 = vmax.f32 %v555, 0.0
      %v564 = vmax.f32 %v556, 0.0
      %v565 = vmax.f32 %v557, 0.0
      %v566 = vmax.f32 %v558, 0.0
      %v567 = vmax.f32 %v559, 0.0
      %v568 = vmax.f32 %v560, 0.0
      %v569 = vmax.f32 %v561, 0.0
      %s570 = scalar_lea.vmem [#allocation2], 560
      %571 = vst [vmem:[%s570] sm:$0xff] 0.0
      %572 = vst [vmem:[%s570 + $0x8] sm:$0x1] 0.0
      %s573 = scalar_lea.vmem [#allocation2], 432
      %574 = vst [vmem:[%s573] sm:$0xff] %v562
      %575 = vst [vmem:[%s573 + $0x8] sm:$0x1] 0.0
      %576 = vst [vmem:[%s573 + $0x10] sm:$0xff] %v563
      %577 = vst [vmem:[%s573 + $0x18] sm:$0x1] 0.0
      %578 = vst [vmem:[%s573 + $0x20] sm:$0xff] %v564
      %579 = vst [vmem:[%s573 + $0x28] sm:$0x1] 0.0
      %580 = vst [vmem:[%s573 + $0x30] sm:$0xff] %v565
      %581 = vst [vmem:[%s573 + $0x38] sm:$0x1] 0.0
      %582 = vst [vmem:[%s573 + $0x40] sm:$0xff] %v566
      %583 = vst [vmem:[%s573 + $0x48] sm:$0x1] 0.0
      %584 = vst [vmem:[%s573 + $0x50] sm:$0xff] %v567
      %585 = vst [vmem:[%s573 + $0x58] sm:$0x1] 0.0
      %586 = vst [vmem:[%s573 + $0x60] sm:$0xff] %v568
      %587 = vst [vmem:[%s573 + $0x68] sm:$0x1] 0.0
      %588 = vst [vmem:[%s573 + $0x70] sm:$0xff] %v569
      %589 = vst [vmem:[%s573 + $0x78] sm:$0x1] 0.0
      %v590 = vld [vmem:[#allocation2] sm:$0xff]
      %v591 = vld [vmem:[#allocation2 + $0x10] sm:$0xff]
      %v592 = vld [vmem:[#allocation2 + $0x20] sm:$0xff]
      %v593 = vld [vmem:[#allocation2 + $0x30] sm:$0xff]
      %v594 = vld [vmem:[#allocation2 + $0x40] sm:$0xff]
      %v595 = vld [vmem:[#allocation2 + $0x50] sm:$0xff]
      %v596 = vld [vmem:[#allocation2 + $0x60] sm:$0xff]
      %v597 = vld [vmem:[#allocation2 + $0x70] sm:$0xff]
      %v598 = vpack.c.bf16 %v590, %v590
      %v599 = vpack.c.bf16 %v591, %v591
      %v600 = vpack.c.bf16 %v592, %v592
      %v601 = vpack.c.bf16 %v593, %v593
      %v602 = vpack.c.bf16 %v594, %v594
      %v603 = vpack.c.bf16 %v595, %v595
      %v604 = vpack.c.bf16 %v596, %v596
      %v605 = vpack.c.bf16 %v597, %v597
      %606 = vst [vmem:[#allocation4] sm:$0xf] %v598
      %607 = vst [vmem:[#allocation4 + $0x24] sm:$0xf] %v599
      %608 = vst [vmem:[#allocation4 + $0x48] sm:$0xf] %v600
      %609 = vst [vmem:[#allocation4 + $0x6c] sm:$0xf] %v601
      %610 = vst [vmem:[#allocation4 + $0x90] sm:$0xf] %v602
      %611 = vst [vmem:[#allocation4 + $0xb4] sm:$0xf] %v603
      %612 = vst [vmem:[#allocation4 + $0xd8] sm:$0xf] %v604
      %613 = vst [vmem:[#allocation4 + $0xfc] sm:$0xf] %v605
      %v614 = vld [vmem:[%s432] sm:$0xff]
      %v615 = vld [vmem:[%s432 + $0x10] sm:$0xff]
      %v616 = vld [vmem:[%s432 + $0x20] sm:$0xff]
      %v617 = vld [vmem:[%s432 + $0x30] sm:$0xff]
      %v618 = vld [vmem:[%s432 + $0x40] sm:$0xff]
      %v619 = vld [vmem:[%s432 + $0x50] sm:$0xff]
      %v620 = vld [vmem:[%s432 + $0x60] sm:$0xff]
      %v621 = vld [vmem:[%s432 + $0x70] sm:$0xff]
      %v622 = vpack.c.bf16 %v614, %v614
      %v623 = vpack.c.bf16 %v615, %v615
      %v624 = vpack.c.bf16 %v616, %v616
      %v625 = vpack.c.bf16 %v617, %v617
      %v626 = vpack.c.bf16 %v618, %v618
      %v627 = vpack.c.bf16 %v619, %v619
      %v628 = vpack.c.bf16 %v620, %v620
      %v629 = vpack.c.bf16 %v621, %v621
      %630 = vst [vmem:[#allocation4 + $0x4] sm:$0xf] %v622
      %631 = vst [vmem:[#allocation4 + $0x28] sm:$0xf] %v623
      %632 = vst [vmem:[#allocation4 + $0x4c] sm:$0xf] %v624
      %633 = vst [vmem:[#allocation4 + $0x70] sm:$0xf] %v625
      %634 = vst [vmem:[#allocation4 + $0x94] sm:$0xf] %v626
      %635 = vst [vmem:[#allocation4 + $0xb8] sm:$0xf] %v627
      %636 = vst [vmem:[#allocation4 + $0xdc] sm:$0xf] %v628
      %637 = vst [vmem:[#allocation4 + $0x100] sm:$0xf] %v629
      %v638 = vld [vmem:[#allocation2 + $0x1] sm:$0xff]
      %v639 = vld [vmem:[#allocation2 + $0x11] sm:$0xff]
      %v640 = vld [vmem:[#allocation2 + $0x21] sm:$0xff]
      %v641 = vld [vmem:[#allocation2 + $0x31] sm:$0xff]
      %v642 = vld [vmem:[#allocation2 + $0x41] sm:$0xff]
      %v643 = vld [vmem:[#allocation2 + $0x51] sm:$0xff]
      %v644 = vld [vmem:[#allocation2 + $0x61] sm:$0xff]
      %v645 = vld [vmem:[#allocation2 + $0x71] sm:$0xff]
      %v646 = vpack.c.bf16 %v638, %v638
      %v647 = vpack.c.bf16 %v639, %v639
      %v648 = vpack.c.bf16 %v640, %v640
      %v649 = vpack.c.bf16 %v641, %v641
      %v650 = vpack.c.bf16 %v642, %v642
      %v651 = vpack.c.bf16 %v643, %v643
      %v652 = vpack.c.bf16 %v644, %v644
      %v653 = vpack.c.bf16 %v645, %v645
      %654 = vst [vmem:[#allocation4 + $0x8] sm:$0xf] %v646
      %655 = vst [vmem:[#allocation4 + $0x2c] sm:$0xf] %v647
      %656 = vst [vmem:[#allocation4 + $0x50] sm:$0xf] %v648
      %657 = vst [vmem:[#allocation4 + $0x74] sm:$0xf] %v649
      %658 = vst [vmem:[#allocation4 + $0x98] sm:$0xf] %v650
      %659 = vst [vmem:[#allocation4 + $0xbc] sm:$0xf] %v651
      %660 = vst [vmem:[#allocation4 + $0xe0] sm:$0xf] %v652
      %661 = vst [vmem:[#allocation4 + $0x104] sm:$0xf] %v653
      %v662 = vld [vmem:[%s520] sm:$0xff]
      %v663 = vld [vmem:[%s520 + $0x10] sm:$0xff]
      %v664 = vld [vmem:[%s520 + $0x20] sm:$0xff]
      %v665 = vld [vmem:[%s520 + $0x30] sm:$0xff]
      %v666 = vld [vmem:[%s520 + $0x40] sm:$0xff]
      %v667 = vld [vmem:[%s520 + $0x50] sm:$0xff]
      %v668 = vld [vmem:[%s520 + $0x60] sm:$0xff]
      %v669 = vld [vmem:[%s520 + $0x70] sm:$0xff]
      %v670 = vpack.c.bf16 %v662, %v662
      %v671 = vpack.c.bf16 %v663, %v663
      %v672 = vpack.c.bf16 %v664, %v664
      %v673 = vpack.c.bf16 %v665, %v665
      %v674 = vpack.c.bf16 %v666, %v666
      %v675 = vpack.c.bf16 %v667, %v667
      %v676 = vpack.c.bf16 %v668, %v668
      %v677 = vpack.c.bf16 %v669, %v669
      %678 = vst [vmem:[#allocation4 + $0xc] sm:$0xf] %v670
      %679 = vst [vmem:[#allocation4 + $0x30] sm:$0xf] %v671
      %680 = vst [vmem:[#allocation4 + $0x54] sm:$0xf] %v672
      %681 = vst [vmem:[#allocation4 + $0x78] sm:$0xf] %v673
      %682 = vst [vmem:[#allocation4 + $0x9c] sm:$0xf] %v674
      %683 = vst [vmem:[#allocation4 + $0xc0] sm:$0xf] %v675
      %684 = vst [vmem:[#allocation4 + $0xe4] sm:$0xf] %v676
      %685 = vst [vmem:[#allocation4 + $0x108] sm:$0xf] %v677
      %v686 = vld [vmem:[%s573] sm:$0xff]
      %v687 = vld [vmem:[%s573 + $0x10] sm:$0xff]
      %v688 = vld [vmem:[%s573 + $0x20] sm:$0xff]
      %v689 = vld [vmem:[%s573 + $0x30] sm:$0xff]
      %v690 = vld [vmem:[%s573 + $0x40] sm:$0xff]
      %v691 = vld [vmem:[%s573 + $0x50] sm:$0xff]
      %v692 = vld [vmem:[%s573 + $0x60] sm:$0xff]
      %v693 = vld [vmem:[%s573 + $0x70] sm:$0xff]
      %v694 = vpack.c.bf16 %v686, %v686
      %v695 = vpack.c.bf16 %v687, %v687
      %v696 = vpack.c.bf16 %v688, %v688
      %v697 = vpack.c.bf16 %v689, %v689
      %v698 = vpack.c.bf16 %v690, %v690
      %v699 = vpack.c.bf16 %v691, %v691
      %v700 = vpack.c.bf16 %v692, %v692
      %v701 = vpack.c.bf16 %v693, %v693
      %702 = vst [vmem:[#allocation4 + $0x10] sm:$0xf] %v694
      %703 = vst [vmem:[#allocation4 + $0x34] sm:$0xf] %v695
      %704 = vst [vmem:[#allocation4 + $0x58] sm:$0xf] %v696
      %705 = vst [vmem:[#allocation4 + $0x7c] sm:$0xf] %v697
      %706 = vst [vmem:[#allocation4 + $0xa0] sm:$0xf] %v698
      %707 = vst [vmem:[#allocation4 + $0xc4] sm:$0xf] %v699
      %708 = vst [vmem:[#allocation4 + $0xe8] sm:$0xf] %v700
      %709 = vst [vmem:[#allocation4 + $0x10c] sm:$0xf] %v701
      %v710 = vld [vmem:[%s520 + $0x1] sm:$0xff]
      %v711 = vld [vmem:[%s520 + $0x11] sm:$0xff]
      %v712 = vld [vmem:[%s520 + $0x21] sm:$0xff]
      %v713 = vld [vmem:[%s520 + $0x31] sm:$0xff]
      %v714 = vld [vmem:[%s520 + $0x41] sm:$0xff]
      %v715 = vld [vmem:[%s520 + $0x51] sm:$0xff]
      %v716 = vld [vmem:[%s520 + $0x61] sm:$0xff]
      %v717 = vld [vmem:[%s520 + $0x71] sm:$0xff]
      %v718 = vpack.c.bf16 %v710, %v710
      %v719 = vpack.c.bf16 %v711, %v711
      %v720 = vpack.c.bf16 %v712, %v712
      %v721 = vpack.c.bf16 %v713, %v713
      %v722 = vpack.c.bf16 %v714, %v714
      %v723 = vpack.c.bf16 %v715, %v715
      %v724 = vpack.c.bf16 %v716, %v716
      %v725 = vpack.c.bf16 %v717, %v717
      %726 = vst [vmem:[#allocation4 + $0x14] sm:$0xf] %v718
      %727 = vst [vmem:[#allocation4 + $0x38] sm:$0xf] %v719
      %728 = vst [vmem:[#allocation4 + $0x5c] sm:$0xf] %v720
      %729 = vst [vmem:[#allocation4 + $0x80] sm:$0xf] %v721
      %730 = vst [vmem:[#allocation4 + $0xa4] sm:$0xf] %v722
      %731 = vst [vmem:[#allocation4 + $0xc8] sm:$0xf] %v723
      %732 = vst [vmem:[#allocation4 + $0xec] sm:$0xf] %v724
      %733 = vst [vmem:[#allocation4 + $0x110] sm:$0xf] %v725
      %v734 = vld [vmem:[%s382] sm:$0xff]
      %v735 = vld [vmem:[%s382 + $0x10] sm:$0xff]
      %v736 = vld [vmem:[%s382 + $0x20] sm:$0xff]
      %v737 = vld [vmem:[%s382 + $0x30] sm:$0xff]
      %v738 = vld [vmem:[%s382 + $0x40] sm:$0xff]
      %v739 = vld [vmem:[%s382 + $0x50] sm:$0xff]
      %v740 = vld [vmem:[%s382 + $0x60] sm:$0xff]
      %v741 = vld [vmem:[%s382 + $0x70] sm:$0xff]
      %v742 = vpack.c.bf16 %v734, %v734
      %v743 = vpack.c.bf16 %v735, %v735
      %v744 = vpack.c.bf16 %v736, %v736
      %v745 = vpack.c.bf16 %v737, %v737
      %v746 = vpack.c.bf16 %v738, %v738
      %v747 = vpack.c.bf16 %v739, %v739
      %v748 = vpack.c.bf16 %v740, %v740
      %v749 = vpack.c.bf16 %v741, %v741
      %750 = vst [vmem:[#allocation4 + $0x18] sm:$0xf] %v742
      %751 = vst [vmem:[#allocation4 + $0x3c] sm:$0xf] %v743
      %752 = vst [vmem:[#allocation4 + $0x60] sm:$0xf] %v744
      %753 = vst [vmem:[#allocation4 + $0x84] sm:$0xf] %v745
      %754 = vst [vmem:[#allocation4 + $0xa8] sm:$0xf] %v746
      %755 = vst [vmem:[#allocation4 + $0xcc] sm:$0xf] %v747
      %756 = vst [vmem:[#allocation4 + $0xf0] sm:$0xf] %v748
      %757 = vst [vmem:[#allocation4 + $0x114] sm:$0xf] %v749
      %v758 = vld [vmem:[%s435] sm:$0xff]
      %v759 = vld [vmem:[%s435 + $0x10] sm:$0xff]
      %v760 = vld [vmem:[%s435 + $0x20] sm:$0xff]
      %v761 = vld [vmem:[%s435 + $0x30] sm:$0xff]
      %v762 = vld [vmem:[%s435 + $0x40] sm:$0xff]
      %v763 = vld [vmem:[%s435 + $0x50] sm:$0xff]
      %v764 = vld [vmem:[%s435 + $0x60] sm:$0xff]
      %v765 = vld [vmem:[%s435 + $0x70] sm:$0xff]
      %v766 = vpack.c.bf16 %v758, %v758
      %v767 = vpack.c.bf16 %v759, %v759
      %v768 = vpack.c.bf16 %v760, %v760
      %v769 = vpack.c.bf16 %v761, %v761
      %v770 = vpack.c.bf16 %v762, %v762
      %v771 = vpack.c.bf16 %v763, %v763
      %v772 = vpack.c.bf16 %v764, %v764
      %v773 = vpack.c.bf16 %v765, %v765
      %774 = vst [vmem:[#allocation4 + $0x1c] sm:$0xf] %v766
      %775 = vst [vmem:[#allocation4 + $0x40] sm:$0xf] %v767
      %776 = vst [vmem:[#allocation4 + $0x64] sm:$0xf] %v768
      %777 = vst [vmem:[#allocation4 + $0x88] sm:$0xf] %v769
      %778 = vst [vmem:[#allocation4 + $0xac] sm:$0xf] %v770
      %779 = vst [vmem:[#allocation4 + $0xd0] sm:$0xf] %v771
      %780 = vst [vmem:[#allocation4 + $0xf4] sm:$0xf] %v772
      %781 = vst [vmem:[#allocation4 + $0x118] sm:$0xf] %v773
      %v782 = vld [vmem:[%s382 + $0x1] sm:$0xff]
      %v783 = vld [vmem:[%s382 + $0x11] sm:$0xff]
      %v784 = vld [vmem:[%s382 + $0x21] sm:$0xff]
      %v785 = vld [vmem:[%s382 + $0x31] sm:$0xff]
      %v786 = vld [vmem:[%s382 + $0x41] sm:$0xff]
      %v787 = vld [vmem:[%s382 + $0x51] sm:$0xff]
      %v788 = vld [vmem:[%s382 + $0x61] sm:$0xff]
      %v789 = vld [vmem:[%s382 + $0x71] sm:$0xff]
      %v790 = vpack.c.bf16 %v782, %v782
      %v791 = vpack.c.bf16 %v783, %v783
      %v792 = vpack.c.bf16 %v784, %v784
      %v793 = vpack.c.bf16 %v785, %v785
      %v794 = vpack.c.bf16 %v786, %v786
      %v795 = vpack.c.bf16 %v787, %v787
      %v796 = vpack.c.bf16 %v788, %v788
      %v797 = vpack.c.bf16 %v789, %v789
      %798 = vst [vmem:[#allocation4 + $0x20] sm:$0xf] %v790
      %799 = vst [vmem:[#allocation4 + $0x44] sm:$0xf] %v791
      %800 = vst [vmem:[#allocation4 + $0x68] sm:$0xf] %v792
      %801 = vst [vmem:[#allocation4 + $0x8c] sm:$0xf] %v793
      %802 = vst [vmem:[#allocation4 + $0xb0] sm:$0xf] %v794
      %803 = vst [vmem:[#allocation4 + $0xd4] sm:$0xf] %v795
      %804 = vst [vmem:[#allocation4 + $0xf8] sm:$0xf] %v796
      %805 = vst [vmem:[#allocation4 + $0x11c] sm:$0xf] %v797
      %v806 = vld [vmem:[#allocation4] sm:$0xff]
      %v807 = vld [vmem:[#allocation4 + $0x8] sm:$0xff]
      %v808 = vld [vmem:[#allocation4 + $0x10] sm:$0xff]
      %v809 = vld [vmem:[#allocation4 + $0x18] sm:$0xff]
      %v810 = vld [vmem:[#allocation4 + $0x20] sm:$0xf]
      %v811 = vld [vmem:[#allocation4 + $0x24] sm:$0xff]
      %v812 = vld [vmem:[#allocation4 + $0x2c] sm:$0xff]
      %v813 = vld [vmem:[#allocation4 + $0x34] sm:$0xff]
      %v814 = vld [vmem:[#allocation4 + $0x3c] sm:$0xff]
      %v815 = vld [vmem:[#allocation4 + $0x44] sm:$0xf]
      %v816 = vld [vmem:[#allocation4 + $0x48] sm:$0xff]
      %v817 = vld [vmem:[#allocation4 + $0x50] sm:$0xff]
      %v818 = vld [vmem:[#allocation4 + $0x58] sm:$0xff]
      %v819 = vld [vmem:[#allocation4 + $0x60] sm:$0xff]
      %v820 = vld [vmem:[#allocation4 + $0x68] sm:$0xf]
      %v821 = vld [vmem:[#allocation4 + $0x6c] sm:$0xff]
      %v822 = vld [vmem:[#allocation4 + $0x74] sm:$0xff]
      %v823 = vld [vmem:[#allocation4 + $0x7c] sm:$0xff]
      %v824 = vld [vmem:[#allocation4 + $0x84] sm:$0xff]
      %v825 = vld [vmem:[#allocation4 + $0x8c] sm:$0xf]
      %v826 = vld [vmem:[#allocation4 + $0x90] sm:$0xff]
      %v827 = vld [vmem:[#allocation4 + $0x98] sm:$0xff]
      %v828 = vld [vmem:[#allocation4 + $0xa0] sm:$0xff]
      %v829 = vld [vmem:[#allocation4 + $0xa8] sm:$0xff]
      %v830 = vld [vmem:[#allocation4 + $0xb0] sm:$0xf]
      %v831 = vld [vmem:[#allocation4 + $0xb4] sm:$0xff]
      %v832 = vld [vmem:[#allocation4 + $0xbc] sm:$0xff]
      %v833 = vld [vmem:[#allocation4 + $0xc4] sm:$0xff]
      %v834 = vld [vmem:[#allocation4 + $0xcc] sm:$0xff]
      %v835 = vld [vmem:[#allocation4 + $0xd4] sm:$0xf]
      %v836 = vld [vmem:[#allocation4 + $0xd8] sm:$0xff]
      %v837 = vld [vmem:[#allocation4 + $0xe0] sm:$0xff]
      %v838 = vld [vmem:[#allocation4 + $0xe8] sm:$0xff]
      %v839 = vld [vmem:[#allocation4 + $0xf0] sm:$0xff]
      %v840 = vld [vmem:[#allocation4 + $0xf8] sm:$0xf]
      %v841 = vld [vmem:[#allocation4 + $0xfc] sm:$0xff]
      %v842 = vld [vmem:[#allocation4 + $0x104] sm:$0xff]
      %v843 = vld [vmem:[#allocation4 + $0x10c] sm:$0xff]
      %v844 = vld [vmem:[#allocation4 + $0x114] sm:$0xff]
      %v845 = vld [vmem:[#allocation4 + $0x11c] sm:$0xf]
      %v846 = vld [vmem:[%s1] sm:$0xf]
      %v847 = vld [vmem:[%s1 + $0x4] sm:$0xf]
      %v848 = vld [vmem:[%s1 + $0x8] sm:$0xf]
      %v849 = vld [vmem:[%s1 + $0xc] sm:$0xf]
      %v850 = vld [vmem:[%s1 + $0x10] sm:$0xf]
      %v851 = vld [vmem:[%s1 + $0x14] sm:$0xf]
      %v852 = vld [vmem:[%s1 + $0x18] sm:$0xf]
      %v853 = vld [vmem:[%s1 + $0x1c] sm:$0xf]
      %v854 = vld [vmem:[%s1 + $0x20] sm:$0xf]
      %v855 = vld [vmem:[%s1 + $0x24] sm:$0xf]
      %v856 = vld [vmem:[%s1 + $0x28] sm:$0xf]
      %v857 = vld [vmem:[%s1 + $0x2c] sm:$0xf]
      %v858 = vld [vmem:[%s1 + $0x30] sm:$0xf]
      %v859 = vld [vmem:[%s1 + $0x34] sm:$0xf]
      %v860 = vld [vmem:[%s1 + $0x38] sm:$0xf]
      %v861 = vld [vmem:[%s1 + $0x3c] sm:$0xf]
      %v862 = vld [vmem:[%s1 + $0x40] sm:$0xf]
      %v863 = vld [vmem:[%s1 + $0x44] sm:$0xf]
      %v864 = vld [vmem:[%s1 + $0x48] sm:$0xf]
      %v865 = vld [vmem:[%s1 + $0x4c] sm:$0xf]
      %v866 = vld [vmem:[%s1 + $0x50] sm:$0xf]
      %v867 = vld [vmem:[%s1 + $0x54] sm:$0xf]
      %v868 = vld [vmem:[%s1 + $0x58] sm:$0xf]
      %v869 = vld [vmem:[%s1 + $0x5c] sm:$0xf]
      %v870 = vld [vmem:[%s1 + $0x60] sm:$0xf]
      %v871 = vld [vmem:[%s1 + $0x64] sm:$0xf]
      %v872 = vld [vmem:[%s1 + $0x68] sm:$0xf]
      %v873 = vld [vmem:[%s1 + $0x6c] sm:$0xf]
      %v874 = vld [vmem:[%s1 + $0x70] sm:$0xf]
      %v875 = vld [vmem:[%s1 + $0x74] sm:$0xf]
      %v876 = vld [vmem:[%s1 + $0x78] sm:$0xf]
      %v877 = vld [vmem:[%s1 + $0x7c] sm:$0xf]
      %v878 = vld [vmem:[%s1 + $0x80] sm:$0xf]
      %v879 = vld [vmem:[%s1 + $0x84] sm:$0xf]
      %v880 = vld [vmem:[%s1 + $0x88] sm:$0xf]
      %v881 = vld [vmem:[%s1 + $0x8c] sm:$0xf]
      %v882 = vld [vmem:[%s1 + $0x90] sm:$0xf]
      %v883 = vld [vmem:[%s1 + $0x94] sm:$0xf]
      %v884 = vld [vmem:[%s1 + $0x98] sm:$0xf]
      %v885 = vld [vmem:[%s1 + $0x9c] sm:$0xf]
      %v886 = vld [vmem:[%s1 + $0xa0] sm:$0xf]
      %v887 = vld [vmem:[%s1 + $0xa4] sm:$0xf]
      %v888 = vld [vmem:[%s1 + $0xa8] sm:$0xf]
      %v889 = vld [vmem:[%s1 + $0xac] sm:$0xf]
      %v890 = vld [vmem:[%s1 + $0xb0] sm:$0xf]
      %v891 = vld [vmem:[%s1 + $0xb4] sm:$0xf]
      %v892 = vld [vmem:[%s1 + $0xb8] sm:$0xf]
      %v893 = vld [vmem:[%s1 + $0xbc] sm:$0xf]
      %v894 = vld [vmem:[%s1 + $0xc0] sm:$0xf]
      %v895 = vld [vmem:[%s1 + $0xc4] sm:$0xf]
      %v896 = vld [vmem:[%s1 + $0xc8] sm:$0xf]
      %v897 = vld [vmem:[%s1 + $0xcc] sm:$0xf]
      %v898 = vld [vmem:[%s1 + $0xd0] sm:$0xf]
      %v899 = vld [vmem:[%s1 + $0xd4] sm:$0xf]
      %v900 = vld [vmem:[%s1 + $0xd8] sm:$0xf]
      %v901 = vld [vmem:[%s1 + $0xdc] sm:$0xf]
      %v902 = vld [vmem:[%s1 + $0xe0] sm:$0xf]
      %v903 = vld [vmem:[%s1 + $0xe4] sm:$0xf]
      %v904 = vld [vmem:[%s1 + $0xe8] sm:$0xf]
      %v905 = vld [vmem:[%s1 + $0xec] sm:$0xf]
      %v906 = vld [vmem:[%s1 + $0xf0] sm:$0xf]
      %v907 = vld [vmem:[%s1 + $0xf4] sm:$0xf]
      %v908 = vld [vmem:[%s1 + $0xf8] sm:$0xf]
      %v909 = vld [vmem:[%s1 + $0xfc] sm:$0xf]
      %v910 = vld [vmem:[%s1 + $0x100] sm:$0xf]
      %v911 = vld [vmem:[%s1 + $0x104] sm:$0xf]
      %v912 = vld [vmem:[%s1 + $0x108] sm:$0xf]
      %v913 = vld [vmem:[%s1 + $0x10c] sm:$0xf]
      %v914 = vld [vmem:[%s1 + $0x110] sm:$0xf]
      %v915 = vld [vmem:[%s1 + $0x114] sm:$0xf]
      %v916 = vld [vmem:[%s1 + $0x118] sm:$0xf]
      %v917 = vld [vmem:[%s1 + $0x11c] sm:$0xf]
      %v918 = vld [vmem:[%s1 + $0x120] sm:$0xf]
      %v919 = vld [vmem:[%s1 + $0x124] sm:$0xf]
      %v920 = vld [vmem:[%s1 + $0x128] sm:$0xf]
      %v921 = vld [vmem:[%s1 + $0x12c] sm:$0xf]
      %v922 = vld [vmem:[%s1 + $0x130] sm:$0xf]
      %v923 = vld [vmem:[%s1 + $0x134] sm:$0xf]
      %v924 = vld [vmem:[%s1 + $0x138] sm:$0xf]
      %v925 = vld [vmem:[%s1 + $0x13c] sm:$0xf]
      %v926 = vld [vmem:[%s1 + $0x140] sm:$0xf]
      %v927 = vld [vmem:[%s1 + $0x144] sm:$0xf]
      %v928 = vld [vmem:[%s1 + $0x148] sm:$0xf]
      %v929 = vld [vmem:[%s1 + $0x14c] sm:$0xf]
      %v930 = vld [vmem:[%s1 + $0x150] sm:$0xf]
      %v931 = vld [vmem:[%s1 + $0x154] sm:$0xf]
      %v932 = vld [vmem:[%s1 + $0x158] sm:$0xf]
      %v933 = vld [vmem:[%s1 + $0x15c] sm:$0xf]
      %v934 = vld [vmem:[%s1 + $0x160] sm:$0xf]
      %v935 = vld [vmem:[%s1 + $0x164] sm:$0xf]
      %v936 = vld [vmem:[%s1 + $0x168] sm:$0xf]
      %v937 = vld [vmem:[%s1 + $0x16c] sm:$0xf]
      %v938 = vld [vmem:[%s1 + $0x170] sm:$0xf]
      %v939 = vld [vmem:[%s1 + $0x174] sm:$0xf]
      %v940 = vld [vmem:[%s1 + $0x178] sm:$0xf]
      %v941 = vld [vmem:[%s1 + $0x17c] sm:$0xf]
      %v942 = vld [vmem:[%s1 + $0x180] sm:$0xf]
      %v943 = vld [vmem:[%s1 + $0x184] sm:$0xf]
      %v944 = vld [vmem:[%s1 + $0x188] sm:$0xf]
      %v945 = vld [vmem:[%s1 + $0x18c] sm:$0xf]
      %v946 = vld [vmem:[%s1 + $0x190] sm:$0xf]
      %v947 = vld [vmem:[%s1 + $0x194] sm:$0xf]
      %v948 = vld [vmem:[%s1 + $0x198] sm:$0xf]
      %v949 = vld [vmem:[%s1 + $0x19c] sm:$0xf]
      %v950 = vld [vmem:[%s1 + $0x1a0] sm:$0xf]
      %v951 = vld [vmem:[%s1 + $0x1a4] sm:$0xf]
      %v952 = vld [vmem:[%s1 + $0x1a8] sm:$0xf]
      %v953 = vld [vmem:[%s1 + $0x1ac] sm:$0xf]
      %v954 = vld [vmem:[%s1 + $0x1b0] sm:$0xf]
      %v955 = vld [vmem:[%s1 + $0x1b4] sm:$0xf]
      %v956 = vld [vmem:[%s1 + $0x1b8] sm:$0xf]
      %v957 = vld [vmem:[%s1 + $0x1bc] sm:$0xf]
      %v958 = vld [vmem:[%s1 + $0x1c0] sm:$0xf]
      %v959 = vld [vmem:[%s1 + $0x1c4] sm:$0xf]
      %v960 = vld [vmem:[%s1 + $0x1c8] sm:$0xf]
      %v961 = vld [vmem:[%s1 + $0x1cc] sm:$0xf]
      %v962 = vld [vmem:[%s1 + $0x1d0] sm:$0xf]
      %v963 = vld [vmem:[%s1 + $0x1d4] sm:$0xf]
      %v964 = vld [vmem:[%s1 + $0x1d8] sm:$0xf]
      %v965 = vld [vmem:[%s1 + $0x1dc] sm:$0xf]
      %v966 = vld [vmem:[%s1 + $0x1e0] sm:$0xf]
      %v967 = vld [vmem:[%s1 + $0x1e4] sm:$0xf]
      %v968 = vld [vmem:[%s1 + $0x1e8] sm:$0xf]
      %v969 = vld [vmem:[%s1 + $0x1ec] sm:$0xf]
      %v970 = vld [vmem:[%s1 + $0x1f0] sm:$0xf]
      %v971 = vld [vmem:[%s1 + $0x1f4] sm:$0xf]
      %v972 = vld [vmem:[%s1 + $0x1f8] sm:$0xf]
      %v973 = vld [vmem:[%s1 + $0x1fc] sm:$0xf]
      %v974 = vld [vmem:[%s1 + $0x200] sm:$0xf]
      %v975 = vld [vmem:[%s1 + $0x204] sm:$0xf]
      %v976 = vld [vmem:[%s1 + $0x208] sm:$0xf]
      %v977 = vld [vmem:[%s1 + $0x20c] sm:$0xf]
      %v978 = vld [vmem:[%s1 + $0x210] sm:$0xf]
      %v979 = vld [vmem:[%s1 + $0x214] sm:$0xf]
      %v980 = vld [vmem:[%s1 + $0x218] sm:$0xf]
      %v981 = vld [vmem:[%s1 + $0x21c] sm:$0xf]
      %v982 = vld [vmem:[%s1 + $0x220] sm:$0xf]
      %v983 = vld [vmem:[%s1 + $0x224] sm:$0xf]
      %v984 = vld [vmem:[%s1 + $0x228] sm:$0xf]
      %v985 = vld [vmem:[%s1 + $0x22c] sm:$0xf]
      %v986 = vld [vmem:[%s1 + $0x230] sm:$0xf]
      %v987 = vld [vmem:[%s1 + $0x234] sm:$0xf]
      %v988 = vld [vmem:[%s1 + $0x238] sm:$0xf]
      %v989 = vld [vmem:[%s1 + $0x23c] sm:$0xf]
      %v1030 = vunpack.c.l.b16 %v806
      %v1031 = vunpack.c.h.b16 %v806
      %v1032 = vunpack.c.l.b16 %v807
      %v1033 = vunpack.c.h.b16 %v807
      %v1034 = vunpack.c.l.b16 %v808
      %v1035 = vunpack.c.h.b16 %v808
      %v1036 = vunpack.c.l.b16 %v809
      %v1037 = vunpack.c.h.b16 %v809
      %v1038 = vunpack.c.l.b16 %v810
      %v1039 = vunpack.c.l.b16 %v811
      %v1040 = vunpack.c.h.b16 %v811
      %v1041 = vunpack.c.l.b16 %v812
      %v1042 = vunpack.c.h.b16 %v812
      %v1043 = vunpack.c.l.b16 %v813
      %v1044 = vunpack.c.h.b16 %v813
      %v1045 = vunpack.c.l.b16 %v814
      %v1046 = vunpack.c.h.b16 %v814
      %v1047 = vunpack.c.l.b16 %v815
      %v1048 = vunpack.c.l.b16 %v816
      %v1049 = vunpack.c.h.b16 %v816
      %v1050 = vunpack.c.l.b16 %v817
      %v1051 = vunpack.c.h.b16 %v817
      %v1052 = vunpack.c.l.b16 %v818
      %v1053 = vunpack.c.h.b16 %v818
      %v1054 = vunpack.c.l.b16 %v819
      %v1055 = vunpack.c.h.b16 %v819
      %v1056 = vunpack.c.l.b16 %v820
      %v1057 = vunpack.c.l.b16 %v821
      %v1058 = vunpack.c.h.b16 %v821
      %v1059 = vunpack.c.l.b16 %v822
      %v1060 = vunpack.c.h.b16 %v822
      %v1061 = vunpack.c.l.b16 %v823
      %v1062 = vunpack.c.h.b16 %v823
      %v1063 = vunpack.c.l.b16 %v824
      %v1064 = vunpack.c.h.b16 %v824
      %v1065 = vunpack.c.l.b16 %v825
      %v1066 = vunpack.c.l.b16 %v826
      %v1067 = vunpack.c.h.b16 %v826
      %v1068 = vunpack.c.l.b16 %v827
      %v1069 = vunpack.c.h.b16 %v827
      %v1070 = vunpack.c.l.b16 %v828
      %v1071 = vunpack.c.h.b16 %v828
      %v1072 = vunpack.c.l.b16 %v829
      %v1073 = vunpack.c.h.b16 %v829
      %v1074 = vunpack.c.l.b16 %v830
      %v1075 = vunpack.c.l.b16 %v831
      %v1076 = vunpack.c.h.b16 %v831
      %v1077 = vunpack.c.l.b16 %v832
      %v1078 = vunpack.c.h.b16 %v832
      %v1079 = vunpack.c.l.b16 %v833
      %v1080 = vunpack.c.h.b16 %v833
      %v1081 = vunpack.c.l.b16 %v834
      %v1082 = vunpack.c.h.b16 %v834
      %v1083 = vunpack.c.l.b16 %v835
      %v1084 = vunpack.c.l.b16 %v836
      %v1085 = vunpack.c.h.b16 %v836
      %v1086 = vunpack.c.l.b16 %v837
      %v1087 = vunpack.c.h.b16 %v837
      %v1088 = vunpack.c.l.b16 %v838
      %v1089 = vunpack.c.h.b16 %v838
      %v1090 = vunpack.c.l.b16 %v839
      %v1091 = vunpack.c.h.b16 %v839
      %v1092 = vunpack.c.l.b16 %v840
      %v1093 = vunpack.c.l.b16 %v841
      %v1094 = vunpack.c.h.b16 %v841
      %v1095 = vunpack.c.l.b16 %v842
      %v1096 = vunpack.c.h.b16 %v842
      %v1097 = vunpack.c.l.b16 %v843
      %v1098 = vunpack.c.h.b16 %v843
      %v1099 = vunpack.c.l.b16 %v844
      %v1100 = vunpack.c.h.b16 %v844
      %v1101 = vunpack.c.l.b16 %v845
      %v1102 = vpack.c.b16 %v1039, %v1030
      %v1103 = vpack.c.b16 %v1040, %v1031
      %v1104 = vpack.c.b16 %v1041, %v1032
      %v1105 = vpack.c.b16 %v1042, %v1033
      %v1106 = vpack.c.b16 %v1043, %v1034
      %v1107 = vpack.c.b16 %v1044, %v1035
      %v1108 = vpack.c.b16 %v1045, %v1036
      %v1109 = vpack.c.b16 %v1046, %v1037
      %v1110 = vpack.c.b16 %v1047, %v1038
      %v1111 = vpack.c.b16 %v1057, %v1048
      %v1112 = vpack.c.b16 %v1058, %v1049
      %v1113 = vpack.c.b16 %v1059, %v1050
      %v1114 = vpack.c.b16 %v1060, %v1051
      %v1115 = vpack.c.b16 %v1061, %v1052
      %v1116 = vpack.c.b16 %v1062, %v1053
      %v1117 = vpack.c.b16 %v1063, %v1054
      %v1118 = vpack.c.b16 %v1064, %v1055
      %v1119 = vpack.c.b16 %v1065, %v1056
      %v1120 = vpack.c.b16 %v1075, %v1066
      %v1121 = vpack.c.b16 %v1076, %v1067
      %v1122 = vpack.c.b16 %v1077, %v1068
      %v1123 = vpack.c.b16 %v1078, %v1069
      %v1124 = vpack.c.b16 %v1079, %v1070
      %v1125 = vpack.c.b16 %v1080, %v1071
      %v1126 = vpack.c.b16 %v1081, %v1072
      %v1127 = vpack.c.b16 %v1082, %v1073
      %v1128 = vpack.c.b16 %v1083, %v1074
      %v1129 = vpack.c.b16 %v1093, %v1084
      %v1130 = vpack.c.b16 %v1094, %v1085
      %v1131 = vpack.c.b16 %v1095, %v1086
      %v1132 = vpack.c.b16 %v1096, %v1087
      %v1133 = vpack.c.b16 %v1097, %v1088
      %v1134 = vpack.c.b16 %v1098, %v1089
      %v1135 = vpack.c.b16 %v1099, %v1090
      %v1136 = vpack.c.b16 %v1100, %v1091
      %v1137 = vpack.c.b16 %v1101, %v1092
      %v1318 = vunpack.c.l.b16 %v846
      %v1319 = vunpack.c.l.b16 %v847
      %v1320 = vunpack.c.l.b16 %v848
      %v1321 = vunpack.c.l.b16 %v849
      %v1322 = vunpack.c.l.b16 %v850
      %v1323 = vunpack.c.l.b16 %v851
      %v1324 = vunpack.c.l.b16 %v852
      %v1325 = vunpack.c.l.b16 %v853
      %v1326 = vunpack.c.l.b16 %v854
      %v1327 = vunpack.c.l.b16 %v855
      %v1328 = vunpack.c.l.b16 %v856
      %v1329 = vunpack.c.l.b16 %v857
      %v1330 = vunpack.c.l.b16 %v858
      %v1331 = vunpack.c.l.b16 %v859
      %v1332 = vunpack.c.l.b16 %v860
      %v1333 = vunpack.c.l.b16 %v861
      %v1334 = vunpack.c.l.b16 %v862
      %v1335 = vunpack.c.l.b16 %v863
      %v1336 = vunpack.c.l.b16 %v864
      %v1337 = vunpack.c.l.b16 %v865
      %v1338 = vunpack.c.l.b16 %v866
      %v1339 = vunpack.c.l.b16 %v867
      %v1340 = vunpack.c.l.b16 %v868
      %v1341 = vunpack.c.l.b16 %v869
      %v1342 = vunpack.c.l.b16 %v870
      %v1343 = vunpack.c.l.b16 %v871
      %v1344 = vunpack.c.l.b16 %v872
      %v1345 = vunpack.c.l.b16 %v873
      %v1346 = vunpack.c.l.b16 %v874
      %v1347 = vunpack.c.l.b16 %v875
      %v1348 = vunpack.c.l.b16 %v876
      %v1349 = vunpack.c.l.b16 %v877
      %v1350 = vunpack.c.l.b16 %v878
      %v1351 = vunpack.c.l.b16 %v879
      %v1352 = vunpack.c.l.b16 %v880
      %v1353 = vunpack.c.l.b16 %v881
      %v1354 = vunpack.c.l.b16 %v882
      %v1355 = vunpack.c.l.b16 %v883
      %v1356 = vunpack.c.l.b16 %v884
      %v1357 = vunpack.c.l.b16 %v885
      %v1358 = vunpack.c.l.b16 %v886
      %v1359 = vunpack.c.l.b16 %v887
      %v1360 = vunpack.c.l.b16 %v888
      %v1361 = vunpack.c.l.b16 %v889
      %v1362 = vunpack.c.l.b16 %v890
      %v1363 = vunpack.c.l.b16 %v891
      %v1364 = vunpack.c.l.b16 %v892
      %v1365 = vunpack.c.l.b16 %v893
      %v1366 = vunpack.c.l.b16 %v894
      %v1367 = vunpack.c.l.b16 %v895
      %v1368 = vunpack.c.l.b16 %v896
      %v1369 = vunpack.c.l.b16 %v897
      %v1370 = vunpack.c.l.b16 %v898
      %v1371 = vunpack.c.l.b16 %v899
      %v1372 = vunpack.c.l.b16 %v900
      %v1373 = vunpack.c.l.b16 %v901
      %v1374 = vunpack.c.l.b16 %v902
      %v1375 = vunpack.c.l.b16 %v903
      %v1376 = vunpack.c.l.b16 %v904
      %v1377 = vunpack.c.l.b16 %v905
      %v1378 = vunpack.c.l.b16 %v906
      %v1379 = vunpack.c.l.b16 %v907
      %v1380 = vunpack.c.l.b16 %v908
      %v1381 = vunpack.c.l.b16 %v909
      %v1382 = vunpack.c.l.b16 %v910
      %v1383 = vunpack.c.l.b16 %v911
      %v1384 = vunpack.c.l.b16 %v912
      %v1385 = vunpack.c.l.b16 %v913
      %v1386 = vunpack.c.l.b16 %v914
      %v1387 = vunpack.c.l.b16 %v915
      %v1388 = vunpack.c.l.b16 %v916
      %v1389 = vunpack.c.l.b16 %v917
      %v1390 = vunpack.c.l.b16 %v918
      %v1391 = vunpack.c.l.b16 %v919
      %v1392 = vunpack.c.l.b16 %v920
      %v1393 = vunpack.c.l.b16 %v921
      %v1394 = vunpack.c.l.b16 %v922
      %v1395 = vunpack.c.l.b16 %v923
      %v1396 = vunpack.c.l.b16 %v924
      %v1397 = vunpack.c.l.b16 %v925
      %v1398 = vunpack.c.l.b16 %v926
      %v1399 = vunpack.c.l.b16 %v927
      %v1400 = vunpack.c.l.b16 %v928
      %v1401 = vunpack.c.l.b16 %v929
      %v1402 = vunpack.c.l.b16 %v930
      %v1403 = vunpack.c.l.b16 %v931
      %v1404 = vunpack.c.l.b16 %v932
      %v1405 = vunpack.c.l.b16 %v933
      %v1406 = vunpack.c.l.b16 %v934
      %v1407 = vunpack.c.l.b16 %v935
      %v1408 = vunpack.c.l.b16 %v936
      %v1409 = vunpack.c.l.b16 %v937
      %v1410 = vunpack.c.l.b16 %v938
      %v1411 = vunpack.c.l.b16 %v939
      %v1412 = vunpack.c.l.b16 %v940
      %v1413 = vunpack.c.l.b16 %v941
      %v1414 = vunpack.c.l.b16 %v942
      %v1415 = vunpack.c.l.b16 %v943
      %v1416 = vunpack.c.l.b16 %v944
      %v1417 = vunpack.c.l.b16 %v945
      %v1418 = vunpack.c.l.b16 %v946
      %v1419 = vunpack.c.l.b16 %v947
      %v1420 = vunpack.c.l.b16 %v948
      %v1421 = vunpack.c.l.b16 %v949
      %v1422 = vunpack.c.l.b16 %v950
      %v1423 = vunpack.c.l.b16 %v951
      %v1424 = vunpack.c.l.b16 %v952
      %v1425 = vunpack.c.l.b16 %v953
      %v1426 = vunpack.c.l.b16 %v954
      %v1427 = vunpack.c.l.b16 %v955
      %v1428 = vunpack.c.l.b16 %v956
      %v1429 = vunpack.c.l.b16 %v957
      %v1430 = vunpack.c.l.b16 %v958
      %v1431 = vunpack.c.l.b16 %v959
      %v1432 = vunpack.c.l.b16 %v960
      %v1433 = vunpack.c.l.b16 %v961
      %v1434 = vunpack.c.l.b16 %v962
      %v1435 = vunpack.c.l.b16 %v963
      %v1436 = vunpack.c.l.b16 %v964
      %v1437 = vunpack.c.l.b16 %v965
      %v1438 = vunpack.c.l.b16 %v966
      %v1439 = vunpack.c.l.b16 %v967
      %v1440 = vunpack.c.l.b16 %v968
      %v1441 = vunpack.c.l.b16 %v969
      %v1442 = vunpack.c.l.b16 %v970
      %v1443 = vunpack.c.l.b16 %v971
      %v1444 = vunpack.c.l.b16 %v972
      %v1445 = vunpack.c.l.b16 %v973
      %v1446 = vunpack.c.l.b16 %v974
      %v1447 = vunpack.c.l.b16 %v975
      %v1448 = vunpack.c.l.b16 %v976
      %v1449 = vunpack.c.l.b16 %v977
      %v1450 = vunpack.c.l.b16 %v978
      %v1451 = vunpack.c.l.b16 %v979
      %v1452 = vunpack.c.l.b16 %v980
      %v1453 = vunpack.c.l.b16 %v981
      %v1454 = vunpack.c.l.b16 %v982
      %v1455 = vunpack.c.l.b16 %v983
      %v1456 = vunpack.c.l.b16 %v984
      %v1457 = vunpack.c.l.b16 %v985
      %v1458 = vunpack.c.l.b16 %v986
      %v1459 = vunpack.c.l.b16 %v987
      %v1460 = vunpack.c.l.b16 %v988
      %v1461 = vunpack.c.l.b16 %v989
      %v1462 = vpack.c.b16 %v1319, %v1318
      %v1463 = vpack.c.b16 %v1321, %v1320
      %v1464 = vpack.c.b16 %v1323, %v1322
      %v1465 = vpack.c.b16 %v1325, %v1324
      %v1466 = vpack.c.b16 %v1327, %v1326
      %v1467 = vpack.c.b16 %v1329, %v1328
      %v1468 = vpack.c.b16 %v1331, %v1330
      %v1469 = vpack.c.b16 %v1333, %v1332
      %v1470 = vpack.c.b16 %v1335, %v1334
      %v1471 = vpack.c.b16 %v1337, %v1336
      %v1472 = vpack.c.b16 %v1339, %v1338
      %v1473 = vpack.c.b16 %v1341, %v1340
      %v1474 = vpack.c.b16 %v1343, %v1342
      %v1475 = vpack.c.b16 %v1345, %v1344
      %v1476 = vpack.c.b16 %v1347, %v1346
      %v1477 = vpack.c.b16 %v1349, %v1348
      %v1478 = vpack.c.b16 %v1351, %v1350
      %v1479 = vpack.c.b16 %v1353, %v1352
      %v1480 = vpack.c.b16 %v1355, %v1354
      %v1481 = vpack.c.b16 %v1357, %v1356
      %v1482 = vpack.c.b16 %v1359, %v1358
      %v1483 = vpack.c.b16 %v1361, %v1360
      %v1484 = vpack.c.b16 %v1363, %v1362
      %v1485 = vpack.c.b16 %v1365, %v1364
      %v1486 = vpack.c.b16 %v1367, %v1366
      %v1487 = vpack.c.b16 %v1369, %v1368
      %v1488 = vpack.c.b16 %v1371, %v1370
      %v1489 = vpack.c.b16 %v1373, %v1372
      %v1490 = vpack.c.b16 %v1375, %v1374
      %v1491 = vpack.c.b16 %v1377, %v1376
      %v1492 = vpack.c.b16 %v1379, %v1378
      %v1493 = vpack.c.b16 %v1381, %v1380
      %v1494 = vpack.c.b16 %v1383, %v1382
      %v1495 = vpack.c.b16 %v1385, %v1384
      %v1496 = vpack.c.b16 %v1387, %v1386
      %v1497 = vpack.c.b16 %v1389, %v1388
      %v1498 = vpack.c.b16 %v1391, %v1390
      %v1499 = vpack.c.b16 %v1393, %v1392
      %v1500 = vpack.c.b16 %v1395, %v1394
      %v1501 = vpack.c.b16 %v1397, %v1396
      %v1502 = vpack.c.b16 %v1399, %v1398
      %v1503 = vpack.c.b16 %v1401, %v1400
      %v1504 = vpack.c.b16 %v1403, %v1402
      %v1505 = vpack.c.b16 %v1405, %v1404
      %v1506 = vpack.c.b16 %v1407, %v1406
      %v1507 = vpack.c.b16 %v1409, %v1408
      %v1508 = vpack.c.b16 %v1411, %v1410
      %v1509 = vpack.c.b16 %v1413, %v1412
      %v1510 = vpack.c.b16 %v1415, %v1414
      %v1511 = vpack.c.b16 %v1417, %v1416
      %v1512 = vpack.c.b16 %v1419, %v1418
      %v1513 = vpack.c.b16 %v1421, %v1420
      %v1514 = vpack.c.b16 %v1423, %v1422
      %v1515 = vpack.c.b16 %v1425, %v1424
      %v1516 = vpack.c.b16 %v1427, %v1426
      %v1517 = vpack.c.b16 %v1429, %v1428
      %v1518 = vpack.c.b16 %v1431, %v1430
      %v1519 = vpack.c.b16 %v1433, %v1432
      %v1520 = vpack.c.b16 %v1435, %v1434
      %v1521 = vpack.c.b16 %v1437, %v1436
      %v1522 = vpack.c.b16 %v1439, %v1438
      %v1523 = vpack.c.b16 %v1441, %v1440
      %v1524 = vpack.c.b16 %v1443, %v1442
      %v1525 = vpack.c.b16 %v1445, %v1444
      %v1526 = vpack.c.b16 %v1447, %v1446
      %v1527 = vpack.c.b16 %v1449, %v1448
      %v1528 = vpack.c.b16 %v1451, %v1450
      %v1529 = vpack.c.b16 %v1453, %v1452
      %v1530 = vpack.c.b16 %v1455, %v1454
      %v1531 = vpack.c.b16 %v1457, %v1456
      %v1532 = vpack.c.b16 %v1459, %v1458
      %v1533 = vpack.c.b16 %v1461, %v1460
      %1606 = vmatpush.bf16.msra.mxu0 %v1469
      %1607 = vmatpush.bf16.msra.mxu0 %v1468
      %1608 = vmatpush.bf16.msra.mxu0 %v1467
      %1609 = vmatpush.bf16.msra.mxu0 %v1466
      %1610 = vmatpush.bf16.msra.mxu0 %v1465
      %1611 = vmatpush.bf16.msra.mxu0 %v1464
      %1612 = vmatpush.bf16.msra.mxu0 %v1463
      %1613 = vmatpush.bf16.msra.mxu0 %v1462
      %1614 = vmatmul.bf16.gmra.mxu0 %v1102
      %v1615 = vpop.f32.mrf.mxu0
      %v1616 = vadd.f32 0.0, %v1615
      %v1617 = vpop.f32.mrf.mxu0
      %v1618 = vadd.f32 0.0, %v1617
      %1619 = vmatmul.bf16.gmra.mxu0 %v1111
      %v1620 = vpop.f32.mrf.mxu0
      %v1621 = vadd.f32 0.0, %v1620
      %v1622 = vpop.f32.mrf.mxu0
      %v1623 = vadd.f32 0.0, %v1622
      %1624 = vmatmul.bf16.gmra.mxu0 %v1120
      %v1625 = vpop.f32.mrf.mxu0
      %v1626 = vadd.f32 0.0, %v1625
      %v1627 = vpop.f32.mrf.mxu0
      %v1628 = vadd.f32 0.0, %v1627
      %1629 = vmatmul.bf16.gmra.mxu0 %v1129
      %v1630 = vpop.f32.mrf.mxu0
      %v1631 = vadd.f32 0.0, %v1630
      %v1632 = vpop.f32.mrf.mxu0
      %v1633 = vadd.f32 0.0, %v1632
      %1634 = vdwg.mxu0
      %1635 = vmatpush.bf16.msra.mxu0 %v1477
      %1636 = vmatpush.bf16.msra.mxu0 %v1476
      %1637 = vmatpush.bf16.msra.mxu0 %v1475
      %1638 = vmatpush.bf16.msra.mxu0 %v1474
      %1639 = vmatpush.bf16.msra.mxu0 %v1473
      %1640 = vmatpush.bf16.msra.mxu0 %v1472
      %1641 = vmatpush.bf16.msra.mxu0 %v1471
      %1642 = vmatpush.bf16.msra.mxu0 %v1470
      %1643 = vmatmul.bf16.gmra.mxu0 %v1103
      %v1644 = vpop.f32.mrf.mxu0
      %v1645 = vadd.f32 %v1616, %v1644
      %v1646 = vpop.f32.mrf.mxu0
      %v1647 = vadd.f32 %v1618, %v1646
      %1648 = vmatmul.bf16.gmra.mxu0 %v1112
      %v1649 = vpop.f32.mrf.mxu0
      %v1650 = vadd.f32 %v1621, %v1649
      %v1651 = vpop.f32.mrf.mxu0
      %v1652 = vadd.f32 %v1623, %v1651
      %1653 = vmatmul.bf16.gmra.mxu0 %v1121
      %v1654 = vpop.f32.mrf.mxu0
      %v1655 = vadd.f32 %v1626, %v1654
      %v1656 = vpop.f32.mrf.mxu0
      %v1657 = vadd.f32 %v1628, %v1656
      %1658 = vmatmul.bf16.gmra.mxu0 %v1130
      %v1659 = vpop.f32.mrf.mxu0
      %v1660 = vadd.f32 %v1631, %v1659
      %v1661 = vpop.f32.mrf.mxu0
      %v1662 = vadd.f32 %v1633, %v1661
      %1663 = vdwg.mxu0
      %1664 = vmatpush.bf16.msra.mxu0 %v1485
      %1665 = vmatpush.bf16.msra.mxu0 %v1484
      %1666 = vmatpush.bf16.msra.mxu0 %v1483
      %1667 = vmatpush.bf16.msra.mxu0 %v1482
      %1668 = vmatpush.bf16.msra.mxu0 %v1481
      %1669 = vmatpush.bf16.msra.mxu0 %v1480
      %1670 = vmatpush.bf16.msra.mxu0 %v1479
      %1671 = vmatpush.bf16.msra.mxu0 %v1478
      %1672 = vmatmul.bf16.gmra.mxu0 %v1104
      %v1673 = vpop.f32.mrf.mxu0
      %v1674 = vadd.f32 %v1645, %v1673
      %v1675 = vpop.f32.mrf.mxu0
      %v1676 = vadd.f32 %v1647, %v1675
      %1677 = vmatmul.bf16.gmra.mxu0 %v1113
      %v1678 = vpop.f32.mrf.mxu0
      %v1679 = vadd.f32 %v1650, %v1678
      %v1680 = vpop.f32.mrf.mxu0
      %v1681 = vadd.f32 %v1652, %v1680
      %1682 = vmatmul.bf16.gmra.mxu0 %v1122
      %v1683 = vpop.f32.mrf.mxu0
      %v1684 = vadd.f32 %v1655, %v1683
      %v1685 = vpop.f32.mrf.mxu0
      %v1686 = vadd.f32 %v1657, %v1685
      %1687 = vmatmul.bf16.gmra.mxu0 %v1131
      %v1688 = vpop.f32.mrf.mxu0
      %v1689 = vadd.f32 %v1660, %v1688
      %v1690 = vpop.f32.mrf.mxu0
      %v1691 = vadd.f32 %v1662, %v1690
      %1692 = vdwg.mxu0
      %1693 = vmatpush.bf16.msra.mxu0 %v1493
      %1694 = vmatpush.bf16.msra.mxu0 %v1492
      %1695 = vmatpush.bf16.msra.mxu0 %v1491
      %1696 = vmatpush.bf16.msra.mxu0 %v1490
      %1697 = vmatpush.bf16.msra.mxu0 %v1489
      %1698 = vmatpush.bf16.msra.mxu0 %v1488
      %1699 = vmatpush.bf16.msra.mxu0 %v1487
      %1700 = vmatpush.bf16.msra.mxu0 %v1486
      %1701 = vmatmul.bf16.gmra.mxu0 %v1105
      %v1702 = vpop.f32.mrf.mxu0
      %v1703 = vadd.f32 %v1674, %v1702
      %v1704 = vpop.f32.mrf.mxu0
      %v1705 = vadd.f32 %v1676, %v1704
      %1706 = vmatmul.bf16.gmra.mxu0 %v1114
      %v1707 = vpop.f32.mrf.mxu0
      %v1708 = vadd.f32 %v1679, %v1707
      %v1709 = vpop.f32.mrf.mxu0
      %v1710 = vadd.f32 %v1681, %v1709
      %1711 = vmatmul.bf16.gmra.mxu0 %v1123
      %v1712 = vpop.f32.mrf.mxu0
      %v1713 = vadd.f32 %v1684, %v1712
      %v1714 = vpop.f32.mrf.mxu0
      %v1715 = vadd.f32 %v1686, %v1714
      %1716 = vmatmul.bf16.gmra.mxu0 %v1132
      %v1717 = vpop.f32.mrf.mxu0
      %v1718 = vadd.f32 %v1689, %v1717
      %v1719 = vpop.f32.mrf.mxu0
      %v1720 = vadd.f32 %v1691, %v1719
      %1721 = vdwg.mxu0
      %1722 = vmatpush.bf16.msra.mxu0 %v1501
      %1723 = vmatpush.bf16.msra.mxu0 %v1500
      %1724 = vmatpush.bf16.msra.mxu0 %v1499
      %1725 = vmatpush.bf16.msra.mxu0 %v1498
      %1726 = vmatpush.bf16.msra.mxu0 %v1497
      %1727 = vmatpush.bf16.msra.mxu0 %v1496
      %1728 = vmatpush.bf16.msra.mxu0 %v1495
      %1729 = vmatpush.bf16.msra.mxu0 %v1494
      %1730 = vmatmul.bf16.gmra.mxu0 %v1106
      %v1731 = vpop.f32.mrf.mxu0
      %v1732 = vadd.f32 %v1703, %v1731
      %v1733 = vpop.f32.mrf.mxu0
      %v1734 = vadd.f32 %v1705, %v1733
      %1735 = vmatmul.bf16.gmra.mxu0 %v1115
      %v1736 = vpop.f32.mrf.mxu0
      %v1737 = vadd.f32 %v1708, %v1736
      %v1738 = vpop.f32.mrf.mxu0
      %v1739 = vadd.f32 %v1710, %v1738
      %1740 = vmatmul.bf16.gmra.mxu0 %v1124
      %v1741 = vpop.f32.mrf.mxu0
      %v1742 = vadd.f32 %v1713, %v1741
      %v1743 = vpop.f32.mrf.mxu0
      %v1744 = vadd.f32 %v1715, %v1743
      %1745 = vmatmul.bf16.gmra.mxu0 %v1133
      %v1746 = vpop.f32.mrf.mxu0
      %v1747 = vadd.f32 %v1718, %v1746
      %v1748 = vpop.f32.mrf.mxu0
      %v1749 = vadd.f32 %v1720, %v1748
      %1750 = vdwg.mxu0
      %1751 = vmatpush.bf16.msra.mxu0 %v1509
      %1752 = vmatpush.bf16.msra.mxu0 %v1508
      %1753 = vmatpush.bf16.msra.mxu0 %v1507
      %1754 = vmatpush.bf16.msra.mxu0 %v1506
      %1755 = vmatpush.bf16.msra.mxu0 %v1505
      %1756 = vmatpush.bf16.msra.mxu0 %v1504
      %1757 = vmatpush.bf16.msra.mxu0 %v1503
      %1758 = vmatpush.bf16.msra.mxu0 %v1502
      %1759 = vmatmul.bf16.gmra.mxu0 %v1107
      %v1760 = vpop.f32.mrf.mxu0
      %v1761 = vadd.f32 %v1732, %v1760
      %v1762 = vpop.f32.mrf.mxu0
      %v1763 = vadd.f32 %v1734, %v1762
      %1764 = vmatmul.bf16.gmra.mxu0 %v1116
      %v1765 = vpop.f32.mrf.mxu0
      %v1766 = vadd.f32 %v1737, %v1765
      %v1767 = vpop.f32.mrf.mxu0
      %v1768 = vadd.f32 %v1739, %v1767
      %1769 = vmatmul.bf16.gmra.mxu0 %v1125
      %v1770 = vpop.f32.mrf.mxu0
      %v1771 = vadd.f32 %v1742, %v1770
      %v1772 = vpop.f32.mrf.mxu0
      %v1773 = vadd.f32 %v1744, %v1772
      %1774 = vmatmul.bf16.gmra.mxu0 %v1134
      %v1775 = vpop.f32.mrf.mxu0
      %v1776 = vadd.f32 %v1747, %v1775
      %v1777 = vpop.f32.mrf.mxu0
      %v1778 = vadd.f32 %v1749, %v1777
      %1779 = vdwg.mxu0
      %1780 = vmatpush.bf16.msra.mxu0 %v1517
      %1781 = vmatpush.bf16.msra.mxu0 %v1516
      %1782 = vmatpush.bf16.msra.mxu0 %v1515
      %1783 = vmatpush.bf16.msra.mxu0 %v1514
      %1784 = vmatpush.bf16.msra.mxu0 %v1513
      %1785 = vmatpush.bf16.msra.mxu0 %v1512
      %1786 = vmatpush.bf16.msra.mxu0 %v1511
      %1787 = vmatpush.bf16.msra.mxu0 %v1510
      %1788 = vmatmul.bf16.gmra.mxu0 %v1108
      %v1789 = vpop.f32.mrf.mxu0
      %v1790 = vadd.f32 %v1761, %v1789
      %v1791 = vpop.f32.mrf.mxu0
      %v1792 = vadd.f32 %v1763, %v1791
      %1793 = vmatmul.bf16.gmra.mxu0 %v1117
      %v1794 = vpop.f32.mrf.mxu0
      %v1795 = vadd.f32 %v1766, %v1794
      %v1796 = vpop.f32.mrf.mxu0
      %v1797 = vadd.f32 %v1768, %v1796
      %1798 = vmatmul.bf16.gmra.mxu0 %v1126
      %v1799 = vpop.f32.mrf.mxu0
      %v1800 = vadd.f32 %v1771, %v1799
      %v1801 = vpop.f32.mrf.mxu0
      %v1802 = vadd.f32 %v1773, %v1801
      %1803 = vmatmul.bf16.gmra.mxu0 %v1135
      %v1804 = vpop.f32.mrf.mxu0
      %v1805 = vadd.f32 %v1776, %v1804
      %v1806 = vpop.f32.mrf.mxu0
      %v1807 = vadd.f32 %v1778, %v1806
      %1808 = vdwg.mxu0
      %1809 = vmatpush.bf16.msra.mxu0 %v1525
      %1810 = vmatpush.bf16.msra.mxu0 %v1524
      %1811 = vmatpush.bf16.msra.mxu0 %v1523
      %1812 = vmatpush.bf16.msra.mxu0 %v1522
      %1813 = vmatpush.bf16.msra.mxu0 %v1521
      %1814 = vmatpush.bf16.msra.mxu0 %v1520
      %1815 = vmatpush.bf16.msra.mxu0 %v1519
      %1816 = vmatpush.bf16.msra.mxu0 %v1518
      %1817 = vmatmul.bf16.gmra.mxu0 %v1109
      %v1818 = vpop.f32.mrf.mxu0
      %v1819 = vadd.f32 %v1790, %v1818
      %v1820 = vpop.f32.mrf.mxu0
      %v1821 = vadd.f32 %v1792, %v1820
      %1822 = vmatmul.bf16.gmra.mxu0 %v1118
      %v1823 = vpop.f32.mrf.mxu0
      %v1824 = vadd.f32 %v1795, %v1823
      %v1825 = vpop.f32.mrf.mxu0
      %v1826 = vadd.f32 %v1797, %v1825
      %1827 = vmatmul.bf16.gmra.mxu0 %v1127
      %v1828 = vpop.f32.mrf.mxu0
      %v1829 = vadd.f32 %v1800, %v1828
      %v1830 = vpop.f32.mrf.mxu0
      %v1831 = vadd.f32 %v1802, %v1830
      %1832 = vmatmul.bf16.gmra.mxu0 %v1136
      %v1833 = vpop.f32.mrf.mxu0
      %v1834 = vadd.f32 %v1805, %v1833
      %v1835 = vpop.f32.mrf.mxu0
      %v1836 = vadd.f32 %v1807, %v1835
      %1837 = vdwg.mxu0
      %1838 = vmatpush.bf16.msra.mxu0 %v1533
      %1839 = vmatpush.bf16.msra.mxu0 %v1532
      %1840 = vmatpush.bf16.msra.mxu0 %v1531
      %1841 = vmatpush.bf16.msra.mxu0 %v1530
      %1842 = vmatpush.bf16.msra.mxu0 %v1529
      %1843 = vmatpush.bf16.msra.mxu0 %v1528
      %1844 = vmatpush.bf16.msra.mxu0 %v1527
      %1845 = vmatpush.bf16.msra.mxu0 %v1526
      %1846 = vmatmul.bf16.gmra.mxu0 %v1110
      %v1847 = vpop.f32.mrf.mxu0
      %v1848 = vadd.f32 %v1819, %v1847
      %v1849 = vpop.f32.mrf.mxu0
      %v1850 = vadd.f32 %v1821, %v1849
      %1851 = vmatmul.bf16.gmra.mxu0 %v1119
      %v1852 = vpop.f32.mrf.mxu0
      %v1853 = vadd.f32 %v1824, %v1852
      %v1854 = vpop.f32.mrf.mxu0
      %v1855 = vadd.f32 %v1826, %v1854
      %1856 = vmatmul.bf16.gmra.mxu0 %v1128
      %v1857 = vpop.f32.mrf.mxu0
      %v1858 = vadd.f32 %v1829, %v1857
      %v1859 = vpop.f32.mrf.mxu0
      %v1860 = vadd.f32 %v1831, %v1859
      %1861 = vmatmul.bf16.gmra.mxu0 %v1137
      %v1862 = vpop.f32.mrf.mxu0
      %v1863 = vadd.f32 %v1834, %v1862
      %v1864 = vpop.f32.mrf.mxu0
      %v1865 = vadd.f32 %v1836, %v1864
      %1866 = vdwg.mxu0
      %v1867 = vld [vmem:[%s6] sm:$0x1]
      %v1869 = vperm.slane %v1867, 0
      %v1871 = vmul.f32 %v1848, %v1869
      %v1872 = vmul.f32 %v1850, %v1869
      %v1873 = vmul.f32 %v1853, %v1869
      %v1874 = vmul.f32 %v1855, %v1869
      %v1875 = vmul.f32 %v1858, %v1869
      %v1876 = vmul.f32 %v1860, %v1869
      %v1877 = vmul.f32 %v1863, %v1869
      %v1878 = vmul.f32 %v1865, %v1869
      %v1879 = vld [vmem:[%s7] sm:$0x1]
      %v1881 = vperm.slane %v1879, 0
      %v1883 = vadd.f32 %v1871, %v1881
      %v1884 = vadd.f32 %v1872, %v1881
      %v1885 = vadd.f32 %v1873, %v1881
      %v1886 = vadd.f32 %v1874, %v1881
      %v1887 = vadd.f32 %v1875, %v1881
      %v1888 = vadd.f32 %v1876, %v1881
      %v1889 = vadd.f32 %v1877, %v1881
      %v1890 = vadd.f32 %v1878, %v1881
      %v1891 = vmax.f32 %v1883, 0.0
      %v1892 = vmax.f32 %v1884, 0.0
      %v1893 = vmax.f32 %v1885, 0.0
      %v1894 = vmax.f32 %v1886, 0.0
      %v1895 = vmax.f32 %v1887, 0.0
      %v1896 = vmax.f32 %v1888, 0.0
      %v1897 = vmax.f32 %v1889, 0.0
      %v1898 = vmax.f32 %v1890, 0.0
      %1899 = vst [vmem:[#allocation3] sm:$0xff] 0.0
      %1900 = vst [vmem:[#allocation3 + $0x8] sm:$0x3] 0.0
      %s1901 = scalar_lea.vmem [#allocation3], 144
      %1902 = vst [vmem:[%s1901] sm:$0xff] 0.0
      %1903 = vst [vmem:[%s1901 + $0x8] sm:$0x3] 0.0
      %v1912 = vrot.slane %v1891, 7
      %v1913 = vrot.slane %v1892, 7
      %v1914 = vrot.slane %v1893, 7
      %v1915 = vrot.slane %v1894, 7
      %v1916 = vrot.slane %v1895, 7
      %v1917 = vrot.slane %v1896, 7
      %v1918 = vrot.slane %v1897, 7
      %v1919 = vrot.slane %v1898, 7
      %v1928 = vsel %vm371, 0.0, %v1912
      %v1929 = vsel %vm371, 0.0, %v1913
      %v1930 = vsel %vm371, 0.0, %v1914
      %v1931 = vsel %vm371, 0.0, %v1915
      %v1932 = vsel %vm371, 0.0, %v1916
      %v1933 = vsel %vm371, 0.0, %v1917
      %v1934 = vsel %vm371, 0.0, %v1918
      %v1935 = vsel %vm371, 0.0, %v1919
      %v1936 = vsel %vm371, %v1912, 0.0
      %v1937 = vsel %vm371, %v1913, 0.0
      %v1938 = vsel %vm371, %v1914, 0.0
      %v1939 = vsel %vm371, %v1915, 0.0
      %v1940 = vsel %vm371, %v1916, 0.0
      %v1941 = vsel %vm371, %v1917, 0.0
      %v1942 = vsel %vm371, %v1918, 0.0
      %v1943 = vsel %vm371, %v1919, 0.0
      %s1944 = scalar_lea.vmem [#allocation3], 16
      %1945 = vst [vmem:[%s1944] sm:$0xff] %v1928
      %1946 = vst [vmem:[%s1944 + $0x8] sm:$0x3] %v1936
      %1947 = vst [vmem:[%s1944 + $0x10] sm:$0xff] %v1929
      %1948 = vst [vmem:[%s1944 + $0x18] sm:$0x3] %v1937
      %1949 = vst [vmem:[%s1944 + $0x20] sm:$0xff] %v1930
      %1950 = vst [vmem:[%s1944 + $0x28] sm:$0x3] %v1938
      %1951 = vst [vmem:[%s1944 + $0x30] sm:$0xff] %v1931
      %1952 = vst [vmem:[%s1944 + $0x38] sm:$0x3] %v1939
      %1953 = vst [vmem:[%s1944 + $0x40] sm:$0xff] %v1932
      %1954 = vst [vmem:[%s1944 + $0x48] sm:$0x3] %v1940
      %1955 = vst [vmem:[%s1944 + $0x50] sm:$0xff] %v1933
      %1956 = vst [vmem:[%s1944 + $0x58] sm:$0x3] %v1941
      %1957 = vst [vmem:[%s1944 + $0x60] sm:$0xff] %v1934
      %1958 = vst [vmem:[%s1944 + $0x68] sm:$0x3] %v1942
      %1959 = vst [vmem:[%s1944 + $0x70] sm:$0xff] %v1935
      %1960 = vst [vmem:[%s1944 + $0x78] sm:$0x3] %v1943
      %v1961 = vld [vmem:[#allocation3] sm:$0xff]
      %v1962 = vld [vmem:[#allocation3 + $0x10] sm:$0xff]
      %v1963 = vld [vmem:[#allocation3 + $0x20] sm:$0xff]
      %v1964 = vld [vmem:[#allocation3 + $0x30] sm:$0xff]
      %v1965 = vld [vmem:[#allocation3 + $0x40] sm:$0xff]
      %v1966 = vld [vmem:[#allocation3 + $0x50] sm:$0xff]
      %v1967 = vld [vmem:[#allocation3 + $0x60] sm:$0xff]
      %v1968 = vld [vmem:[#allocation3 + $0x70] sm:$0xff]
      %v1969 = vpack.c.bf16 %v1961, %v1961
      %v1970 = vpack.c.bf16 %v1962, %v1962
      %v1971 = vpack.c.bf16 %v1963, %v1963
      %v1972 = vpack.c.bf16 %v1964, %v1964
      %v1973 = vpack.c.bf16 %v1965, %v1965
      %v1974 = vpack.c.bf16 %v1966, %v1966
      %v1975 = vpack.c.bf16 %v1967, %v1967
      %v1976 = vpack.c.bf16 %v1968, %v1968
      %1977 = vst [vmem:[#allocation5] sm:$0xf] %v1969
      %1978 = vst [vmem:[#allocation5 + $0x24] sm:$0xf] %v1970
      %1979 = vst [vmem:[#allocation5 + $0x48] sm:$0xf] %v1971
      %1980 = vst [vmem:[#allocation5 + $0x6c] sm:$0xf] %v1972
      %1981 = vst [vmem:[#allocation5 + $0x90] sm:$0xf] %v1973
      %1982 = vst [vmem:[#allocation5 + $0xb4] sm:$0xf] %v1974
      %1983 = vst [vmem:[#allocation5 + $0xd8] sm:$0xf] %v1975
      %1984 = vst [vmem:[#allocation5 + $0xfc] sm:$0xf] %v1976
      %v1985 = vld [vmem:[#allocation3 + $0x1] sm:$0xff]
      %v1986 = vld [vmem:[#allocation3 + $0x11] sm:$0xff]
      %v1987 = vld [vmem:[#allocation3 + $0x21] sm:$0xff]
      %v1988 = vld [vmem:[#allocation3 + $0x31] sm:$0xff]
      %v1989 = vld [vmem:[#allocation3 + $0x41] sm:$0xff]
      %v1990 = vld [vmem:[#allocation3 + $0x51] sm:$0xff]
      %v1991 = vld [vmem:[#allocation3 + $0x61] sm:$0xff]
      %v1992 = vld [vmem:[#allocation3 + $0x71] sm:$0xff]
      %v1993 = vpack.c.bf16 %v1985, %v1985
      %v1994 = vpack.c.bf16 %v1986, %v1986
      %v1995 = vpack.c.bf16 %v1987, %v1987
      %v1996 = vpack.c.bf16 %v1988, %v1988
      %v1997 = vpack.c.bf16 %v1989, %v1989
      %v1998 = vpack.c.bf16 %v1990, %v1990
      %v1999 = vpack.c.bf16 %v1991, %v1991
      %v2000 = vpack.c.bf16 %v1992, %v1992
      %2001 = vst [vmem:[#allocation5 + $0x4] sm:$0xf] %v1993
      %2002 = vst [vmem:[#allocation5 + $0x28] sm:$0xf] %v1994
      %2003 = vst [vmem:[#allocation5 + $0x4c] sm:$0xf] %v1995
      %2004 = vst [vmem:[#allocation5 + $0x70] sm:$0xf] %v1996
      %2005 = vst [vmem:[#allocation5 + $0x94] sm:$0xf] %v1997
      %2006 = vst [vmem:[#allocation5 + $0xb8] sm:$0xf] %v1998
      %2007 = vst [vmem:[#allocation5 + $0xdc] sm:$0xf] %v1999
      %2008 = vst [vmem:[#allocation5 + $0x100] sm:$0xf] %v2000
      %v2009 = vld [vmem:[#allocation3 + $0x2] sm:$0xff]
      %v2010 = vld [vmem:[#allocation3 + $0x12] sm:$0xff]
      %v2011 = vld [vmem:[#allocation3 + $0x22] sm:$0xff]
      %v2012 = vld [vmem:[#allocation3 + $0x32] sm:$0xff]
      %v2013 = vld [vmem:[#allocation3 + $0x42] sm:$0xff]
      %v2014 = vld [vmem:[#allocation3 + $0x52] sm:$0xff]
      %v2015 = vld [vmem:[#allocation3 + $0x62] sm:$0xff]
      %v2016 = vld [vmem:[#allocation3 + $0x72] sm:$0xff]
      %v2017 = vpack.c.bf16 %v2009, %v2009
      %v2018 = vpack.c.bf16 %v2010, %v2010
      %v2019 = vpack.c.bf16 %v2011, %v2011
      %v2020 = vpack.c.bf16 %v2012, %v2012
      %v2021 = vpack.c.bf16 %v2013, %v2013
      %v2022 = vpack.c.bf16 %v2014, %v2014
      %v2023 = vpack.c.bf16 %v2015, %v2015
      %v2024 = vpack.c.bf16 %v2016, %v2016
      %2025 = vst [vmem:[#allocation5 + $0x8] sm:$0xf] %v2017
      %2026 = vst [vmem:[#allocation5 + $0x2c] sm:$0xf] %v2018
      %2027 = vst [vmem:[#allocation5 + $0x50] sm:$0xf] %v2019
      %2028 = vst [vmem:[#allocation5 + $0x74] sm:$0xf] %v2020
      %2029 = vst [vmem:[#allocation5 + $0x98] sm:$0xf] %v2021
      %2030 = vst [vmem:[#allocation5 + $0xbc] sm:$0xf] %v2022
      %2031 = vst [vmem:[#allocation5 + $0xe0] sm:$0xf] %v2023
      %2032 = vst [vmem:[#allocation5 + $0x104] sm:$0xf] %v2024
      %v2033 = vld [vmem:[%s1944] sm:$0xff]
      %v2034 = vld [vmem:[%s1944 + $0x10] sm:$0xff]
      %v2035 = vld [vmem:[%s1944 + $0x20] sm:$0xff]
      %v2036 = vld [vmem:[%s1944 + $0x30] sm:$0xff]
      %v2037 = vld [vmem:[%s1944 + $0x40] sm:$0xff]
      %v2038 = vld [vmem:[%s1944 + $0x50] sm:$0xff]
      %v2039 = vld [vmem:[%s1944 + $0x60] sm:$0xff]
      %v2040 = vld [vmem:[%s1944 + $0x70] sm:$0xff]
      %v2041 = vpack.c.bf16 %v2033, %v2033
      %v2042 = vpack.c.bf16 %v2034, %v2034
      %v2043 = vpack.c.bf16 %v2035, %v2035
      %v2044 = vpack.c.bf16 %v2036, %v2036
      %v2045 = vpack.c.bf16 %v2037, %v2037
      %v2046 = vpack.c.bf16 %v2038, %v2038
      %v2047 = vpack.c.bf16 %v2039, %v2039
      %v2048 = vpack.c.bf16 %v2040, %v2040
      %2049 = vst [vmem:[#allocation5 + $0xc] sm:$0xf] %v2041
      %2050 = vst [vmem:[#allocation5 + $0x30] sm:$0xf] %v2042
      %2051 = vst [vmem:[#allocation5 + $0x54] sm:$0xf] %v2043
      %2052 = vst [vmem:[#allocation5 + $0x78] sm:$0xf] %v2044
      %2053 = vst [vmem:[#allocation5 + $0x9c] sm:$0xf] %v2045
      %2054 = vst [vmem:[#allocation5 + $0xc0] sm:$0xf] %v2046
      %2055 = vst [vmem:[#allocation5 + $0xe4] sm:$0xf] %v2047
      %2056 = vst [vmem:[#allocation5 + $0x108] sm:$0xf] %v2048
      %v2057 = vld [vmem:[%s1944 + $0x1] sm:$0xff]
      %v2058 = vld [vmem:[%s1944 + $0x11] sm:$0xff]
      %v2059 = vld [vmem:[%s1944 + $0x21] sm:$0xff]
      %v2060 = vld [vmem:[%s1944 + $0x31] sm:$0xff]
      %v2061 = vld [vmem:[%s1944 + $0x41] sm:$0xff]
      %v2062 = vld [vmem:[%s1944 + $0x51] sm:$0xff]
      %v2063 = vld [vmem:[%s1944 + $0x61] sm:$0xff]
      %v2064 = vld [vmem:[%s1944 + $0x71] sm:$0xff]
      %v2065 = vpack.c.bf16 %v2057, %v2057
      %v2066 = vpack.c.bf16 %v2058, %v2058
      %v2067 = vpack.c.bf16 %v2059, %v2059
      %v2068 = vpack.c.bf16 %v2060, %v2060
      %v2069 = vpack.c.bf16 %v2061, %v2061
      %v2070 = vpack.c.bf16 %v2062, %v2062
      %v2071 = vpack.c.bf16 %v2063, %v2063
      %v2072 = vpack.c.bf16 %v2064, %v2064
      %2073 = vst [vmem:[#allocation5 + $0x10] sm:$0xf] %v2065
      %2074 = vst [vmem:[#allocation5 + $0x34] sm:$0xf] %v2066
      %2075 = vst [vmem:[#allocation5 + $0x58] sm:$0xf] %v2067
      %2076 = vst [vmem:[#allocation5 + $0x7c] sm:$0xf] %v2068
      %2077 = vst [vmem:[#allocation5 + $0xa0] sm:$0xf] %v2069
      %2078 = vst [vmem:[#allocation5 + $0xc4] sm:$0xf] %v2070
      %2079 = vst [vmem:[#allocation5 + $0xe8] sm:$0xf] %v2071
      %2080 = vst [vmem:[#allocation5 + $0x10c] sm:$0xf] %v2072
      %v2081 = vld [vmem:[%s1944 + $0x2] sm:$0xff]
      %v2082 = vld [vmem:[%s1944 + $0x12] sm:$0xff]
      %v2083 = vld [vmem:[%s1944 + $0x22] sm:$0xff]
      %v2084 = vld [vmem:[%s1944 + $0x32] sm:$0xff]
      %v2085 = vld [vmem:[%s1944 + $0x42] sm:$0xff]
      %v2086 = vld [vmem:[%s1944 + $0x52] sm:$0xff]
      %v2087 = vld [vmem:[%s1944 + $0x62] sm:$0xff]
      %v2088 = vld [vmem:[%s1944 + $0x72] sm:$0xff]
      %v2089 = vpack.c.bf16 %v2081, %v2081
      %v2090 = vpack.c.bf16 %v2082, %v2082
      %v2091 = vpack.c.bf16 %v2083, %v2083
      %v2092 = vpack.c.bf16 %v2084, %v2084
      %v2093 = vpack.c.bf16 %v2085, %v2085
      %v2094 = vpack.c.bf16 %v2086, %v2086
      %v2095 = vpack.c.bf16 %v2087, %v2087
      %v2096 = vpack.c.bf16 %v2088, %v2088
      %2097 = vst [vmem:[#allocation5 + $0x14] sm:$0xf] %v2089
      %2098 = vst [vmem:[#allocation5 + $0x38] sm:$0xf] %v2090
      %2099 = vst [vmem:[#allocation5 + $0x5c] sm:$0xf] %v2091
      %2100 = vst [vmem:[#allocation5 + $0x80] sm:$0xf] %v2092
      %2101 = vst [vmem:[#allocation5 + $0xa4] sm:$0xf] %v2093
      %2102 = vst [vmem:[#allocation5 + $0xc8] sm:$0xf] %v2094
      %2103 = vst [vmem:[#allocation5 + $0xec] sm:$0xf] %v2095
      %2104 = vst [vmem:[#allocation5 + $0x110] sm:$0xf] %v2096
      %s2105 = scalar_lea.vmem [#allocation3], 32
      %v2106 = vld [vmem:[%s2105] sm:$0xff]
      %v2107 = vld [vmem:[%s2105 + $0x10] sm:$0xff]
      %v2108 = vld [vmem:[%s2105 + $0x20] sm:$0xff]
      %v2109 = vld [vmem:[%s2105 + $0x30] sm:$0xff]
      %v2110 = vld [vmem:[%s2105 + $0x40] sm:$0xff]
      %v2111 = vld [vmem:[%s2105 + $0x50] sm:$0xff]
      %v2112 = vld [vmem:[%s2105 + $0x60] sm:$0xff]
      %v2113 = vld [vmem:[%s2105 + $0x70] sm:$0xff]
      %v2114 = vpack.c.bf16 %v2106, %v2106
      %v2115 = vpack.c.bf16 %v2107, %v2107
      %v2116 = vpack.c.bf16 %v2108, %v2108
      %v2117 = vpack.c.bf16 %v2109, %v2109
      %v2118 = vpack.c.bf16 %v2110, %v2110
      %v2119 = vpack.c.bf16 %v2111, %v2111
      %v2120 = vpack.c.bf16 %v2112, %v2112
      %v2121 = vpack.c.bf16 %v2113, %v2113
      %2122 = vst [vmem:[#allocation5 + $0x18] sm:$0xf] %v2114
      %2123 = vst [vmem:[#allocation5 + $0x3c] sm:$0xf] %v2115
      %2124 = vst [vmem:[#allocation5 + $0x60] sm:$0xf] %v2116
      %2125 = vst [vmem:[#allocation5 + $0x84] sm:$0xf] %v2117
      %2126 = vst [vmem:[#allocation5 + $0xa8] sm:$0xf] %v2118
      %2127 = vst [vmem:[#allocation5 + $0xcc] sm:$0xf] %v2119
      %2128 = vst [vmem:[#allocation5 + $0xf0] sm:$0xf] %v2120
      %2129 = vst [vmem:[#allocation5 + $0x114] sm:$0xf] %v2121
      %v2130 = vld [vmem:[%s2105 + $0x1] sm:$0xff]
      %v2131 = vld [vmem:[%s2105 + $0x11] sm:$0xff]
      %v2132 = vld [vmem:[%s2105 + $0x21] sm:$0xff]
      %v2133 = vld [vmem:[%s2105 + $0x31] sm:$0xff]
      %v2134 = vld [vmem:[%s2105 + $0x41] sm:$0xff]
      %v2135 = vld [vmem:[%s2105 + $0x51] sm:$0xff]
      %v2136 = vld [vmem:[%s2105 + $0x61] sm:$0xff]
      %v2137 = vld [vmem:[%s2105 + $0x71] sm:$0xff]
      %v2138 = vpack.c.bf16 %v2130, %v2130
      %v2139 = vpack.c.bf16 %v2131, %v2131
      %v2140 = vpack.c.bf16 %v2132, %v2132
      %v2141 = vpack.c.bf16 %v2133, %v2133
      %v2142 = vpack.c.bf16 %v2134, %v2134
      %v2143 = vpack.c.bf16 %v2135, %v2135
      %v2144 = vpack.c.bf16 %v2136, %v2136
      %v2145 = vpack.c.bf16 %v2137, %v2137
      %2146 = vst [vmem:[#allocation5 + $0x1c] sm:$0xf] %v2138
      %2147 = vst [vmem:[#allocation5 + $0x40] sm:$0xf] %v2139
      %2148 = vst [vmem:[#allocation5 + $0x64] sm:$0xf] %v2140
      %2149 = vst [vmem:[#allocation5 + $0x88] sm:$0xf] %v2141
      %2150 = vst [vmem:[#allocation5 + $0xac] sm:$0xf] %v2142
      %2151 = vst [vmem:[#allocation5 + $0xd0] sm:$0xf] %v2143
      %2152 = vst [vmem:[#allocation5 + $0xf4] sm:$0xf] %v2144
      %2153 = vst [vmem:[#allocation5 + $0x118] sm:$0xf] %v2145
      %v2154 = vld [vmem:[%s2105 + $0x2] sm:$0xff]
      %v2155 = vld [vmem:[%s2105 + $0x12] sm:$0xff]
      %v2156 = vld [vmem:[%s2105 + $0x22] sm:$0xff]
      %v2157 = vld [vmem:[%s2105 + $0x32] sm:$0xff]
      %v2158 = vld [vmem:[%s2105 + $0x42] sm:$0xff]
      %v2159 = vld [vmem:[%s2105 + $0x52] sm:$0xff]
      %v2160 = vld [vmem:[%s2105 + $0x62] sm:$0xff]
      %v2161 = vld [vmem:[%s2105 + $0x72] sm:$0xff]
      %v2162 = vpack.c.bf16 %v2154, %v2154
      %v2163 = vpack.c.bf16 %v2155, %v2155
      %v2164 = vpack.c.bf16 %v2156, %v2156
      %v2165 = vpack.c.bf16 %v2157, %v2157
      %v2166 = vpack.c.bf16 %v2158, %v2158
      %v2167 = vpack.c.bf16 %v2159, %v2159
      %v2168 = vpack.c.bf16 %v2160, %v2160
      %v2169 = vpack.c.bf16 %v2161, %v2161
      %2170 = vst [vmem:[#allocation5 + $0x20] sm:$0xf] %v2162
      %2171 = vst [vmem:[#allocation5 + $0x44] sm:$0xf] %v2163
      %2172 = vst [vmem:[#allocation5 + $0x68] sm:$0xf] %v2164
      %2173 = vst [vmem:[#allocation5 + $0x8c] sm:$0xf] %v2165
      %2174 = vst [vmem:[#allocation5 + $0xb0] sm:$0xf] %v2166
      %2175 = vst [vmem:[#allocation5 + $0xd4] sm:$0xf] %v2167
      %2176 = vst [vmem:[#allocation5 + $0xf8] sm:$0xf] %v2168
      %2177 = vst [vmem:[#allocation5 + $0x11c] sm:$0xf] %v2169
      %v2178 = vld [vmem:[#allocation5] sm:$0xff]
      %v2179 = vld [vmem:[#allocation5 + $0x8] sm:$0xff]
      %v2180 = vld [vmem:[#allocation5 + $0x10] sm:$0xff]
      %v2181 = vld [vmem:[#allocation5 + $0x18] sm:$0xff]
      %v2182 = vld [vmem:[#allocation5 + $0x20] sm:$0xf]
      %v2183 = vld [vmem:[#allocation5 + $0x24] sm:$0xff]
      %v2184 = vld [vmem:[#allocation5 + $0x2c] sm:$0xff]
      %v2185 = vld [vmem:[#allocation5 + $0x34] sm:$0xff]
      %v2186 = vld [vmem:[#allocation5 + $0x3c] sm:$0xff]
      %v2187 = vld [vmem:[#allocation5 + $0x44] sm:$0xf]
      %v2188 = vld [vmem:[#allocation5 + $0x48] sm:$0xff]
      %v2189 = vld [vmem:[#allocation5 + $0x50] sm:$0xff]
      %v2190 = vld [vmem:[#allocation5 + $0x58] sm:$0xff]
      %v2191 = vld [vmem:[#allocation5 + $0x60] sm:$0xff]
      %v2192 = vld [vmem:[#allocation5 + $0x68] sm:$0xf]
      %v2193 = vld [vmem:[#allocation5 + $0x6c] sm:$0xff]
      %v2194 = vld [vmem:[#allocation5 + $0x74] sm:$0xff]
      %v2195 = vld [vmem:[#allocation5 + $0x7c] sm:$0xff]
      %v2196 = vld [vmem:[#allocation5 + $0x84] sm:$0xff]
      %v2197 = vld [vmem:[#allocation5 + $0x8c] sm:$0xf]
      %v2198 = vld [vmem:[#allocation5 + $0x90] sm:$0xff]
      %v2199 = vld [vmem:[#allocation5 + $0x98] sm:$0xff]
      %v2200 = vld [vmem:[#allocation5 + $0xa0] sm:$0xff]
      %v2201 = vld [vmem:[#allocation5 + $0xa8] sm:$0xff]
      %v2202 = vld [vmem:[#allocation5 + $0xb0] sm:$0xf]
      %v2203 = vld [vmem:[#allocation5 + $0xb4] sm:$0xff]
      %v2204 = vld [vmem:[#allocation5 + $0xbc] sm:$0xff]
      %v2205 = vld [vmem:[#allocation5 + $0xc4] sm:$0xff]
      %v2206 = vld [vmem:[#allocation5 + $0xcc] sm:$0xff]
      %v2207 = vld [vmem:[#allocation5 + $0xd4] sm:$0xf]
      %v2208 = vld [vmem:[#allocation5 + $0xd8] sm:$0xff]
      %v2209 = vld [vmem:[#allocation5 + $0xe0] sm:$0xff]
      %v2210 = vld [vmem:[#allocation5 + $0xe8] sm:$0xff]
      %v2211 = vld [vmem:[#allocation5 + $0xf0] sm:$0xff]
      %v2212 = vld [vmem:[#allocation5 + $0xf8] sm:$0xf]
      %v2213 = vld [vmem:[#allocation5 + $0xfc] sm:$0xff]
      %v2214 = vld [vmem:[#allocation5 + $0x104] sm:$0xff]
      %v2215 = vld [vmem:[#allocation5 + $0x10c] sm:$0xff]
      %v2216 = vld [vmem:[#allocation5 + $0x114] sm:$0xff]
      %v2217 = vld [vmem:[#allocation5 + $0x11c] sm:$0xf]
      %v2218 = vld [vmem:[%s2] sm:$0xf]
      %v2219 = vld [vmem:[%s2 + $0x4] sm:$0xf]
      %v2220 = vld [vmem:[%s2 + $0x8] sm:$0xf]
      %v2221 = vld [vmem:[%s2 + $0xc] sm:$0xf]
      %v2222 = vld [vmem:[%s2 + $0x10] sm:$0xf]
      %v2223 = vld [vmem:[%s2 + $0x14] sm:$0xf]
      %v2224 = vld [vmem:[%s2 + $0x18] sm:$0xf]
      %v2225 = vld [vmem:[%s2 + $0x1c] sm:$0xf]
      %v2226 = vld [vmem:[%s2 + $0x20] sm:$0xf]
      %v2227 = vld [vmem:[%s2 + $0x24] sm:$0xf]
      %v2228 = vld [vmem:[%s2 + $0x28] sm:$0xf]
      %v2229 = vld [vmem:[%s2 + $0x2c] sm:$0xf]
      %v2230 = vld [vmem:[%s2 + $0x30] sm:$0xf]
      %v2231 = vld [vmem:[%s2 + $0x34] sm:$0xf]
      %v2232 = vld [vmem:[%s2 + $0x38] sm:$0xf]
      %v2233 = vld [vmem:[%s2 + $0x3c] sm:$0xf]
      %v2234 = vld [vmem:[%s2 + $0x40] sm:$0xf]
      %v2235 = vld [vmem:[%s2 + $0x44] sm:$0xf]
      %v2236 = vld [vmem:[%s2 + $0x48] sm:$0xf]
      %v2237 = vld [vmem:[%s2 + $0x4c] sm:$0xf]
      %v2238 = vld [vmem:[%s2 + $0x50] sm:$0xf]
      %v2239 = vld [vmem:[%s2 + $0x54] sm:$0xf]
      %v2240 = vld [vmem:[%s2 + $0x58] sm:$0xf]
      %v2241 = vld [vmem:[%s2 + $0x5c] sm:$0xf]
      %v2242 = vld [vmem:[%s2 + $0x60] sm:$0xf]
      %v2243 = vld [vmem:[%s2 + $0x64] sm:$0xf]
      %v2244 = vld [vmem:[%s2 + $0x68] sm:$0xf]
      %v2245 = vld [vmem:[%s2 + $0x6c] sm:$0xf]
      %v2246 = vld [vmem:[%s2 + $0x70] sm:$0xf]
      %v2247 = vld [vmem:[%s2 + $0x74] sm:$0xf]
      %v2248 = vld [vmem:[%s2 + $0x78] sm:$0xf]
      %v2249 = vld [vmem:[%s2 + $0x7c] sm:$0xf]
      %v2250 = vld [vmem:[%s2 + $0x80] sm:$0xf]
      %v2251 = vld [vmem:[%s2 + $0x84] sm:$0xf]
      %v2252 = vld [vmem:[%s2 + $0x88] sm:$0xf]
      %v2253 = vld [vmem:[%s2 + $0x8c] sm:$0xf]
      %v2254 = vld [vmem:[%s2 + $0x90] sm:$0xf]
      %v2255 = vld [vmem:[%s2 + $0x94] sm:$0xf]
      %v2256 = vld [vmem:[%s2 + $0x98] sm:$0xf]
      %v2257 = vld [vmem:[%s2 + $0x9c] sm:$0xf]
      %v2258 = vld [vmem:[%s2 + $0xa0] sm:$0xf]
      %v2259 = vld [vmem:[%s2 + $0xa4] sm:$0xf]
      %v2260 = vld [vmem:[%s2 + $0xa8] sm:$0xf]
      %v2261 = vld [vmem:[%s2 + $0xac] sm:$0xf]
      %v2262 = vld [vmem:[%s2 + $0xb0] sm:$0xf]
      %v2263 = vld [vmem:[%s2 + $0xb4] sm:$0xf]
      %v2264 = vld [vmem:[%s2 + $0xb8] sm:$0xf]
      %v2265 = vld [vmem:[%s2 + $0xbc] sm:$0xf]
      %v2266 = vld [vmem:[%s2 + $0xc0] sm:$0xf]
      %v2267 = vld [vmem:[%s2 + $0xc4] sm:$0xf]
      %v2268 = vld [vmem:[%s2 + $0xc8] sm:$0xf]
      %v2269 = vld [vmem:[%s2 + $0xcc] sm:$0xf]
      %v2270 = vld [vmem:[%s2 + $0xd0] sm:$0xf]
      %v2271 = vld [vmem:[%s2 + $0xd4] sm:$0xf]
      %v2272 = vld [vmem:[%s2 + $0xd8] sm:$0xf]
      %v2273 = vld [vmem:[%s2 + $0xdc] sm:$0xf]
      %v2274 = vld [vmem:[%s2 + $0xe0] sm:$0xf]
      %v2275 = vld [vmem:[%s2 + $0xe4] sm:$0xf]
      %v2276 = vld [vmem:[%s2 + $0xe8] sm:$0xf]
      %v2277 = vld [vmem:[%s2 + $0xec] sm:$0xf]
      %v2278 = vld [vmem:[%s2 + $0xf0] sm:$0xf]
      %v2279 = vld [vmem:[%s2 + $0xf4] sm:$0xf]
      %v2280 = vld [vmem:[%s2 + $0xf8] sm:$0xf]
      %v2281 = vld [vmem:[%s2 + $0xfc] sm:$0xf]
      %v2282 = vld [vmem:[%s2 + $0x100] sm:$0xf]
      %v2283 = vld [vmem:[%s2 + $0x104] sm:$0xf]
      %v2284 = vld [vmem:[%s2 + $0x108] sm:$0xf]
      %v2285 = vld [vmem:[%s2 + $0x10c] sm:$0xf]
      %v2286 = vld [vmem:[%s2 + $0x110] sm:$0xf]
      %v2287 = vld [vmem:[%s2 + $0x114] sm:$0xf]
      %v2288 = vld [vmem:[%s2 + $0x118] sm:$0xf]
      %v2289 = vld [vmem:[%s2 + $0x11c] sm:$0xf]
      %v2290 = vld [vmem:[%s2 + $0x120] sm:$0xf]
      %v2291 = vld [vmem:[%s2 + $0x124] sm:$0xf]
      %v2292 = vld [vmem:[%s2 + $0x128] sm:$0xf]
      %v2293 = vld [vmem:[%s2 + $0x12c] sm:$0xf]
      %v2294 = vld [vmem:[%s2 + $0x130] sm:$0xf]
      %v2295 = vld [vmem:[%s2 + $0x134] sm:$0xf]
      %v2296 = vld [vmem:[%s2 + $0x138] sm:$0xf]
      %v2297 = vld [vmem:[%s2 + $0x13c] sm:$0xf]
      %v2298 = vld [vmem:[%s2 + $0x140] sm:$0xf]
      %v2299 = vld [vmem:[%s2 + $0x144] sm:$0xf]
      %v2300 = vld [vmem:[%s2 + $0x148] sm:$0xf]
      %v2301 = vld [vmem:[%s2 + $0x14c] sm:$0xf]
      %v2302 = vld [vmem:[%s2 + $0x150] sm:$0xf]
      %v2303 = vld [vmem:[%s2 + $0x154] sm:$0xf]
      %v2304 = vld [vmem:[%s2 + $0x158] sm:$0xf]
      %v2305 = vld [vmem:[%s2 + $0x15c] sm:$0xf]
      %v2306 = vld [vmem:[%s2 + $0x160] sm:$0xf]
      %v2307 = vld [vmem:[%s2 + $0x164] sm:$0xf]
      %v2308 = vld [vmem:[%s2 + $0x168] sm:$0xf]
      %v2309 = vld [vmem:[%s2 + $0x16c] sm:$0xf]
      %v2310 = vld [vmem:[%s2 + $0x170] sm:$0xf]
      %v2311 = vld [vmem:[%s2 + $0x174] sm:$0xf]
      %v2312 = vld [vmem:[%s2 + $0x178] sm:$0xf]
      %v2313 = vld [vmem:[%s2 + $0x17c] sm:$0xf]
      %v2314 = vld [vmem:[%s2 + $0x180] sm:$0xf]
      %v2315 = vld [vmem:[%s2 + $0x184] sm:$0xf]
      %v2316 = vld [vmem:[%s2 + $0x188] sm:$0xf]
      %v2317 = vld [vmem:[%s2 + $0x18c] sm:$0xf]
      %v2318 = vld [vmem:[%s2 + $0x190] sm:$0xf]
      %v2319 = vld [vmem:[%s2 + $0x194] sm:$0xf]
      %v2320 = vld [vmem:[%s2 + $0x198] sm:$0xf]
      %v2321 = vld [vmem:[%s2 + $0x19c] sm:$0xf]
      %v2322 = vld [vmem:[%s2 + $0x1a0] sm:$0xf]
      %v2323 = vld [vmem:[%s2 + $0x1a4] sm:$0xf]
      %v2324 = vld [vmem:[%s2 + $0x1a8] sm:$0xf]
      %v2325 = vld [vmem:[%s2 + $0x1ac] sm:$0xf]
      %v2326 = vld [vmem:[%s2 + $0x1b0] sm:$0xf]
      %v2327 = vld [vmem:[%s2 + $0x1b4] sm:$0xf]
      %v2328 = vld [vmem:[%s2 + $0x1b8] sm:$0xf]
      %v2329 = vld [vmem:[%s2 + $0x1bc] sm:$0xf]
      %v2330 = vld [vmem:[%s2 + $0x1c0] sm:$0xf]
      %v2331 = vld [vmem:[%s2 + $0x1c4] sm:$0xf]
      %v2332 = vld [vmem:[%s2 + $0x1c8] sm:$0xf]
      %v2333 = vld [vmem:[%s2 + $0x1cc] sm:$0xf]
      %v2334 = vld [vmem:[%s2 + $0x1d0] sm:$0xf]
      %v2335 = vld [vmem:[%s2 + $0x1d4] sm:$0xf]
      %v2336 = vld [vmem:[%s2 + $0x1d8] sm:$0xf]
      %v2337 = vld [vmem:[%s2 + $0x1dc] sm:$0xf]
      %v2338 = vld [vmem:[%s2 + $0x1e0] sm:$0xf]
      %v2339 = vld [vmem:[%s2 + $0x1e4] sm:$0xf]
      %v2340 = vld [vmem:[%s2 + $0x1e8] sm:$0xf]
      %v2341 = vld [vmem:[%s2 + $0x1ec] sm:$0xf]
      %v2342 = vld [vmem:[%s2 + $0x1f0] sm:$0xf]
      %v2343 = vld [vmem:[%s2 + $0x1f4] sm:$0xf]
      %v2344 = vld [vmem:[%s2 + $0x1f8] sm:$0xf]
      %v2345 = vld [vmem:[%s2 + $0x1fc] sm:$0xf]
      %v2346 = vld [vmem:[%s2 + $0x200] sm:$0xf]
      %v2347 = vld [vmem:[%s2 + $0x204] sm:$0xf]
      %v2348 = vld [vmem:[%s2 + $0x208] sm:$0xf]
      %v2349 = vld [vmem:[%s2 + $0x20c] sm:$0xf]
      %v2350 = vld [vmem:[%s2 + $0x210] sm:$0xf]
      %v2351 = vld [vmem:[%s2 + $0x214] sm:$0xf]
      %v2352 = vld [vmem:[%s2 + $0x218] sm:$0xf]
      %v2353 = vld [vmem:[%s2 + $0x21c] sm:$0xf]
      %v2354 = vld [vmem:[%s2 + $0x220] sm:$0xf]
      %v2355 = vld [vmem:[%s2 + $0x224] sm:$0xf]
      %v2356 = vld [vmem:[%s2 + $0x228] sm:$0xf]
      %v2357 = vld [vmem:[%s2 + $0x22c] sm:$0xf]
      %v2358 = vld [vmem:[%s2 + $0x230] sm:$0xf]
      %v2359 = vld [vmem:[%s2 + $0x234] sm:$0xf]
      %v2360 = vld [vmem:[%s2 + $0x238] sm:$0xf]
      %v2361 = vld [vmem:[%s2 + $0x23c] sm:$0xf]
      %v2362 = vld [vmem:[%s537] sm:$0xff]
      %v2363 = vld [vmem:[%s537 + $0x10] sm:$0xff]
      %v2364 = vld [vmem:[%s537 + $0x20] sm:$0xff]
      %v2365 = vld [vmem:[%s537 + $0x30] sm:$0xff]
      %v2366 = vld [vmem:[%s537 + $0x40] sm:$0xff]
      %v2367 = vld [vmem:[%s537 + $0x50] sm:$0xff]
      %v2368 = vld [vmem:[%s537 + $0x60] sm:$0xff]
      %v2369 = vld [vmem:[%s537 + $0x70] sm:$0xff]
      %v2370 = vpack.c.bf16 %v2362, %v2362
      %v2371 = vpack.c.bf16 %v2363, %v2363
      %v2372 = vpack.c.bf16 %v2364, %v2364
      %v2373 = vpack.c.bf16 %v2365, %v2365
      %v2374 = vpack.c.bf16 %v2366, %v2366
      %v2375 = vpack.c.bf16 %v2367, %v2367
      %v2376 = vpack.c.bf16 %v2368, %v2368
      %v2377 = vpack.c.bf16 %v2369, %v2369
      %2378 = vst [vmem:[#allocation4] sm:$0xf] %v2370
      %2379 = vst [vmem:[#allocation4 + $0x24] sm:$0xf] %v2371
      %2380 = vst [vmem:[#allocation4 + $0x48] sm:$0xf] %v2372
      %2381 = vst [vmem:[#allocation4 + $0x6c] sm:$0xf] %v2373
      %2382 = vst [vmem:[#allocation4 + $0x90] sm:$0xf] %v2374
      %2383 = vst [vmem:[#allocation4 + $0xb4] sm:$0xf] %v2375
      %2384 = vst [vmem:[#allocation4 + $0xd8] sm:$0xf] %v2376
      %2385 = vst [vmem:[#allocation4 + $0xfc] sm:$0xf] %v2377
      %v2386 = vld [vmem:[#allocation4] sm:$0xf]
      %v2387 = vld [vmem:[#allocation4 + $0x24] sm:$0xf]
      %v2388 = vld [vmem:[#allocation4 + $0x48] sm:$0xf]
      %v2389 = vld [vmem:[#allocation4 + $0x6c] sm:$0xf]
      %v2390 = vld [vmem:[#allocation4 + $0x90] sm:$0xf]
      %v2391 = vld [vmem:[#allocation4 + $0xb4] sm:$0xf]
      %v2392 = vld [vmem:[#allocation4 + $0xd8] sm:$0xf]
      %v2393 = vld [vmem:[#allocation4 + $0xfc] sm:$0xf]
      %v2394 = vld [vmem:[%s3] sm:$0xf]
      %v2395 = vld [vmem:[%s3 + $0x4] sm:$0xf]
      %v2396 = vld [vmem:[%s3 + $0x8] sm:$0xf]
      %v2397 = vld [vmem:[%s3 + $0xc] sm:$0xf]
      %v2398 = vld [vmem:[%s3 + $0x10] sm:$0xf]
      %v2399 = vld [vmem:[%s3 + $0x14] sm:$0xf]
      %v2400 = vld [vmem:[%s3 + $0x18] sm:$0xf]
      %v2401 = vld [vmem:[%s3 + $0x1c] sm:$0xf]
      %v2402 = vld [vmem:[%s3 + $0x20] sm:$0xf]
      %v2403 = vld [vmem:[%s3 + $0x24] sm:$0xf]
      %v2404 = vld [vmem:[%s3 + $0x28] sm:$0xf]
      %v2405 = vld [vmem:[%s3 + $0x2c] sm:$0xf]
      %v2406 = vld [vmem:[%s3 + $0x30] sm:$0xf]
      %v2407 = vld [vmem:[%s3 + $0x34] sm:$0xf]
      %v2408 = vld [vmem:[%s3 + $0x38] sm:$0xf]
      %v2409 = vld [vmem:[%s3 + $0x3c] sm:$0xf]
      %v2418 = vunpack.c.l.b16 %v2386
      %v2419 = vunpack.c.l.b16 %v2387
      %v2420 = vunpack.c.l.b16 %v2388
      %v2421 = vunpack.c.l.b16 %v2389
      %v2422 = vunpack.c.l.b16 %v2390
      %v2423 = vunpack.c.l.b16 %v2391
      %v2424 = vunpack.c.l.b16 %v2392
      %v2425 = vunpack.c.l.b16 %v2393
      %v2426 = vpack.c.b16 %v2419, %v2418
      %v2427 = vpack.c.b16 %v2421, %v2420
      %v2428 = vpack.c.b16 %v2423, %v2422
      %v2429 = vpack.c.b16 %v2425, %v2424
      %v2450 = vunpack.c.l.b16 %v2394
      %v2451 = vunpack.c.l.b16 %v2395
      %v2452 = vunpack.c.l.b16 %v2396
      %v2453 = vunpack.c.l.b16 %v2397
      %v2454 = vunpack.c.l.b16 %v2398
      %v2455 = vunpack.c.l.b16 %v2399
      %v2456 = vunpack.c.l.b16 %v2400
      %v2457 = vunpack.c.l.b16 %v2401
      %v2458 = vunpack.c.l.b16 %v2402
      %v2459 = vunpack.c.l.b16 %v2403
      %v2460 = vunpack.c.l.b16 %v2404
      %v2461 = vunpack.c.l.b16 %v2405
      %v2462 = vunpack.c.l.b16 %v2406
      %v2463 = vunpack.c.l.b16 %v2407
      %v2464 = vunpack.c.l.b16 %v2408
      %v2465 = vunpack.c.l.b16 %v2409
      %v2466 = vpack.c.b16 %v2451, %v2450
      %v2467 = vpack.c.b16 %v2453, %v2452
      %v2468 = vpack.c.b16 %v2455, %v2454
      %v2469 = vpack.c.b16 %v2457, %v2456
      %v2470 = vpack.c.b16 %v2459, %v2458
      %v2471 = vpack.c.b16 %v2461, %v2460
      %v2472 = vpack.c.b16 %v2463, %v2462
      %v2473 = vpack.c.b16 %v2465, %v2464
      %2482 = vmatpush.bf16.msra.mxu0 %v2473
      %2483 = vmatpush.bf16.msra.mxu0 %v2472
      %2484 = vmatpush.bf16.msra.mxu0 %v2471
      %2485 = vmatpush.bf16.msra.mxu0 %v2470
      %2486 = vmatpush.bf16.msra.mxu0 %v2469
      %2487 = vmatpush.bf16.msra.mxu0 %v2468
      %2488 = vmatpush.bf16.msra.mxu0 %v2467
      %2489 = vmatpush.bf16.msra.mxu0 %v2466
      %2490 = vmatmul.bf16.gmra.mxu0 %v2426
      %v2491 = vpop.f32.mrf.mxu0
      %v2492 = vadd.f32 0.0, %v2491
      %v2493 = vpop.f32.mrf.mxu0
      %v2494 = vadd.f32 0.0, %v2493
      %2495 = vmatmul.bf16.gmra.mxu0 %v2427
      %v2496 = vpop.f32.mrf.mxu0
      %v2497 = vadd.f32 0.0, %v2496
      %v2498 = vpop.f32.mrf.mxu0
      %v2499 = vadd.f32 0.0, %v2498
      %2500 = vmatmul.bf16.gmra.mxu0 %v2428
      %v2501 = vpop.f32.mrf.mxu0
      %v2502 = vadd.f32 0.0, %v2501
      %v2503 = vpop.f32.mrf.mxu0
      %v2504 = vadd.f32 0.0, %v2503
      %2505 = vmatmul.bf16.gmra.mxu0 %v2429
      %v2506 = vpop.f32.mrf.mxu0
      %v2507 = vadd.f32 0.0, %v2506
      %v2508 = vpop.f32.mrf.mxu0
      %v2509 = vadd.f32 0.0, %v2508
      %2510 = vdwg.mxu0
      %v2551 = vunpack.c.l.b16 %v2178
      %v2552 = vunpack.c.h.b16 %v2178
      %v2553 = vunpack.c.l.b16 %v2179
      %v2554 = vunpack.c.h.b16 %v2179
      %v2555 = vunpack.c.l.b16 %v2180
      %v2556 = vunpack.c.h.b16 %v2180
      %v2557 = vunpack.c.l.b16 %v2181
      %v2558 = vunpack.c.h.b16 %v2181
      %v2559 = vunpack.c.l.b16 %v2182
      %v2560 = vunpack.c.l.b16 %v2183
      %v2561 = vunpack.c.h.b16 %v2183
      %v2562 = vunpack.c.l.b16 %v2184
      %v2563 = vunpack.c.h.b16 %v2184
      %v2564 = vunpack.c.l.b16 %v2185
      %v2565 = vunpack.c.h.b16 %v2185
      %v2566 = vunpack.c.l.b16 %v2186
      %v2567 = vunpack.c.h.b16 %v2186
      %v2568 = vunpack.c.l.b16 %v2187
      %v2569 = vunpack.c.l.b16 %v2188
      %v2570 = vunpack.c.h.b16 %v2188
      %v2571 = vunpack.c.l.b16 %v2189
      %v2572 = vunpack.c.h.b16 %v2189
      %v2573 = vunpack.c.l.b16 %v2190
      %v2574 = vunpack.c.h.b16 %v2190
      %v2575 = vunpack.c.l.b16 %v2191
      %v2576 = vunpack.c.h.b16 %v2191
      %v2577 = vunpack.c.l.b16 %v2192
      %v2578 = vunpack.c.l.b16 %v2193
      %v2579 = vunpack.c.h.b16 %v2193
      %v2580 = vunpack.c.l.b16 %v2194
      %v2581 = vunpack.c.h.b16 %v2194
      %v2582 = vunpack.c.l.b16 %v2195
      %v2583 = vunpack.c.h.b16 %v2195
      %v2584 = vunpack.c.l.b16 %v2196
      %v2585 = vunpack.c.h.b16 %v2196
      %v2586 = vunpack.c.l.b16 %v2197
      %v2587 = vunpack.c.l.b16 %v2198
      %v2588 = vunpack.c.h.b16 %v2198
      %v2589 = vunpack.c.l.b16 %v2199
      %v2590 = vunpack.c.h.b16 %v2199
      %v2591 = vunpack.c.l.b16 %v2200
      %v2592 = vunpack.c.h.b16 %v2200
      %v2593 = vunpack.c.l.b16 %v2201
      %v2594 = vunpack.c.h.b16 %v2201
      %v2595 = vunpack.c.l.b16 %v2202
      %v2596 = vunpack.c.l.b16 %v2203
      %v2597 = vunpack.c.h.b16 %v2203
      %v2598 = vunpack.c.l.b16 %v2204
      %v2599 = vunpack.c.h.b16 %v2204
      %v2600 = vunpack.c.l.b16 %v2205
      %v2601 = vunpack.c.h.b16 %v2205
      %v2602 = vunpack.c.l.b16 %v2206
      %v2603 = vunpack.c.h.b16 %v2206
      %v2604 = vunpack.c.l.b16 %v2207
      %v2605 = vunpack.c.l.b16 %v2208
      %v2606 = vunpack.c.h.b16 %v2208
      %v2607 = vunpack.c.l.b16 %v2209
      %v2608 = vunpack.c.h.b16 %v2209
      %v2609 = vunpack.c.l.b16 %v2210
      %v2610 = vunpack.c.h.b16 %v2210
      %v2611 = vunpack.c.l.b16 %v2211
      %v2612 = vunpack.c.h.b16 %v2211
      %v2613 = vunpack.c.l.b16 %v2212
      %v2614 = vunpack.c.l.b16 %v2213
      %v2615 = vunpack.c.h.b16 %v2213
      %v2616 = vunpack.c.l.b16 %v2214
      %v2617 = vunpack.c.h.b16 %v2214
      %v2618 = vunpack.c.l.b16 %v2215
      %v2619 = vunpack.c.h.b16 %v2215
      %v2620 = vunpack.c.l.b16 %v2216
      %v2621 = vunpack.c.h.b16 %v2216
      %v2622 = vunpack.c.l.b16 %v2217
      %v2623 = vpack.c.b16 %v2560, %v2551
      %v2624 = vpack.c.b16 %v2561, %v2552
      %v2625 = vpack.c.b16 %v2562, %v2553
      %v2626 = vpack.c.b16 %v2563, %v2554
      %v2627 = vpack.c.b16 %v2564, %v2555
      %v2628 = vpack.c.b16 %v2565, %v2556
      %v2629 = vpack.c.b16 %v2566, %v2557
      %v2630 = vpack.c.b16 %v2567, %v2558
      %v2631 = vpack.c.b16 %v2568, %v2559
      %v2632 = vpack.c.b16 %v2578, %v2569
      %v2633 = vpack.c.b16 %v2579, %v2570
      %v2634 = vpack.c.b16 %v2580, %v2571
      %v2635 = vpack.c.b16 %v2581, %v2572
      %v2636 = vpack.c.b16 %v2582, %v2573
      %v2637 = vpack.c.b16 %v2583, %v2574
      %v2638 = vpack.c.b16 %v2584, %v2575
      %v2639 = vpack.c.b16 %v2585, %v2576
      %v2640 = vpack.c.b16 %v2586, %v2577
      %v2641 = vpack.c.b16 %v2596, %v2587
      %v2642 = vpack.c.b16 %v2597, %v2588
      %v2643 = vpack.c.b16 %v2598, %v2589
      %v2644 = vpack.c.b16 %v2599, %v2590
      %v2645 = vpack.c.b16 %v2600, %v2591
      %v2646 = vpack.c.b16 %v2601, %v2592
      %v2647 = vpack.c.b16 %v2602, %v2593
      %v2648 = vpack.c.b16 %v2603, %v2594
      %v2649 = vpack.c.b16 %v2604, %v2595
      %v2650 = vpack.c.b16 %v2614, %v2605
      %v2651 = vpack.c.b16 %v2615, %v2606
      %v2652 = vpack.c.b16 %v2616, %v2607
      %v2653 = vpack.c.b16 %v2617, %v2608
      %v2654 = vpack.c.b16 %v2618, %v2609
      %v2655 = vpack.c.b16 %v2619, %v2610
      %v2656 = vpack.c.b16 %v2620, %v2611
      %v2657 = vpack.c.b16 %v2621, %v2612
      %v2658 = vpack.c.b16 %v2622, %v2613
      %v2839 = vunpack.c.l.b16 %v2218
      %v2840 = vunpack.c.l.b16 %v2219
      %v2841 = vunpack.c.l.b16 %v2220
      %v2842 = vunpack.c.l.b16 %v2221
      %v2843 = vunpack.c.l.b16 %v2222
      %v2844 = vunpack.c.l.b16 %v2223
      %v2845 = vunpack.c.l.b16 %v2224
      %v2846 = vunpack.c.l.b16 %v2225
      %v2847 = vunpack.c.l.b16 %v2226
      %v2848 = vunpack.c.l.b16 %v2227
      %v2849 = vunpack.c.l.b16 %v2228
      %v2850 = vunpack.c.l.b16 %v2229
      %v2851 = vunpack.c.l.b16 %v2230
      %v2852 = vunpack.c.l.b16 %v2231
      %v2853 = vunpack.c.l.b16 %v2232
      %v2854 = vunpack.c.l.b16 %v2233
      %v2855 = vunpack.c.l.b16 %v2234
      %v2856 = vunpack.c.l.b16 %v2235
      %v2857 = vunpack.c.l.b16 %v2236
      %v2858 = vunpack.c.l.b16 %v2237
      %v2859 = vunpack.c.l.b16 %v2238
      %v2860 = vunpack.c.l.b16 %v2239
      %v2861 = vunpack.c.l.b16 %v2240
      %v2862 = vunpack.c.l.b16 %v2241
      %v2863 = vunpack.c.l.b16 %v2242
      %v2864 = vunpack.c.l.b16 %v2243
      %v2865 = vunpack.c.l.b16 %v2244
      %v2866 = vunpack.c.l.b16 %v2245
      %v2867 = vunpack.c.l.b16 %v2246
      %v2868 = vunpack.c.l.b16 %v2247
      %v2869 = vunpack.c.l.b16 %v2248
      %v2870 = vunpack.c.l.b16 %v2249
      %v2871 = vunpack.c.l.b16 %v2250
      %v2872 = vunpack.c.l.b16 %v2251
      %v2873 = vunpack.c.l.b16 %v2252
      %v2874 = vunpack.c.l.b16 %v2253
      %v2875 = vunpack.c.l.b16 %v2254
      %v2876 = vunpack.c.l.b16 %v2255
      %v2877 = vunpack.c.l.b16 %v2256
      %v2878 = vunpack.c.l.b16 %v2257
      %v2879 = vunpack.c.l.b16 %v2258
      %v2880 = vunpack.c.l.b16 %v2259
      %v2881 = vunpack.c.l.b16 %v2260
      %v2882 = vunpack.c.l.b16 %v2261
      %v2883 = vunpack.c.l.b16 %v2262
      %v2884 = vunpack.c.l.b16 %v2263
      %v2885 = vunpack.c.l.b16 %v2264
      %v2886 = vunpack.c.l.b16 %v2265
      %v2887 = vunpack.c.l.b16 %v2266
      %v2888 = vunpack.c.l.b16 %v2267
      %v2889 = vunpack.c.l.b16 %v2268
      %v2890 = vunpack.c.l.b16 %v2269
      %v2891 = vunpack.c.l.b16 %v2270
      %v2892 = vunpack.c.l.b16 %v2271
      %v2893 = vunpack.c.l.b16 %v2272
      %v2894 = vunpack.c.l.b16 %v2273
      %v2895 = vunpack.c.l.b16 %v2274
      %v2896 = vunpack.c.l.b16 %v2275
      %v2897 = vunpack.c.l.b16 %v2276
      %v2898 = vunpack.c.l.b16 %v2277
      %v2899 = vunpack.c.l.b16 %v2278
      %v2900 = vunpack.c.l.b16 %v2279
      %v2901 = vunpack.c.l.b16 %v2280
      %v2902 = vunpack.c.l.b16 %v2281
      %v2903 = vunpack.c.l.b16 %v2282
      %v2904 = vunpack.c.l.b16 %v2283
      %v2905 = vunpack.c.l.b16 %v2284
      %v2906 = vunpack.c.l.b16 %v2285
      %v2907 = vunpack.c.l.b16 %v2286
      %v2908 = vunpack.c.l.b16 %v2287
      %v2909 = vunpack.c.l.b16 %v2288
      %v2910 = vunpack.c.l.b16 %v2289
      %v2911 = vunpack.c.l.b16 %v2290
      %v2912 = vunpack.c.l.b16 %v2291
      %v2913 = vunpack.c.l.b16 %v2292
      %v2914 = vunpack.c.l.b16 %v2293
      %v2915 = vunpack.c.l.b16 %v2294
      %v2916 = vunpack.c.l.b16 %v2295
      %v2917 = vunpack.c.l.b16 %v2296
      %v2918 = vunpack.c.l.b16 %v2297
      %v2919 = vunpack.c.l.b16 %v2298
      %v2920 = vunpack.c.l.b16 %v2299
      %v2921 = vunpack.c.l.b16 %v2300
      %v2922 = vunpack.c.l.b16 %v2301
      %v2923 = vunpack.c.l.b16 %v2302
      %v2924 = vunpack.c.l.b16 %v2303
      %v2925 = vunpack.c.l.b16 %v2304
      %v2926 = vunpack.c.l.b16 %v2305
      %v2927 = vunpack.c.l.b16 %v2306
      %v2928 = vunpack.c.l.b16 %v2307
      %v2929 = vunpack.c.l.b16 %v2308
      %v2930 = vunpack.c.l.b16 %v2309
      %v2931 = vunpack.c.l.b16 %v2310
      %v2932 = vunpack.c.l.b16 %v2311
      %v2933 = vunpack.c.l.b16 %v2312
      %v2934 = vunpack.c.l.b16 %v2313
      %v2935 = vunpack.c.l.b16 %v2314
      %v2936 = vunpack.c.l.b16 %v2315
      %v2937 = vunpack.c.l.b16 %v2316
      %v2938 = vunpack.c.l.b16 %v2317
      %v2939 = vunpack.c.l.b16 %v2318
      %v2940 = vunpack.c.l.b16 %v2319
      %v2941 = vunpack.c.l.b16 %v2320
      %v2942 = vunpack.c.l.b16 %v2321
      %v2943 = vunpack.c.l.b16 %v2322
      %v2944 = vunpack.c.l.b16 %v2323
      %v2945 = vunpack.c.l.b16 %v2324
      %v2946 = vunpack.c.l.b16 %v2325
      %v2947 = vunpack.c.l.b16 %v2326
      %v2948 = vunpack.c.l.b16 %v2327
      %v2949 = vunpack.c.l.b16 %v2328
      %v2950 = vunpack.c.l.b16 %v2329
      %v2951 = vunpack.c.l.b16 %v2330
      %v2952 = vunpack.c.l.b16 %v2331
      %v2953 = vunpack.c.l.b16 %v2332
      %v2954 = vunpack.c.l.b16 %v2333
      %v2955 = vunpack.c.l.b16 %v2334
      %v2956 = vunpack.c.l.b16 %v2335
      %v2957 = vunpack.c.l.b16 %v2336
      %v2958 = vunpack.c.l.b16 %v2337
      %v2959 = vunpack.c.l.b16 %v2338
      %v2960 = vunpack.c.l.b16 %v2339
      %v2961 = vunpack.c.l.b16 %v2340
      %v2962 = vunpack.c.l.b16 %v2341
      %v2963 = vunpack.c.l.b16 %v2342
      %v2964 = vunpack.c.l.b16 %v2343
      %v2965 = vunpack.c.l.b16 %v2344
      %v2966 = vunpack.c.l.b16 %v2345
      %v2967 = vunpack.c.l.b16 %v2346
      %v2968 = vunpack.c.l.b16 %v2347
      %v2969 = vunpack.c.l.b16 %v2348
      %v2970 = vunpack.c.l.b16 %v2349
      %v2971 = vunpack.c.l.b16 %v2350
      %v2972 = vunpack.c.l.b16 %v2351
      %v2973 = vunpack.c.l.b16 %v2352
      %v2974 = vunpack.c.l.b16 %v2353
      %v2975 = vunpack.c.l.b16 %v2354
      %v2976 = vunpack.c.l.b16 %v2355
      %v2977 = vunpack.c.l.b16 %v2356
      %v2978 = vunpack.c.l.b16 %v2357
      %v2979 = vunpack.c.l.b16 %v2358
      %v2980 = vunpack.c.l.b16 %v2359
      %v2981 = vunpack.c.l.b16 %v2360
      %v2982 = vunpack.c.l.b16 %v2361
      %v2983 = vpack.c.b16 %v2840, %v2839
      %v2984 = vpack.c.b16 %v2842, %v2841
      %v2985 = vpack.c.b16 %v2844, %v2843
      %v2986 = vpack.c.b16 %v2846, %v2845
      %v2987 = vpack.c.b16 %v2848, %v2847
      %v2988 = vpack.c.b16 %v2850, %v2849
      %v2989 = vpack.c.b16 %v2852, %v2851
      %v2990 = vpack.c.b16 %v2854, %v2853
      %v2991 = vpack.c.b16 %v2856, %v2855
      %v2992 = vpack.c.b16 %v2858, %v2857
      %v2993 = vpack.c.b16 %v2860, %v2859
      %v2994 = vpack.c.b16 %v2862, %v2861
      %v2995 = vpack.c.b16 %v2864, %v2863
      %v2996 = vpack.c.b16 %v2866, %v2865
      %v2997 = vpack.c.b16 %v2868, %v2867
      %v2998 = vpack.c.b16 %v2870, %v2869
      %v2999 = vpack.c.b16 %v2872, %v2871
      %v3000 = vpack.c.b16 %v2874, %v2873
      %v3001 = vpack.c.b16 %v2876, %v2875
      %v3002 = vpack.c.b16 %v2878, %v2877
      %v3003 = vpack.c.b16 %v2880, %v2879
      %v3004 = vpack.c.b16 %v2882, %v2881
      %v3005 = vpack.c.b16 %v2884, %v2883
      %v3006 = vpack.c.b16 %v2886, %v2885
      %v3007 = vpack.c.b16 %v2888, %v2887
      %v3008 = vpack.c.b16 %v2890, %v2889
      %v3009 = vpack.c.b16 %v2892, %v2891
      %v3010 = vpack.c.b16 %v2894, %v2893
      %v3011 = vpack.c.b16 %v2896, %v2895
      %v3012 = vpack.c.b16 %v2898, %v2897
      %v3013 = vpack.c.b16 %v2900, %v2899
      %v3014 = vpack.c.b16 %v2902, %v2901
      %v3015 = vpack.c.b16 %v2904, %v2903
      %v3016 = vpack.c.b16 %v2906, %v2905
      %v3017 = vpack.c.b16 %v2908, %v2907
      %v3018 = vpack.c.b16 %v2910, %v2909
      %v3019 = vpack.c.b16 %v2912, %v2911
      %v3020 = vpack.c.b16 %v2914, %v2913
      %v3021 = vpack.c.b16 %v2916, %v2915
      %v3022 = vpack.c.b16 %v2918, %v2917
      %v3023 = vpack.c.b16 %v2920, %v2919
      %v3024 = vpack.c.b16 %v2922, %v2921
      %v3025 = vpack.c.b16 %v2924, %v2923
      %v3026 = vpack.c.b16 %v2926, %v2925
      %v3027 = vpack.c.b16 %v2928, %v2927
      %v3028 = vpack.c.b16 %v2930, %v2929
      %v3029 = vpack.c.b16 %v2932, %v2931
      %v3030 = vpack.c.b16 %v2934, %v2933
      %v3031 = vpack.c.b16 %v2936, %v2935
      %v3032 = vpack.c.b16 %v2938, %v2937
      %v3033 = vpack.c.b16 %v2940, %v2939
      %v3034 = vpack.c.b16 %v2942, %v2941
      %v3035 = vpack.c.b16 %v2944, %v2943
      %v3036 = vpack.c.b16 %v2946, %v2945
      %v3037 = vpack.c.b16 %v2948, %v2947
      %v3038 = vpack.c.b16 %v2950, %v2949
      %v3039 = vpack.c.b16 %v2952, %v2951
      %v3040 = vpack.c.b16 %v2954, %v2953
      %v3041 = vpack.c.b16 %v2956, %v2955
      %v3042 = vpack.c.b16 %v2958, %v2957
      %v3043 = vpack.c.b16 %v2960, %v2959
      %v3044 = vpack.c.b16 %v2962, %v2961
      %v3045 = vpack.c.b16 %v2964, %v2963
      %v3046 = vpack.c.b16 %v2966, %v2965
      %v3047 = vpack.c.b16 %v2968, %v2967
      %v3048 = vpack.c.b16 %v2970, %v2969
      %v3049 = vpack.c.b16 %v2972, %v2971
      %v3050 = vpack.c.b16 %v2974, %v2973
      %v3051 = vpack.c.b16 %v2976, %v2975
      %v3052 = vpack.c.b16 %v2978, %v2977
      %v3053 = vpack.c.b16 %v2980, %v2979
      %v3054 = vpack.c.b16 %v2982, %v2981
      %3127 = vmatpush.bf16.msra.mxu0 %v2990
      %3128 = vmatpush.bf16.msra.mxu0 %v2989
      %3129 = vmatpush.bf16.msra.mxu0 %v2988
      %3130 = vmatpush.bf16.msra.mxu0 %v2987
      %3131 = vmatpush.bf16.msra.mxu0 %v2986
      %3132 = vmatpush.bf16.msra.mxu0 %v2985
      %3133 = vmatpush.bf16.msra.mxu0 %v2984
      %3134 = vmatpush.bf16.msra.mxu0 %v2983
      %3135 = vmatmul.bf16.gmra.mxu0 %v2623
      %v3136 = vpop.f32.mrf.mxu0
      %v3137 = vadd.f32 %v2492, %v3136
      %v3138 = vpop.f32.mrf.mxu0
      %v3139 = vadd.f32 %v2494, %v3138
      %3140 = vmatmul.bf16.gmra.mxu0 %v2632
      %v3141 = vpop.f32.mrf.mxu0
      %v3142 = vadd.f32 %v2497, %v3141
      %v3143 = vpop.f32.mrf.mxu0
      %v3144 = vadd.f32 %v2499, %v3143
      %3145 = vmatmul.bf16.gmra.mxu0 %v2641
      %v3146 = vpop.f32.mrf.mxu0
      %v3147 = vadd.f32 %v2502, %v3146
      %v3148 = vpop.f32.mrf.mxu0
      %v3149 = vadd.f32 %v2504, %v3148
      %3150 = vmatmul.bf16.gmra.mxu0 %v2650
      %v3151 = vpop.f32.mrf.mxu0
      %v3152 = vadd.f32 %v2507, %v3151
      %v3153 = vpop.f32.mrf.mxu0
      %v3154 = vadd.f32 %v2509, %v3153
      %3155 = vdwg.mxu0
      %3156 = vmatpush.bf16.msra.mxu0 %v2998
      %3157 = vmatpush.bf16.msra.mxu0 %v2997
      %3158 = vmatpush.bf16.msra.mxu0 %v2996
      %3159 = vmatpush.bf16.msra.mxu0 %v2995
      %3160 = vmatpush.bf16.msra.mxu0 %v2994
      %3161 = vmatpush.bf16.msra.mxu0 %v2993
      %3162 = vmatpush.bf16.msra.mxu0 %v2992
      %3163 = vmatpush.bf16.msra.mxu0 %v2991
      %3164 = vmatmul.bf16.gmra.mxu0 %v2624
      %v3165 = vpop.f32.mrf.mxu0
      %v3166 = vadd.f32 %v3137, %v3165
      %v3167 = vpop.f32.mrf.mxu0
      %v3168 = vadd.f32 %v3139, %v3167
      %3169 = vmatmul.bf16.gmra.mxu0 %v2633
      %v3170 = vpop.f32.mrf.mxu0
      %v3171 = vadd.f32 %v3142, %v3170
      %v3172 = vpop.f32.mrf.mxu0
      %v3173 = vadd.f32 %v3144, %v3172
      %3174 = vmatmul.bf16.gmra.mxu0 %v2642
      %v3175 = vpop.f32.mrf.mxu0
      %v3176 = vadd.f32 %v3147, %v3175
      %v3177 = vpop.f32.mrf.mxu0
      %v3178 = vadd.f32 %v3149, %v3177
      %3179 = vmatmul.bf16.gmra.mxu0 %v2651
      %v3180 = vpop.f32.mrf.mxu0
      %v3181 = vadd.f32 %v3152, %v3180
      %v3182 = vpop.f32.mrf.mxu0
      %v3183 = vadd.f32 %v3154, %v3182
      %3184 = vdwg.mxu0
      %3185 = vmatpush.bf16.msra.mxu0 %v3006
      %3186 = vmatpush.bf16.msra.mxu0 %v3005
      %3187 = vmatpush.bf16.msra.mxu0 %v3004
      %3188 = vmatpush.bf16.msra.mxu0 %v3003
      %3189 = vmatpush.bf16.msra.mxu0 %v3002
      %3190 = vmatpush.bf16.msra.mxu0 %v3001
      %3191 = vmatpush.bf16.msra.mxu0 %v3000
      %3192 = vmatpush.bf16.msra.mxu0 %v2999
      %3193 = vmatmul.bf16.gmra.mxu0 %v2625
      %v3194 = vpop.f32.mrf.mxu0
      %v3195 = vadd.f32 %v3166, %v3194
      %v3196 = vpop.f32.mrf.mxu0
      %v3197 = vadd.f32 %v3168, %v3196
      %3198 = vmatmul.bf16.gmra.mxu0 %v2634
      %v3199 = vpop.f32.mrf.mxu0
      %v3200 = vadd.f32 %v3171, %v3199
      %v3201 = vpop.f32.mrf.mxu0
      %v3202 = vadd.f32 %v3173, %v3201
      %3203 = vmatmul.bf16.gmra.mxu0 %v2643
      %v3204 = vpop.f32.mrf.mxu0
      %v3205 = vadd.f32 %v3176, %v3204
      %v3206 = vpop.f32.mrf.mxu0
      %v3207 = vadd.f32 %v3178, %v3206
      %3208 = vmatmul.bf16.gmra.mxu0 %v2652
      %v3209 = vpop.f32.mrf.mxu0
      %v3210 = vadd.f32 %v3181, %v3209
      %v3211 = vpop.f32.mrf.mxu0
      %v3212 = vadd.f32 %v3183, %v3211
      %3213 = vdwg.mxu0
      %3214 = vmatpush.bf16.msra.mxu0 %v3014
      %3215 = vmatpush.bf16.msra.mxu0 %v3013
      %3216 = vmatpush.bf16.msra.mxu0 %v3012
      %3217 = vmatpush.bf16.msra.mxu0 %v3011
      %3218 = vmatpush.bf16.msra.mxu0 %v3010
      %3219 = vmatpush.bf16.msra.mxu0 %v3009
      %3220 = vmatpush.bf16.msra.mxu0 %v3008
      %3221 = vmatpush.bf16.msra.mxu0 %v3007
      %3222 = vmatmul.bf16.gmra.mxu0 %v2626
      %v3223 = vpop.f32.mrf.mxu0
      %v3224 = vadd.f32 %v3195, %v3223
      %v3225 = vpop.f32.mrf.mxu0
      %v3226 = vadd.f32 %v3197, %v3225
      %3227 = vmatmul.bf16.gmra.mxu0 %v2635
      %v3228 = vpop.f32.mrf.mxu0
      %v3229 = vadd.f32 %v3200, %v3228
      %v3230 = vpop.f32.mrf.mxu0
      %v3231 = vadd.f32 %v3202, %v3230
      %3232 = vmatmul.bf16.gmra.mxu0 %v2644
      %v3233 = vpop.f32.mrf.mxu0
      %v3234 = vadd.f32 %v3205, %v3233
      %v3235 = vpop.f32.mrf.mxu0
      %v3236 = vadd.f32 %v3207, %v3235
      %3237 = vmatmul.bf16.gmra.mxu0 %v2653
      %v3238 = vpop.f32.mrf.mxu0
      %v3239 = vadd.f32 %v3210, %v3238
      %v3240 = vpop.f32.mrf.mxu0
      %v3241 = vadd.f32 %v3212, %v3240
      %3242 = vdwg.mxu0
      %3243 = vmatpush.bf16.msra.mxu0 %v3022
      %3244 = vmatpush.bf16.msra.mxu0 %v3021
      %3245 = vmatpush.bf16.msra.mxu0 %v3020
      %3246 = vmatpush.bf16.msra.mxu0 %v3019
      %3247 = vmatpush.bf16.msra.mxu0 %v3018
      %3248 = vmatpush.bf16.msra.mxu0 %v3017
      %3249 = vmatpush.bf16.msra.mxu0 %v3016
      %3250 = vmatpush.bf16.msra.mxu0 %v3015
      %3251 = vmatmul.bf16.gmra.mxu0 %v2627
      %v3252 = vpop.f32.mrf.mxu0
      %v3253 = vadd.f32 %v3224, %v3252
      %v3254 = vpop.f32.mrf.mxu0
      %v3255 = vadd.f32 %v3226, %v3254
      %3256 = vmatmul.bf16.gmra.mxu0 %v2636
      %v3257 = vpop.f32.mrf.mxu0
      %v3258 = vadd.f32 %v3229, %v3257
      %v3259 = vpop.f32.mrf.mxu0
      %v3260 = vadd.f32 %v3231, %v3259
      %3261 = vmatmul.bf16.gmra.mxu0 %v2645
      %v3262 = vpop.f32.mrf.mxu0
      %v3263 = vadd.f32 %v3234, %v3262
      %v3264 = vpop.f32.mrf.mxu0
      %v3265 = vadd.f32 %v3236, %v3264
      %3266 = vmatmul.bf16.gmra.mxu0 %v2654
      %v3267 = vpop.f32.mrf.mxu0
      %v3268 = vadd.f32 %v3239, %v3267
      %v3269 = vpop.f32.mrf.mxu0
      %v3270 = vadd.f32 %v3241, %v3269
      %3271 = vdwg.mxu0
      %3272 = vmatpush.bf16.msra.mxu0 %v3030
      %3273 = vmatpush.bf16.msra.mxu0 %v3029
      %3274 = vmatpush.bf16.msra.mxu0 %v3028
      %3275 = vmatpush.bf16.msra.mxu0 %v3027
      %3276 = vmatpush.bf16.msra.mxu0 %v3026
      %3277 = vmatpush.bf16.msra.mxu0 %v3025
      %3278 = vmatpush.bf16.msra.mxu0 %v3024
      %3279 = vmatpush.bf16.msra.mxu0 %v3023
      %3280 = vmatmul.bf16.gmra.mxu0 %v2628
      %v3281 = vpop.f32.mrf.mxu0
      %v3282 = vadd.f32 %v3253, %v3281
      %v3283 = vpop.f32.mrf.mxu0
      %v3284 = vadd.f32 %v3255, %v3283
      %3285 = vmatmul.bf16.gmra.mxu0 %v2637
      %v3286 = vpop.f32.mrf.mxu0
      %v3287 = vadd.f32 %v3258, %v3286
      %v3288 = vpop.f32.mrf.mxu0
      %v3289 = vadd.f32 %v3260, %v3288
      %3290 = vmatmul.bf16.gmra.mxu0 %v2646
      %v3291 = vpop.f32.mrf.mxu0
      %v3292 = vadd.f32 %v3263, %v3291
      %v3293 = vpop.f32.mrf.mxu0
      %v3294 = vadd.f32 %v3265, %v3293
      %3295 = vmatmul.bf16.gmra.mxu0 %v2655
      %v3296 = vpop.f32.mrf.mxu0
      %v3297 = vadd.f32 %v3268, %v3296
      %v3298 = vpop.f32.mrf.mxu0
      %v3299 = vadd.f32 %v3270, %v3298
      %3300 = vdwg.mxu0
      %3301 = vmatpush.bf16.msra.mxu0 %v3038
      %3302 = vmatpush.bf16.msra.mxu0 %v3037
      %3303 = vmatpush.bf16.msra.mxu0 %v3036
      %3304 = vmatpush.bf16.msra.mxu0 %v3035
      %3305 = vmatpush.bf16.msra.mxu0 %v3034
      %3306 = vmatpush.bf16.msra.mxu0 %v3033
      %3307 = vmatpush.bf16.msra.mxu0 %v3032
      %3308 = vmatpush.bf16.msra.mxu0 %v3031
      %3309 = vmatmul.bf16.gmra.mxu0 %v2629
      %v3310 = vpop.f32.mrf.mxu0
      %v3311 = vadd.f32 %v3282, %v3310
      %v3312 = vpop.f32.mrf.mxu0
      %v3313 = vadd.f32 %v3284, %v3312
      %3314 = vmatmul.bf16.gmra.mxu0 %v2638
      %v3315 = vpop.f32.mrf.mxu0
      %v3316 = vadd.f32 %v3287, %v3315
      %v3317 = vpop.f32.mrf.mxu0
      %v3318 = vadd.f32 %v3289, %v3317
      %3319 = vmatmul.bf16.gmra.mxu0 %v2647
      %v3320 = vpop.f32.mrf.mxu0
      %v3321 = vadd.f32 %v3292, %v3320
      %v3322 = vpop.f32.mrf.mxu0
      %v3323 = vadd.f32 %v3294, %v3322
      %3324 = vmatmul.bf16.gmra.mxu0 %v2656
      %v3325 = vpop.f32.mrf.mxu0
      %v3326 = vadd.f32 %v3297, %v3325
      %v3327 = vpop.f32.mrf.mxu0
      %v3328 = vadd.f32 %v3299, %v3327
      %3329 = vdwg.mxu0
      %3330 = vmatpush.bf16.msra.mxu0 %v3046
      %3331 = vmatpush.bf16.msra.mxu0 %v3045
      %3332 = vmatpush.bf16.msra.mxu0 %v3044
      %3333 = vmatpush.bf16.msra.mxu0 %v3043
      %3334 = vmatpush.bf16.msra.mxu0 %v3042
      %3335 = vmatpush.bf16.msra.mxu0 %v3041
      %3336 = vmatpush.bf16.msra.mxu0 %v3040
      %3337 = vmatpush.bf16.msra.mxu0 %v3039
      %3338 = vmatmul.bf16.gmra.mxu0 %v2630
      %v3339 = vpop.f32.mrf.mxu0
      %v3340 = vadd.f32 %v3311, %v3339
      %v3341 = vpop.f32.mrf.mxu0
      %v3342 = vadd.f32 %v3313, %v3341
      %3343 = vmatmul.bf16.gmra.mxu0 %v2639
      %v3344 = vpop.f32.mrf.mxu0
      %v3345 = vadd.f32 %v3316, %v3344
      %v3346 = vpop.f32.mrf.mxu0
      %v3347 = vadd.f32 %v3318, %v3346
      %3348 = vmatmul.bf16.gmra.mxu0 %v2648
      %v3349 = vpop.f32.mrf.mxu0
      %v3350 = vadd.f32 %v3321, %v3349
      %v3351 = vpop.f32.mrf.mxu0
      %v3352 = vadd.f32 %v3323, %v3351
      %3353 = vmatmul.bf16.gmra.mxu0 %v2657
      %v3354 = vpop.f32.mrf.mxu0
      %v3355 = vadd.f32 %v3326, %v3354
      %v3356 = vpop.f32.mrf.mxu0
      %v3357 = vadd.f32 %v3328, %v3356
      %3358 = vdwg.mxu0
      %3359 = vmatpush.bf16.msra.mxu0 %v3054
      %3360 = vmatpush.bf16.msra.mxu0 %v3053
      %3361 = vmatpush.bf16.msra.mxu0 %v3052
      %3362 = vmatpush.bf16.msra.mxu0 %v3051
      %3363 = vmatpush.bf16.msra.mxu0 %v3050
      %3364 = vmatpush.bf16.msra.mxu0 %v3049
      %3365 = vmatpush.bf16.msra.mxu0 %v3048
      %3366 = vmatpush.bf16.msra.mxu0 %v3047
      %3367 = vmatmul.bf16.gmra.mxu0 %v2631
      %v3368 = vpop.f32.mrf.mxu0
      %v3369 = vadd.f32 %v3340, %v3368
      %v3370 = vpop.f32.mrf.mxu0
      %v3371 = vadd.f32 %v3342, %v3370
      %3372 = vmatmul.bf16.gmra.mxu0 %v2640
      %v3373 = vpop.f32.mrf.mxu0
      %v3374 = vadd.f32 %v3345, %v3373
      %v3375 = vpop.f32.mrf.mxu0
      %v3376 = vadd.f32 %v3347, %v3375
      %3377 = vmatmul.bf16.gmra.mxu0 %v2649
      %v3378 = vpop.f32.mrf.mxu0
      %v3379 = vadd.f32 %v3350, %v3378
      %v3380 = vpop.f32.mrf.mxu0
      %v3381 = vadd.f32 %v3352, %v3380
      %3382 = vmatmul.bf16.gmra.mxu0 %v2658
      %v3383 = vpop.f32.mrf.mxu0
      %v3384 = vadd.f32 %v3355, %v3383
      %v3385 = vpop.f32.mrf.mxu0
      %v3386 = vadd.f32 %v3357, %v3385
      %3387 = vdwg.mxu0
      %3388 = vst [vmem:[%s305] sm:$0xff] %v3369
      %3389 = vst [vmem:[%s305 + $0x8] sm:$0xff] %v3371
      %3390 = vst [vmem:[%s305 + $0x10] sm:$0xff] %v3374
      %3391 = vst [vmem:[%s305 + $0x18] sm:$0xff] %v3376
      %3392 = vst [vmem:[%s305 + $0x20] sm:$0xff] %v3379
      %3393 = vst [vmem:[%s305 + $0x28] sm:$0xff] %v3381
      %3394 = vst [vmem:[%s305 + $0x30] sm:$0xff] %v3384
      %3395 = vst [vmem:[%s305 + $0x38] sm:$0xff] %v3386
      %p3396 = scmp.lt.s32.totalorder %s19, 1
      %s3397 = scalar_select %p3396, %s19, 1
      %s3398 = smul.addr %s3397, 8
      %s3399 = smul.addr %s3398, 8
      %s3400 = scalar_lea.vmem %s8, %s3399
      // Predicated region
      $region53: #{_lambda_.1} parent=51 // pred_check
        %p3401 = pneg %p210
      $region54: #{_lambda_.1} parent=51 // pred_check_branch
        %3403 = sbr.rel (%p3401) target = $region56
      $region55: #{_lambda_.1} parent=51 // pred_region
        _
      $region56: #{_lambda_.1} parent=51 // pred_fallthru
        _
    $region52: #{_lambda_.1} parent=5 // pred_fallthru
      _
    %p3404 = scmp.le.s32.totalorder 2, %s14
    // Predicated region
    $region57: #{_lambda_.1} parent=5 // pred_check
      %p3405 = pneg %p3404
    $region58: #{_lambda_.1} parent=5 // pred_check_branch
      %3407 = sbr.rel (%p3405) target = $region60
    $region59: #{_lambda_.1} parent=5 // pred_region
      %s3408 = ssub.s32 %s14, 2
      // Predicated region
      $region61: #{_lambda_.1} parent=59 // pred_check
        %p3409 = pneg %p216
      $region62: #{_lambda_.1} parent=59 // pred_check_branch
        %3411 = sbr.rel (%p3409) target = $region64
      $region63: #{_lambda_.1} parent=59 // pred_region
        %p3412 = scmp.lt.s32.totalorder %s20, 1
        %s3413 = scalar_select %p3412, %s20, 1
        %s3414 = smul.addr %s3413, 8
        %s3415 = smul.addr %s3414, 8
        %s3416 = scalar_lea.vmem %s8, %s3415
      $region64: #{_lambda_.1} parent=59 // pred_fallthru
        _
    $region60: #{_lambda_.1} parent=5 // pred_fallthru
      _
  $region6: #{_lambda_.1} parent=0 // loop_footer
    %s18 = sadd.s32 1, %s14
  $region7: #{_lambda_.1} parent=0 // loop_footer_branch
    %13 = sbr.rel target = $region3
  $region8: #{_lambda_.1} parent=0 // loop_exit
    _

</llo_original>
